<compile_context>
chip_gen: v7x
topology: tpu7x:2x2x1
jax: 0.10.0
libtpu: 0.0.40
codegen_flags: <defaults>
</compile_context>

<pallas_src>
import functools

import jax
import jax.numpy as jnp
from jax.experimental import pallas as pl
from jax.experimental.pallas import tpu as pltpu


def _round_up(x, m):
    return (x + m - 1) // m * m


def _conv_taps_kernel(x_ref, w_ref, b_ref, o_ref, *, K, Wp):
    # x_ref: (1, Cin, Lin)    flattened padded image (row stride Wp) + slack
    # w_ref: (K*K, Cout, Cin) per-tap weight matrices (tap index = ky*K + kx)
    # b_ref: (Cout, 1)        conv bias
    # o_ref: (1, Cout, Lout)  stride-1 conv output on the wrapped grid
    _, cout, lout = o_ref.shape
    acc = jnp.zeros((cout, lout), jnp.float32)
    for ky in range(K):
        for kx in range(K):
            off = ky * Wp + kx  # static lane offset for this tap
            slab = x_ref[0, :, pl.ds(off, lout)].astype(jnp.float32)  # (Cin, Lout)
            w_kk = w_ref[ky * K + kx].astype(jnp.float32)             # (Cout, Cin)
            acc = acc + jnp.dot(w_kk, slab, preferred_element_type=jnp.float32)
    acc = acc + b_ref[...].astype(jnp.float32)  # (Cout, 1) broadcast over lanes
    o_ref[0] = acc.astype(o_ref.dtype)


def upsample_conv_layer(x, weight, bias, *, kernel_size, stride, upsample=None):
    """
    x:      (B, Cin, H, W)        float32, NCHW
    weight: (Cout, Cin, K, K)     torch Conv2d weight layout (OIHW)
    bias:   (Cout,)               torch Conv2d bias
    Returns the same result as UpsampleConvLayer.forward.
    """
    B, Cin, H, W = x.shape
    Cout = weight.shape[0]
    K = kernel_size
    p = K // 2

    # --- upsample (nearest) + reflection pad (index remaps, done in XLA) ---
    x_in = x
    if upsample:
        x_in = jnp.repeat(jnp.repeat(x_in, upsample, axis=2), upsample, axis=3)
    if p > 0:
        x_in = jnp.pad(x_in, ((0, 0), (0, 0), (p, p), (p, p)), mode="reflect")

    Hp, Wp = int(x_in.shape[2]), int(x_in.shape[3])
    Hc, Wc = Hp - K + 1, Wp - K + 1  # stride-1 conv output size

    # Lane-dense output slab (multiple of 128) and input slack so every tap's
    # contiguous slab stays in bounds.
    Lout = _round_up(Hc * Wp, 128)
    Lin = _round_up((K - 1) * (Wp + 1) + Lout, 128)

    x_flat = x_in.reshape(B, Cin, Hp * Wp)
    x_flat = jnp.pad(x_flat, ((0, 0), (0, 0), (0, Lin - Hp * Wp)))

    w_taps = jnp.transpose(weight, (2, 3, 0, 1)).reshape(K * K, Cout, Cin)
    b_col = bias.reshape(Cout, 1)

    kernel = functools.partial(_conv_taps_kernel, K=K, Wp=Wp)

    out_flat = pl.pallas_call(
        kernel,
        out_shape=jax.ShapeDtypeStruct((B, Cout, Lout), x.dtype),
        grid_spec=pltpu.PrefetchScalarGridSpec(
            num_scalar_prefetch=0,
            grid=(B,),
            in_specs=[
                pl.BlockSpec((1, Cin, Lin), lambda b: (b, 0, 0)),       # image
                pl.BlockSpec((K * K, Cout, Cin), lambda b: (0, 0, 0)),  # weights
                pl.BlockSpec((Cout, 1), lambda b: (0, 0)),              # bias
            ],
            out_specs=pl.BlockSpec((1, Cout, Lout), lambda b: (b, 0, 0)),
        ),
        compiler_params=pltpu.CompilerParams(
            dimension_semantics=("parallel",),
            vmem_limit_bytes=48 * 1024 * 1024,
        ),
    )(x_flat, w_taps, b_col)

    # Drop the wrap-around columns and the lane padding; apply stride.
    out = out_flat[:, :, : Hc * Wp].reshape(B, Cout, Hc, Wp)[:, :, :, :Wc]
    if stride > 1:
        out = out[:, :, ::stride, ::stride]
    return out


def _reference(x, weight, bias, *, kernel_size, stride, upsample=None):
    p = kernel_size // 2
    x_in = x
    if upsample:
        x_in = jnp.repeat(jnp.repeat(x_in, upsample, axis=2), upsample, axis=3)
    if p > 0:
        x_in = jnp.pad(x_in, ((0, 0), (0, 0), (p, p), (p, p)), mode="reflect")
    out = jax.lax.conv_general_dilated(
        x_in, weight, window_strides=(stride, stride), padding="VALID",
        dimension_numbers=("NCHW", "OIHW", "NCHW"))
    return out + bias[None, :, None, None]


if __name__ == "__main__":
    B, Cin, Cout, H, W = 2, 4, 4, 16, 16
    K, stride, upsample = 3, 1, 2

    key = jax.random.PRNGKey(0)
    k_x, k_w, k_b = jax.random.split(key, 3)
    x = jax.random.normal(k_x, (B, Cin, H, W), dtype=jnp.float32)
    weight = jax.random.normal(k_w, (Cout, Cin, K, K), dtype=jnp.float32) * 0.1
    bias = jax.random.normal(k_b, (Cout,), dtype=jnp.float32) * 0.1

    out = upsample_conv_layer(x, weight, bias,
                              kernel_size=K, stride=stride, upsample=upsample)
    out = jax.block_until_ready(out)

    ref = _reference(x, weight, bias,
                     kernel_size=K, stride=stride, upsample=upsample)
    assert out.shape == ref.shape, (out.shape, ref.shape)
    assert jnp.allclose(out, ref, atol=1e-4, rtol=1e-4), "mismatch vs reference"

    print("KERNEL_OK")
</pallas_src>

<mosaic_0001>
module attributes {stable_mosaic.version = 11 : i64} {
  func.func @_conv_taps_kernel(%arg0: i32, %arg1: memref<1x4x1280xf32, #tpu.memory_space<vmem>>, %arg2: memref<9x4x4xf32, #tpu.memory_space<vmem>>, %arg3: memref<4x1xf32, #tpu.memory_space<vmem>>, %arg4: memref<1x4x1152xf32, #tpu.memory_space<vmem>>) attributes {dimension_semantics = [#tpu.dimension_semantics<parallel>], iteration_bounds = array<i64: 2>, scalar_prefetch = 0 : i64, scratch_operands = 0 : i64, tpu.core_type = #tpu.core_type<tc>, window_params = [{transform_indices = @transform_0, window_bounds = array<i64: 1, 4, 1280>}, {pipeline_mode = #tpu.pipeline_mode<synchronous>, transform_indices = @transform_1, window_bounds = array<i64: 9, 4, 4>}, {pipeline_mode = #tpu.pipeline_mode<synchronous>, transform_indices = @transform_2, window_bounds = array<i64: 4, 1>}, {transform_indices = @transform_3, window_bounds = array<i64: 1, 4, 1152>}]} {
    %cst = arith.constant 0.000000e+00 : f32
    %0 = vector.broadcast %cst : f32 to vector<4x1152xf32>
    %c0 = arith.constant 0 : index
    %c0_0 = arith.constant 0 : index
    %c0_1 = arith.constant 0 : index
    %1 = vector.load %arg1[%c0, %c0_0, %c0_1] : memref<1x4x1280xf32, #tpu.memory_space<vmem>>, vector<1x4x1152xf32>
    %2 = vector.shape_cast %1 : vector<1x4x1152xf32> to vector<4x1152xf32>
    %c0_2 = arith.constant 0 : index
    %c0_3 = arith.constant 0 : index
    %c0_4 = arith.constant 0 : index
    %3 = vector.load %arg2[%c0_2, %c0_3, %c0_4] : memref<9x4x4xf32, #tpu.memory_space<vmem>>, vector<1x4x4xf32>
    %4 = vector.shape_cast %3 : vector<1x4x4xf32> to vector<4x4xf32>
    %cst_5 = arith.constant dense<0.000000e+00> : vector<4x1152xf32>
    %5 = tpu.matmul %4, %2, %cst_5 {dimension_numbers = #tpu.dot_dimension_numbers<[1], [0], [0], [1], [0, 0, 1, 1], [], []>} : vector<4x4xf32>, vector<4x1152xf32>, vector<4x1152xf32> -> vector<4x1152xf32>
    %6 = arith.addf %0, %5 : vector<4x1152xf32>
    %c0_6 = arith.constant 0 : index
    %c0_7 = arith.constant 0 : index
    %c1 = arith.constant 1 : index
    %7 = vector.load %arg1[%c0_6, %c0_7, %c1] : memref<1x4x1280xf32, #tpu.memory_space<vmem>>, vector<1x4x1152xf32>
    %8 = vector.shape_cast %7 : vector<1x4x1152xf32> to vector<4x1152xf32>
    %c1_8 = arith.constant 1 : index
    %c0_9 = arith.constant 0 : index
    %c0_10 = arith.constant 0 : index
    %9 = vector.load %arg2[%c1_8, %c0_9, %c0_10] : memref<9x4x4xf32, #tpu.memory_space<vmem>>, vector<1x4x4xf32>
    %10 = vector.shape_cast %9 : vector<1x4x4xf32> to vector<4x4xf32>
    %cst_11 = arith.constant dense<0.000000e+00> : vector<4x1152xf32>
    %11 = tpu.matmul %10, %8, %cst_11 {dimension_numbers = #tpu.dot_dimension_numbers<[1], [0], [0], [1], [0, 0, 1, 1], [], []>} : vector<4x4xf32>, vector<4x1152xf32>, vector<4x1152xf32> -> vector<4x1152xf32>
    %12 = arith.addf %6, %11 : vector<4x1152xf32>
    %c0_12 = arith.constant 0 : index
    %c0_13 = arith.constant 0 : index
    %c2 = arith.constant 2 : index
    %13 = vector.load %arg1[%c0_12, %c0_13, %c2] : memref<1x4x1280xf32, #tpu.memory_space<vmem>>, vector<1x4x1152xf32>
    %14 = vector.shape_cast %13 : vector<1x4x1152xf32> to vector<4x1152xf32>
    %c2_14 = arith.constant 2 : index
    %c0_15 = arith.constant 0 : index
    %c0_16 = arith.constant 0 : index
    %15 = vector.load %arg2[%c2_14, %c0_15, %c0_16] : memref<9x4x4xf32, #tpu.memory_space<vmem>>, vector<1x4x4xf32>
    %16 = vector.shape_cast %15 : vector<1x4x4xf32> to vector<4x4xf32>
    %cst_17 = arith.constant dense<0.000000e+00> : vector<4x1152xf32>
    %17 = tpu.matmul %16, %14, %cst_17 {dimension_numbers = #tpu.dot_dimension_numbers<[1], [0], [0], [1], [0, 0, 1, 1], [], []>} : vector<4x4xf32>, vector<4x1152xf32>, vector<4x1152xf32> -> vector<4x1152xf32>
    %18 = arith.addf %12, %17 : vector<4x1152xf32>
    %c0_18 = arith.constant 0 : index
    %c0_19 = arith.constant 0 : index
    %c34 = arith.constant 34 : index
    %19 = vector.load %arg1[%c0_18, %c0_19, %c34] : memref<1x4x1280xf32, #tpu.memory_space<vmem>>, vector<1x4x1152xf32>
    %20 = vector.shape_cast %19 : vector<1x4x1152xf32> to vector<4x1152xf32>
    %c3 = arith.constant 3 : index
    %c0_20 = arith.constant 0 : index
    %c0_21 = arith.constant 0 : index
    %21 = vector.load %arg2[%c3, %c0_20, %c0_21] : memref<9x4x4xf32, #tpu.memory_space<vmem>>, vector<1x4x4xf32>
    %22 = vector.shape_cast %21 : vector<1x4x4xf32> to vector<4x4xf32>
    %cst_22 = arith.constant dense<0.000000e+00> : vector<4x1152xf32>
    %23 = tpu.matmul %22, %20, %cst_22 {dimension_numbers = #tpu.dot_dimension_numbers<[1], [0], [0], [1], [0, 0, 1, 1], [], []>} : vector<4x4xf32>, vector<4x1152xf32>, vector<4x1152xf32> -> vector<4x1152xf32>
    %24 = arith.addf %18, %23 : vector<4x1152xf32>
    %c0_23 = arith.constant 0 : index
    %c0_24 = arith.constant 0 : index
    %c35 = arith.constant 35 : index
    %25 = vector.load %arg1[%c0_23, %c0_24, %c35] : memref<1x4x1280xf32, #tpu.memory_space<vmem>>, vector<1x4x1152xf32>
    %26 = vector.shape_cast %25 : vector<1x4x1152xf32> to vector<4x1152xf32>
    %c4 = arith.constant 4 : index
    %c0_25 = arith.constant 0 : index
    %c0_26 = arith.constant 0 : index
    %27 = vector.load %arg2[%c4, %c0_25, %c0_26] : memref<9x4x4xf32, #tpu.memory_space<vmem>>, vector<1x4x4xf32>
    %28 = vector.shape_cast %27 : vector<1x4x4xf32> to vector<4x4xf32>
    %cst_27 = arith.constant dense<0.000000e+00> : vector<4x1152xf32>
    %29 = tpu.matmul %28, %26, %cst_27 {dimension_numbers = #tpu.dot_dimension_numbers<[1], [0], [0], [1], [0, 0, 1, 1], [], []>} : vector<4x4xf32>, vector<4x1152xf32>, vector<4x1152xf32> -> vector<4x1152xf32>
    %30 = arith.addf %24, %29 : vector<4x1152xf32>
    %c0_28 = arith.constant 0 : index
    %c0_29 = arith.constant 0 : index
    %c36 = arith.constant 36 : index
    %31 = vector.load %arg1[%c0_28, %c0_29, %c36] : memref<1x4x1280xf32, #tpu.memory_space<vmem>>, vector<1x4x1152xf32>
    %32 = vector.shape_cast %31 : vector<1x4x1152xf32> to vector<4x1152xf32>
    %c5 = arith.constant 5 : index
    %c0_30 = arith.constant 0 : index
    %c0_31 = arith.constant 0 : index
    %33 = vector.load %arg2[%c5, %c0_30, %c0_31] : memref<9x4x4xf32, #tpu.memory_space<vmem>>, vector<1x4x4xf32>
    %34 = vector.shape_cast %33 : vector<1x4x4xf32> to vector<4x4xf32>
    %cst_32 = arith.constant dense<0.000000e+00> : vector<4x1152xf32>
    %35 = tpu.matmul %34, %32, %cst_32 {dimension_numbers = #tpu.dot_dimension_numbers<[1], [0], [0], [1], [0, 0, 1, 1], [], []>} : vector<4x4xf32>, vector<4x1152xf32>, vector<4x1152xf32> -> vector<4x1152xf32>
    %36 = arith.addf %30, %35 : vector<4x1152xf32>
    %c0_33 = arith.constant 0 : index
    %c0_34 = arith.constant 0 : index
    %c68 = arith.constant 68 : index
    %37 = vector.load %arg1[%c0_33, %c0_34, %c68] : memref<1x4x1280xf32, #tpu.memory_space<vmem>>, vector<1x4x1152xf32>
    %38 = vector.shape_cast %37 : vector<1x4x1152xf32> to vector<4x1152xf32>
    %c6 = arith.constant 6 : index
    %c0_35 = arith.constant 0 : index
    %c0_36 = arith.constant 0 : index
    %39 = vector.load %arg2[%c6, %c0_35, %c0_36] : memref<9x4x4xf32, #tpu.memory_space<vmem>>, vector<1x4x4xf32>
    %40 = vector.shape_cast %39 : vector<1x4x4xf32> to vector<4x4xf32>
    %cst_37 = arith.constant dense<0.000000e+00> : vector<4x1152xf32>
    %41 = tpu.matmul %40, %38, %cst_37 {dimension_numbers = #tpu.dot_dimension_numbers<[1], [0], [0], [1], [0, 0, 1, 1], [], []>} : vector<4x4xf32>, vector<4x1152xf32>, vector<4x1152xf32> -> vector<4x1152xf32>
    %42 = arith.addf %36, %41 : vector<4x1152xf32>
    %c0_38 = arith.constant 0 : index
    %c0_39 = arith.constant 0 : index
    %c69 = arith.constant 69 : index
    %43 = vector.load %arg1[%c0_38, %c0_39, %c69] : memref<1x4x1280xf32, #tpu.memory_space<vmem>>, vector<1x4x1152xf32>
    %44 = vector.shape_cast %43 : vector<1x4x1152xf32> to vector<4x1152xf32>
    %c7 = arith.constant 7 : index
    %c0_40 = arith.constant 0 : index
    %c0_41 = arith.constant 0 : index
    %45 = vector.load %arg2[%c7, %c0_40, %c0_41] : memref<9x4x4xf32, #tpu.memory_space<vmem>>, vector<1x4x4xf32>
    %46 = vector.shape_cast %45 : vector<1x4x4xf32> to vector<4x4xf32>
    %cst_42 = arith.constant dense<0.000000e+00> : vector<4x1152xf32>
    %47 = tpu.matmul %46, %44, %cst_42 {dimension_numbers = #tpu.dot_dimension_numbers<[1], [0], [0], [1], [0, 0, 1, 1], [], []>} : vector<4x4xf32>, vector<4x1152xf32>, vector<4x1152xf32> -> vector<4x1152xf32>
    %48 = arith.addf %42, %47 : vector<4x1152xf32>
    %c0_43 = arith.constant 0 : index
    %c0_44 = arith.constant 0 : index
    %c70 = arith.constant 70 : index
    %49 = vector.load %arg1[%c0_43, %c0_44, %c70] : memref<1x4x1280xf32, #tpu.memory_space<vmem>>, vector<1x4x1152xf32>
    %50 = vector.shape_cast %49 : vector<1x4x1152xf32> to vector<4x1152xf32>
    %c8 = arith.constant 8 : index
    %c0_45 = arith.constant 0 : index
    %c0_46 = arith.constant 0 : index
    %51 = vector.load %arg2[%c8, %c0_45, %c0_46] : memref<9x4x4xf32, #tpu.memory_space<vmem>>, vector<1x4x4xf32>
    %52 = vector.shape_cast %51 : vector<1x4x4xf32> to vector<4x4xf32>
    %cst_47 = arith.constant dense<0.000000e+00> : vector<4x1152xf32>
    %53 = tpu.matmul %52, %50, %cst_47 {dimension_numbers = #tpu.dot_dimension_numbers<[1], [0], [0], [1], [0, 0, 1, 1], [], []>} : vector<4x4xf32>, vector<4x1152xf32>, vector<4x1152xf32> -> vector<4x1152xf32>
    %54 = arith.addf %48, %53 : vector<4x1152xf32>
    %c0_48 = arith.constant 0 : index
    %c0_49 = arith.constant 0 : index
    %55 = vector.load %arg3[%c0_48, %c0_49] : memref<4x1xf32, #tpu.memory_space<vmem>>, vector<4x1xf32>
    %56 = vector.broadcast %55 : vector<4x1xf32> to vector<4x1152xf32>
    %57 = arith.addf %54, %56 : vector<4x1152xf32>
    %c0_50 = arith.constant 0 : index
    %c0_51 = arith.constant 0 : index
    %c0_52 = arith.constant 0 : index
    %58 = vector.load %arg4[%c0_50, %c0_51, %c0_52] : memref<1x4x1152xf32, #tpu.memory_space<vmem>>, vector<1x4x1152xf32>
    %59 = vector.shape_cast %58 : vector<1x4x1152xf32> to vector<4x1152xf32>
    %60 = vector.shape_cast %57 : vector<4x1152xf32> to vector<1x4x1152xf32>
    tpu.vector_store %arg4[%c0_50, %c0_51, %c0_52], %60 {strides = array<i32>} : memref<1x4x1152xf32, #tpu.memory_space<vmem>>, vector<1x4x1152xf32>,
    return
  }
  func.func @transform_0(%arg0: i32) -> (i32, i32, i32) {
    %c0_i32 = arith.constant 0 : i32
    %c0_i32_0 = arith.constant 0 : i32
    %c0_i32_1 = arith.constant 0 : i32
    return %arg0, %c0_i32, %c0_i32_0 : i32, i32, i32
  }
  func.func @transform_1(%arg0: i32) -> (i32, i32, i32) {
    %c0_i32 = arith.constant 0 : i32
    %c0_i32_0 = arith.constant 0 : i32
    %c0_i32_1 = arith.constant 0 : i32
    %c0_i32_2 = arith.constant 0 : i32
    return %c0_i32, %c0_i32_0, %c0_i32_1 : i32, i32, i32
  }
  func.func @transform_2(%arg0: i32) -> (i32, i32) {
    %c0_i32 = arith.constant 0 : i32
    %c0_i32_0 = arith.constant 0 : i32
    %c0_i32_1 = arith.constant 0 : i32
    return %c0_i32, %c0_i32_0 : i32, i32
  }
  func.func @transform_3(%arg0: i32) -> (i32, i32, i32) {
    %c0_i32 = arith.constant 0 : i32
    %c0_i32_0 = arith.constant 0 : i32
    %c0_i32_1 = arith.constant 0 : i32
    return %arg0, %c0_i32, %c0_i32_0 : i32, i32, i32
  }
}

</mosaic_0001>

<llo_original>
// kernel: tpu_custom_call.1
$region0: #{tpu_custom_call.1}
  #allocation0 [shape = 'u32[]', space=smem, size = 0x4, offset = 0x4, fixed_abs, tag = 'smem constant byte address 0x4 - core index']
  #allocation1 [shape = 'u32[144,128]{1,0:T(1,128)}', space=vmem, size = 0x12000, scoped, tag = 'internal scratch']
  %s0 = inlined_call_operand.hbm [shape: f32[2,4,1280], index: 0, kind: input, shape index: {}]
  %s1 = inlined_call_operand.vmem [shape: f32[9,4,4], index: 1, kind: input, shape index: {}]
  %s2 = inlined_call_operand.vmem [shape: f32[4,1], index: 2, kind: input, shape index: {}]
  %s3 = inlined_call_operand.hbm [shape: f32[2,4,1152], index: 3, kind: output, shape index: {}]
  %s4 = sld [smem:[#allocation0]]
  $region49: #{tpu_custom_call.1} parent=0
    _
  %s6 = ssub.s32 1, %s4
  %s7 = scalar_select 0, %s6, %s4
  $region1: #{tpu_custom_call.1} parent=0
    #allocation2 [shape = 'u8[40960]{0}', space=vmem, size = 0xa000, scoped, tag = 'input window, operand 0']
    #allocation3 [shape = 's32[2]{0}', space=sflag, size = 0x8, scoped, tag = 'scoped memory for tpu_custom_call.1']
    #allocation4 [shape = 's32[2]{0}', space=sflag, size = 0x8, scoped, tag = 'scoped memory for tpu_custom_call.1']
    #allocation5 [shape = 'u8[36864]{0}', space=vmem, size = 0x9000, scoped, tag = 'output window, operand 0']
    %8 = vsyncpa [#allocation3], 0
    %s9 = scalar_lea.sflag [#allocation3], 1
    %10 = vsyncpa %s9, 0
    %11 = vsyncpa [#allocation4], 0
    %s12 = scalar_lea.sflag [#allocation4], 1
    %13 = vsyncpa %s12, 0
    loop: start=0, step=1, limit=4
    $region2: #{tpu_custom_call.1} parent=1 // loop_pre_header
      _
    $region3: #{tpu_custom_call.1} parent=1 // loop_header
      %s15 = sphi 0, %s19
      %p16 = scmp.ge.s32.totalorder %s15, 4
      %s25 = sphi 0, %s27
      %s28 = sphi 0, %s25
      %s29 = sphi 0, %s28
      %s45 = sphi 0, %s29
      %s49 = sphi 0, %s49
      %s51 = sphi 0, %s49
      %s52 = sphi 0, %s51
      %s66 = sphi 0, %s52
      %s70 = sphi 0, %s70
      %s72 = sphi 0, %s70
      %s73 = sphi 0, %s72
      %s87 = sphi 0, %s73
      %s93 = sphi 0, %s95
      %s96 = sphi 0, %s93
      %s97 = sphi 0, %s96
      %s113 = sphi 0, %s97
    $region4: #{tpu_custom_call.1} parent=1 // loop_header_branch
      %18 = sbr.rel (%p16) target = $region8
    $region5: #{tpu_custom_call.1} parent=1 // loop_body
      %s20 = ssub.s32 %s15, 1
      %s21 = ssub.s32 %s15, 2
      %s22 = sadd.s32 %s15, 1
      %s23 = ssub.s32 %s15, %s22
      %p24 = scmp.eq.s32.totalorder %s23, 0
      %s26 = sadd.s32 %s25, 1
      %s27 = scalar_select %p24, %s25, %s26
      %p30 = pneg %p24
      %p31 = scmp.eq.s32.totalorder %s15, 1
      %p32 = por %p30, %p31
      %p33 = scmp.ne.s32.totalorder %s25, %s28
      %p34 = scmp.eq.s32.totalorder %s15, 0
      %p35 = por %p33, %p34
      %p36 = scmp.ne.s32.totalorder %s25, %s28
      %p37 = scmp.eq.s32.totalorder %s20, 1
      %p38 = por %p36, %p37
      %p39 = scmp.ne.s32.totalorder %s28, %s29
      %p40 = scmp.eq.s32.totalorder %s20, 0
      %p41 = por %p39, %p40
      %p42 = scmp.ne.s32.totalorder %s28, %s29
      %p43 = scmp.eq.s32.totalorder %s21, 1
      %p44 = por %p42, %p43
      %p46 = scmp.ne.s32.totalorder %s29, %s45
      %p47 = scmp.eq.s32.totalorder %s21, 0
      %p48 = por %p46, %p47
      %s50 = sadd.s32 %s49, 1
      %p53 = scmp.eq.s32.totalorder %s15, 1
      %p54 = scmp.ne.s32.totalorder %s49, %s51
      %p55 = scmp.eq.s32.totalorder %s15, 0
      %p56 = por %p54, %p55
      %p57 = scmp.ne.s32.totalorder %s49, %s51
      %p58 = scmp.eq.s32.totalorder %s20, 1
      %p59 = por %p57, %p58
      %p60 = scmp.ne.s32.totalorder %s51, %s52
      %p61 = scmp.eq.s32.totalorder %s20, 0
      %p62 = por %p60, %p61
      %p63 = scmp.ne.s32.totalorder %s51, %s52
      %p64 = scmp.eq.s32.totalorder %s21, 1
      %p65 = por %p63, %p64
      %p67 = scmp.ne.s32.totalorder %s52, %s66
      %p68 = scmp.eq.s32.totalorder %s21, 0
      %p69 = por %p67, %p68
      %s71 = sadd.s32 %s70, 1
      %p74 = scmp.eq.s32.totalorder %s15, 1
      %p75 = scmp.ne.s32.totalorder %s70, %s72
      %p76 = scmp.eq.s32.totalorder %s15, 0
      %p77 = por %p75, %p76
      %p78 = scmp.ne.s32.totalorder %s70, %s72
      %p79 = scmp.eq.s32.totalorder %s20, 1
      %p80 = por %p78, %p79
      %p81 = scmp.ne.s32.totalorder %s72, %s73
      %p82 = scmp.eq.s32.totalorder %s20, 0
      %p83 = por %p81, %p82
      %p84 = scmp.ne.s32.totalorder %s72, %s73
      %p85 = scmp.eq.s32.totalorder %s21, 1
      %p86 = por %p84, %p85
      %p88 = scmp.ne.s32.totalorder %s73, %s87
      %p89 = scmp.eq.s32.totalorder %s21, 0
      %p90 = por %p88, %p89
      %s91 = ssub.s32 %s15, %s22
      %p92 = scmp.eq.s32.totalorder %s91, 0
      %s94 = sadd.s32 %s93, 1
      %s95 = scalar_select %p92, %s93, %s94
      %p98 = pneg %p92
      %p99 = scmp.eq.s32.totalorder %s15, 1
      %p100 = por %p98, %p99
      %p101 = scmp.ne.s32.totalorder %s93, %s96
      %p102 = scmp.eq.s32.totalorder %s15, 0
      %p103 = por %p101, %p102
      %p104 = scmp.ne.s32.totalorder %s93, %s96
      %p105 = scmp.eq.s32.totalorder %s20, 1
      %p106 = por %p104, %p105
      %p107 = scmp.ne.s32.totalorder %s96, %s97
      %p108 = scmp.eq.s32.totalorder %s20, 0
      %p109 = por %p107, %p108
      %p110 = scmp.ne.s32.totalorder %s96, %s97
      %p111 = scmp.eq.s32.totalorder %s21, 1
      %p112 = por %p110, %p111
      %p114 = scmp.ne.s32.totalorder %s97, %s113
      %p115 = scmp.eq.s32.totalorder %s21, 0
      %p116 = por %p114, %p115
      %p117 = scmp.le.s32.totalorder 1, %s15
      %p118 = scmp.lt.s32.totalorder %s15, 3
      %p119 = pnand %p117, %p118
      %p120 = pneg %p119
      // Predicated region
      $region9: #{tpu_custom_call.1} parent=5 // pred_check
        _
      $region10: #{tpu_custom_call.1} parent=5 // pred_check_branch
        %122 = sbr.rel (%p119) target = $region12
      $region11: #{tpu_custom_call.1} parent=5 // pred_region
        %s123 = ssub.s32 %s15, 1
        // Predicated region
        $region13: #{tpu_custom_call.1} parent=11 // pred_check
          %p124 = pneg %p62
        $region14: #{tpu_custom_call.1} parent=11 // pred_check_branch
          %126 = sbr.rel (%p124) target = $region16
        $region15: #{tpu_custom_call.1} parent=11 // pred_region
          _
        $region16: #{tpu_custom_call.1} parent=11 // pred_fallthru
          _
        // Predicated region
        $region17: #{tpu_custom_call.1} parent=11 // pred_check
          %p127 = pneg %p83
        $region18: #{tpu_custom_call.1} parent=11 // pred_check_branch
          %129 = sbr.rel (%p127) target = $region20
        $region19: #{tpu_custom_call.1} parent=11 // pred_region
          _
        $region20: #{tpu_custom_call.1} parent=11 // pred_fallthru
          _
      $region12: #{tpu_custom_call.1} parent=5 // pred_fallthru
        _
      %p130 = scmp.lt.s32.totalorder %s15, 2
      // Predicated region
      $region21: #{tpu_custom_call.1} parent=5 // pred_check
        %p131 = pneg %p130
      $region22: #{tpu_custom_call.1} parent=5 // pred_check_branch
        %133 = sbr.rel (%p131) target = $region24
      $region23: #{tpu_custom_call.1} parent=5 // pred_region
        // Predicated region
        $region25: #{tpu_custom_call.1} parent=23 // pred_check
          %p134 = pneg %p35
        $region26: #{tpu_custom_call.1} parent=23 // pred_check_branch
          %136 = sbr.rel (%p134) target = $region28
        $region27: #{tpu_custom_call.1} parent=23 // pred_region
          %s137 = sand.u32 %s25, 1
          %s138 = scalar_lea.sflag [#allocation3], %s137
          %s139 = sand.u32 %s25, 1
          %s140 = smul.addr %s139, 40
          %s141 = scalar_lea.vmem [#allocation2], %s140
          %s143 = ssub.s32 640, 640
          %144 = vsyncadd %s138, %s143
          %s145 = smul.addr %s15, 10
          %s146 = smul.addr %s145, 64
          %s147 = scalar_lea.hbm %s0, %s146
          %s149 = sshll.u32 %s141, 4
          %s150 = int_to_ptr.vmem [resolvable:$true] %s149
          %152 = dma.hbm_to_vmem [thread:$0]  %s147, 640, %s150, %s138
        $region28: #{tpu_custom_call.1} parent=23 // pred_fallthru
          _
      $region24: #{tpu_custom_call.1} parent=5 // pred_fallthru
        _
      %p153 = scmp.le.s32.totalorder 1, %s15
      %p154 = scmp.lt.s32.totalorder %s15, 3
      %p155 = pnand %p153, %p154
      %p156 = pneg %p155
      // Predicated region
      $region29: #{tpu_custom_call.1} parent=5 // pred_check
        _
      $region30: #{tpu_custom_call.1} parent=5 // pred_check_branch
        %158 = sbr.rel (%p155) target = $region32
      $region31: #{tpu_custom_call.1} parent=5 // pred_region
        %s159 = ssub.s32 %s15, 1
        %s160 = sand.u32 %s28, 1
        %s161 = scalar_lea.sflag [#allocation3], %s160
        %s162 = sand.u32 %s28, 1
        %s163 = smul.addr %s162, 40
        %s164 = scalar_lea.vmem [#allocation2], %s163
        // Predicated region
        $region33: #{tpu_custom_call.1} parent=31 // pred_check
          %p165 = pneg %p41
        $region34: #{tpu_custom_call.1} parent=31 // pred_check_branch
          %167 = sbr.rel (%p165) target = $region36
        $region35: #{tpu_custom_call.1} parent=31 // pred_region
          %168 = dma.done %s161, 640
        $region36: #{tpu_custom_call.1} parent=31 // pred_fallthru
          _
        %s169 = sand.u32 %s28, 1
        %s170 = scalar_lea.sflag [#allocation3], %s169
        %s171 = sand.u32 %s28, 1
        %s172 = smul.addr %s171, 40
        %s173 = scalar_lea.vmem [#allocation2], %s172
        %p174 = pneg %p41
        %p175 = pneg %p38
        %p176 = pneg %p62
        %p177 = pneg %p59
        %p178 = pneg %p83
        %p179 = pneg %p80
        %p180 = pneg %p109
        %p181 = pneg %p106
        %s182 = sand.u32 %s96, 1
        %s183 = scalar_lea.sflag [#allocation4], %s182
        %s184 = sand.u32 %s96, 1
        %s185 = smul.addr %s184, 36
        %s186 = scalar_lea.vmem [#allocation5], %s185
        %v187 = vld [vmem:[%s164] sm:$0xff]
        %v188 = vld [vmem:[%s164 + $0x8] sm:$0xff]
        %v189 = vld [vmem:[%s164 + $0x10] sm:$0xff]
        %v190 = vld [vmem:[%s164 + $0x18] sm:$0xff]
        %v191 = vld [vmem:[%s164 + $0x20] sm:$0xf]
        %v192 = vld [vmem:[%s1] sm:$0xf]
        %v193 = vld [vmem:[%s164] sm:$0xff]
        %v194 = vld [vmem:[%s164 + $0x8] sm:$0xff]
        %v195 = vld [vmem:[%s164 + $0x10] sm:$0xff]
        %v196 = vld [vmem:[%s164 + $0x18] sm:$0xff]
        %v197 = vld [vmem:[%s164 + $0x20] sm:$0xff]
        %s198 = scalar_lea.vmem %s1, 4
        %v199 = vld [vmem:[%s198] sm:$0xf]
        %v205 = vcombine.high %v193, %v193
        %v206 = vcombine.high %v194, %v194
        %v207 = vcombine.high %v195, %v195
        %v208 = vcombine.high %v196, %v196
        %v209 = vcombine.high %v197, %v197
        %210 = vrot.lane.b32.xlu0 %v193, 127
        %v211 = vpop.permute.xlu0 %210
        %212 = vrot.lane.b32.xlu0 %v205, 127
        %v213 = vpop.permute.xlu0 %212
        %214 = vrot.lane.b32.xlu0 %v194, 127
        %v215 = vpop.permute.xlu0 %214
        %216 = vrot.lane.b32.xlu0 %v206, 127
        %v217 = vpop.permute.xlu0 %216
        %218 = vrot.lane.b32.xlu0 %v195, 127
        %v219 = vpop.permute.xlu0 %218
        %220 = vrot.lane.b32.xlu0 %v207, 127
        %v221 = vpop.permute.xlu0 %220
        %222 = vrot.lane.b32.xlu0 %v196, 127
        %v223 = vpop.permute.xlu0 %222
        %224 = vrot.lane.b32.xlu0 %v208, 127
        %v225 = vpop.permute.xlu0 %224
        %226 = vrot.lane.b32.xlu0 %v197, 127
        %v227 = vpop.permute.xlu0 %226
        %228 = vrot.lane.b32.xlu0 %v209, 127
        %v229 = vpop.permute.xlu0 %228
        %vm230 = vcmask 1039360
        %v231 = vsel %vm230, %v211, %v213
        %v232 = vsel %vm230, %v213, %v215
        %v233 = vsel %vm230, %v215, %v217
        %v234 = vsel %vm230, %v217, %v219
        %v235 = vsel %vm230, %v219, %v221
        %v236 = vsel %vm230, %v221, %v223
        %v237 = vsel %vm230, %v223, %v225
        %v238 = vsel %vm230, %v225, %v227
        %v239 = vsel %vm230, %v227, %v229
        %vm240 = vcmask 31744
        %v242 = vsel %vm240, %v199, 0
        %vm244 = vcmask 1043456
        %v245 = vsel %vm244, %v231, 0
        %v247 = vsel %vm244, %v232, 0
        %v249 = vsel %vm244, %v233, 0
        %v251 = vsel %vm244, %v234, 0
        %v253 = vsel %vm244, %v235, 0
        %v255 = vsel %vm244, %v236, 0
        %v257 = vsel %vm244, %v237, 0
        %v259 = vsel %vm244, %v238, 0
        %v261 = vsel %vm244, %v239, 0
        %263 = vmatprep.subr.mxu0 %v247
        %264 = vmatpush1.msra.mxu0 %v245
        %265 = vmatprep.subr.mxu0 0.0
        %266 = vmatpush1.msra.mxu0 0.0
        %267 = vmatprep.subr.mxu0 0.0
        %268 = vmatpush1.msra.mxu0 0.0
        %269 = vmatprep.subr.mxu0 0.0
        %270 = vmatpush1.msra.mxu0 0.0
        %271 = vmatprep.subr.mxu0 0.0
        %272 = vmatpush1.msra.mxu0 0.0
        %273 = vmatprep.subr.mxu0 0.0
        %274 = vmatpush1.msra.mxu0 0.0
        %275 = vmatprep.subr.mxu0 0.0
        %276 = vmatpush1.msra.mxu0 0.0
        %277 = vmatprep.subr.mxu0 0.0
        %278 = vmatpush1.msra.mxu0 0.0
        %279 = vmatprep.subr.mxu0 0.0
        %280 = vmatpush1.msra.mxu0 0.0
        %281 = vmatprep.subr.mxu0 0.0
        %282 = vmatpush1.msra.mxu0 0.0
        %283 = vmatprep.subr.mxu0 0.0
        %284 = vmatpush1.msra.mxu0 0.0
        %285 = vmatprep.subr.mxu0 0.0
        %286 = vmatpush1.msra.mxu0 0.0
        %287 = vmatprep.subr.mxu0 0.0
        %288 = vmatpush1.msra.mxu0 0.0
        %289 = vmatprep.subr.mxu0 0.0
        %290 = vmatpush1.msra.mxu0 0.0
        %291 = vmatprep.subr.mxu0 0.0
        %292 = vmatpush1.msra.mxu0 0.0
        %293 = vmatprep.subr.mxu0 0.0
        %294 = vmatpush1.msra.mxu0 0.0
        %295 = vmatprep.subr.mxu0 0.0
        %296 = vmatpush1.msra.mxu0 0.0
        %297 = vmatprep.subr.mxu0 0.0
        %298 = vmatpush1.msra.mxu0 0.0
        %299 = vmatprep.subr.mxu0 0.0
        %300 = vmatpush1.msra.mxu0 0.0
        %301 = vmatprep.subr.mxu0 0.0
        %302 = vmatpush1.msra.mxu0 0.0
        %303 = vmatprep.subr.mxu0 0.0
        %304 = vmatpush1.msra.mxu0 0.0
        %305 = vmatprep.subr.mxu0 0.0
        %306 = vmatpush1.msra.mxu0 0.0
        %307 = vmatprep.subr.mxu0 0.0
        %308 = vmatpush1.msra.mxu0 0.0
        %309 = vmatprep.subr.mxu0 0.0
        %310 = vmatpush1.msra.mxu0 0.0
        %311 = vmatprep.subr.mxu0 0.0
        %312 = vmatpush1.msra.mxu0 0.0
        %313 = vmatprep.subr.mxu0 0.0
        %314 = vmatpush1.msra.mxu0 0.0
        %315 = vmatprep.subr.mxu0 0.0
        %316 = vmatpush1.msra.mxu0 0.0
        %317 = vmatprep.subr.mxu0 0.0
        %318 = vmatpush1.msra.mxu0 0.0
        %319 = vmatprep.subr.mxu0 0.0
        %320 = vmatpush1.msra.mxu0 0.0
        %321 = vmatprep.subr.mxu0 0.0
        %322 = vmatpush1.msra.mxu0 0.0
        %323 = vmatprep.subr.mxu0 0.0
        %324 = vmatpush1.msra.mxu0 0.0
        %325 = vmatprep.subr.mxu0 0.0
        %326 = vmatpush1.msra.mxu0 0.0
        %327 = vmatprep.mubr.f32.mxu0 0.0
        %328 = vmatmul.mubr.f32.gmra.mrb[0].mxu0 %v242
        %v329 = vpop.f32.mrb[0].mxu0
        %v330 = vadd.f32 0.0, %v329
        %v331 = vpop.f32.mrb[0].mxu0
        %v332 = vadd.f32 0.0, %v331
        %333 = vdwg.mxu0
        %334 = vmatprep.subr.mxu0 %v251
        %335 = vmatpush1.msra.mxu0 %v249
        %336 = vmatprep.subr.mxu0 0.0
        %337 = vmatpush1.msra.mxu0 0.0
        %338 = vmatprep.subr.mxu0 0.0
        %339 = vmatpush1.msra.mxu0 0.0
        %340 = vmatprep.subr.mxu0 0.0
        %341 = vmatpush1.msra.mxu0 0.0
        %342 = vmatprep.subr.mxu0 0.0
        %343 = vmatpush1.msra.mxu0 0.0
        %344 = vmatprep.subr.mxu0 0.0
        %345 = vmatpush1.msra.mxu0 0.0
        %346 = vmatprep.subr.mxu0 0.0
        %347 = vmatpush1.msra.mxu0 0.0
        %348 = vmatprep.subr.mxu0 0.0
        %349 = vmatpush1.msra.mxu0 0.0
        %350 = vmatprep.subr.mxu0 0.0
        %351 = vmatpush1.msra.mxu0 0.0
        %352 = vmatprep.subr.mxu0 0.0
        %353 = vmatpush1.msra.mxu0 0.0
        %354 = vmatprep.subr.mxu0 0.0
        %355 = vmatpush1.msra.mxu0 0.0
        %356 = vmatprep.subr.mxu0 0.0
        %357 = vmatpush1.msra.mxu0 0.0
        %358 = vmatprep.subr.mxu0 0.0
        %359 = vmatpush1.msra.mxu0 0.0
        %360 = vmatprep.subr.mxu0 0.0
        %361 = vmatpush1.msra.mxu0 0.0
        %362 = vmatprep.subr.mxu0 0.0
        %363 = vmatpush1.msra.mxu0 0.0
        %364 = vmatprep.subr.mxu0 0.0
        %365 = vmatpush1.msra.mxu0 0.0
        %366 = vmatprep.subr.mxu0 0.0
        %367 = vmatpush1.msra.mxu0 0.0
        %368 = vmatprep.subr.mxu0 0.0
        %369 = vmatpush1.msra.mxu0 0.0
        %370 = vmatprep.subr.mxu0 0.0
        %371 = vmatpush1.msra.mxu0 0.0
        %372 = vmatprep.subr.mxu0 0.0
        %373 = vmatpush1.msra.mxu0 0.0
        %374 = vmatprep.subr.mxu0 0.0
        %375 = vmatpush1.msra.mxu0 0.0
        %376 = vmatprep.subr.mxu0 0.0
        %377 = vmatpush1.msra.mxu0 0.0
        %378 = vmatprep.subr.mxu0 0.0
        %379 = vmatpush1.msra.mxu0 0.0
        %380 = vmatprep.subr.mxu0 0.0
        %381 = vmatpush1.msra.mxu0 0.0
        %382 = vmatprep.subr.mxu0 0.0
        %383 = vmatpush1.msra.mxu0 0.0
        %384 = vmatprep.subr.mxu0 0.0
        %385 = vmatpush1.msra.mxu0 0.0
        %386 = vmatprep.subr.mxu0 0.0
        %387 = vmatpush1.msra.mxu0 0.0
        %388 = vmatprep.subr.mxu0 0.0
        %389 = vmatpush1.msra.mxu0 0.0
        %390 = vmatprep.subr.mxu0 0.0
        %391 = vmatpush1.msra.mxu0 0.0
        %392 = vmatprep.subr.mxu0 0.0
        %393 = vmatpush1.msra.mxu0 0.0
        %394 = vmatprep.subr.mxu0 0.0
        %395 = vmatpush1.msra.mxu0 0.0
        %396 = vmatprep.subr.mxu0 0.0
        %397 = vmatpush1.msra.mxu0 0.0
        %398 = vmatprep.mubr.f32.mxu0 0.0
        %399 = vmatmul.mubr.f32.gmra.mrb[0].mxu0 %v242
        %v400 = vpop.f32.mrb[0].mxu0
        %v401 = vadd.f32 0.0, %v400
        %v402 = vpop.f32.mrb[0].mxu0
        %v403 = vadd.f32 0.0, %v402
        %404 = vdwg.mxu0
        %405 = vmatprep.subr.mxu0 %v255
        %406 = vmatpush1.msra.mxu0 %v253
        %407 = vmatprep.subr.mxu0 0.0
        %408 = vmatpush1.msra.mxu0 0.0
        %409 = vmatprep.subr.mxu0 0.0
        %410 = vmatpush1.msra.mxu0 0.0
        %411 = vmatprep.subr.mxu0 0.0
        %412 = vmatpush1.msra.mxu0 0.0
        %413 = vmatprep.subr.mxu0 0.0
        %414 = vmatpush1.msra.mxu0 0.0
        %415 = vmatprep.subr.mxu0 0.0
        %416 = vmatpush1.msra.mxu0 0.0
        %417 = vmatprep.subr.mxu0 0.0
        %418 = vmatpush1.msra.mxu0 0.0
        %419 = vmatprep.subr.mxu0 0.0
        %420 = vmatpush1.msra.mxu0 0.0
        %421 = vmatprep.subr.mxu0 0.0
        %422 = vmatpush1.msra.mxu0 0.0
        %423 = vmatprep.subr.mxu0 0.0
        %424 = vmatpush1.msra.mxu0 0.0
        %425 = vmatprep.subr.mxu0 0.0
        %426 = vmatpush1.msra.mxu0 0.0
        %427 = vmatprep.subr.mxu0 0.0
        %428 = vmatpush1.msra.mxu0 0.0
        %429 = vmatprep.subr.mxu0 0.0
        %430 = vmatpush1.msra.mxu0 0.0
        %431 = vmatprep.subr.mxu0 0.0
        %432 = vmatpush1.msra.mxu0 0.0
        %433 = vmatprep.subr.mxu0 0.0
        %434 = vmatpush1.msra.mxu0 0.0
        %435 = vmatprep.subr.mxu0 0.0
        %436 = vmatpush1.msra.mxu0 0.0
        %437 = vmatprep.subr.mxu0 0.0
        %438 = vmatpush1.msra.mxu0 0.0
        %439 = vmatprep.subr.mxu0 0.0
        %440 = vmatpush1.msra.mxu0 0.0
        %441 = vmatprep.subr.mxu0 0.0
        %442 = vmatpush1.msra.mxu0 0.0
        %443 = vmatprep.subr.mxu0 0.0
        %444 = vmatpush1.msra.mxu0 0.0
        %445 = vmatprep.subr.mxu0 0.0
        %446 = vmatpush1.msra.mxu0 0.0
        %447 = vmatprep.subr.mxu0 0.0
        %448 = vmatpush1.msra.mxu0 0.0
        %449 = vmatprep.subr.mxu0 0.0
        %450 = vmatpush1.msra.mxu0 0.0
        %451 = vmatprep.subr.mxu0 0.0
        %452 = vmatpush1.msra.mxu0 0.0
        %453 = vmatprep.subr.mxu0 0.0
        %454 = vmatpush1.msra.mxu0 0.0
        %455 = vmatprep.subr.mxu0 0.0
        %456 = vmatpush1.msra.mxu0 0.0
        %457 = vmatprep.subr.mxu0 0.0
        %458 = vmatpush1.msra.mxu0 0.0
        %459 = vmatprep.subr.mxu0 0.0
        %460 = vmatpush1.msra.mxu0 0.0
        %461 = vmatprep.subr.mxu0 0.0
        %462 = vmatpush1.msra.mxu0 0.0
        %463 = vmatprep.subr.mxu0 0.0
        %464 = vmatpush1.msra.mxu0 0.0
        %465 = vmatprep.subr.mxu0 0.0
        %466 = vmatpush1.msra.mxu0 0.0
        %467 = vmatprep.subr.mxu0 0.0
        %468 = vmatpush1.msra.mxu0 0.0
        %469 = vmatprep.mubr.f32.mxu0 0.0
        %470 = vmatmul.mubr.f32.gmra.mrb[0].mxu0 %v242
        %v471 = vpop.f32.mrb[0].mxu0
        %v472 = vadd.f32 0.0, %v471
        %v473 = vpop.f32.mrb[0].mxu0
        %v474 = vadd.f32 0.0, %v473
        %475 = vdwg.mxu0
        %476 = vmatprep.subr.mxu0 %v259
        %477 = vmatpush1.msra.mxu0 %v257
        %478 = vmatprep.subr.mxu0 0.0
        %479 = vmatpush1.msra.mxu0 0.0
        %480 = vmatprep.subr.mxu0 0.0
        %481 = vmatpush1.msra.mxu0 0.0
        %482 = vmatprep.subr.mxu0 0.0
        %483 = vmatpush1.msra.mxu0 0.0
        %484 = vmatprep.subr.mxu0 0.0
        %485 = vmatpush1.msra.mxu0 0.0
        %486 = vmatprep.subr.mxu0 0.0
        %487 = vmatpush1.msra.mxu0 0.0
        %488 = vmatprep.subr.mxu0 0.0
        %489 = vmatpush1.msra.mxu0 0.0
        %490 = vmatprep.subr.mxu0 0.0
        %491 = vmatpush1.msra.mxu0 0.0
        %492 = vmatprep.subr.mxu0 0.0
        %493 = vmatpush1.msra.mxu0 0.0
        %494 = vmatprep.subr.mxu0 0.0
        %495 = vmatpush1.msra.mxu0 0.0
        %496 = vmatprep.subr.mxu0 0.0
        %497 = vmatpush1.msra.mxu0 0.0
        %498 = vmatprep.subr.mxu0 0.0
        %499 = vmatpush1.msra.mxu0 0.0
        %500 = vmatprep.subr.mxu0 0.0
        %501 = vmatpush1.msra.mxu0 0.0
        %502 = vmatprep.subr.mxu0 0.0
        %503 = vmatpush1.msra.mxu0 0.0
        %504 = vmatprep.subr.mxu0 0.0
        %505 = vmatpush1.msra.mxu0 0.0
        %506 = vmatprep.subr.mxu0 0.0
        %507 = vmatpush1.msra.mxu0 0.0
        %508 = vmatprep.subr.mxu0 0.0
        %509 = vmatpush1.msra.mxu0 0.0
        %510 = vmatprep.subr.mxu0 0.0
        %511 = vmatpush1.msra.mxu0 0.0
        %512 = vmatprep.subr.mxu0 0.0
        %513 = vmatpush1.msra.mxu0 0.0
        %514 = vmatprep.subr.mxu0 0.0
        %515 = vmatpush1.msra.mxu0 0.0
        %516 = vmatprep.subr.mxu0 0.0
        %517 = vmatpush1.msra.mxu0 0.0
        %518 = vmatprep.subr.mxu0 0.0
        %519 = vmatpush1.msra.mxu0 0.0
        %520 = vmatprep.subr.mxu0 0.0
        %521 = vmatpush1.msra.mxu0 0.0
        %522 = vmatprep.subr.mxu0 0.0
        %523 = vmatpush1.msra.mxu0 0.0
        %524 = vmatprep.subr.mxu0 0.0
        %525 = vmatpush1.msra.mxu0 0.0
        %526 = vmatprep.subr.mxu0 0.0
        %527 = vmatpush1.msra.mxu0 0.0
        %528 = vmatprep.subr.mxu0 0.0
        %529 = vmatpush1.msra.mxu0 0.0
        %530 = vmatprep.subr.mxu0 0.0
        %531 = vmatpush1.msra.mxu0 0.0
        %532 = vmatprep.subr.mxu0 0.0
        %533 = vmatpush1.msra.mxu0 0.0
        %534 = vmatprep.subr.mxu0 0.0
        %535 = vmatpush1.msra.mxu0 0.0
        %536 = vmatprep.subr.mxu0 0.0
        %537 = vmatpush1.msra.mxu0 0.0
        %538 = vmatprep.subr.mxu0 0.0
        %539 = vmatpush1.msra.mxu0 0.0
        %540 = vmatprep.mubr.f32.mxu0 0.0
        %541 = vmatmul.mubr.f32.gmra.mrb[0].mxu0 %v242
        %v542 = vpop.f32.mrb[0].mxu0
        %v543 = vadd.f32 0.0, %v542
        %v544 = vpop.f32.mrb[0].mxu0
        %v545 = vadd.f32 0.0, %v544
        %546 = vdwg.mxu0
        %547 = vmatprep.subr.mxu0 0.0
        %548 = vmatpush1.msra.mxu0 %v261
        %549 = vmatprep.subr.mxu0 0.0
        %550 = vmatpush1.msra.mxu0 0.0
        %551 = vmatprep.subr.mxu0 0.0
        %552 = vmatpush1.msra.mxu0 0.0
        %553 = vmatprep.subr.mxu0 0.0
        %554 = vmatpush1.msra.mxu0 0.0
        %555 = vmatprep.subr.mxu0 0.0
        %556 = vmatpush1.msra.mxu0 0.0
        %557 = vmatprep.subr.mxu0 0.0
        %558 = vmatpush1.msra.mxu0 0.0
        %559 = vmatprep.subr.mxu0 0.0
        %560 = vmatpush1.msra.mxu0 0.0
        %561 = vmatprep.subr.mxu0 0.0
        %562 = vmatpush1.msra.mxu0 0.0
        %563 = vmatprep.subr.mxu0 0.0
        %564 = vmatpush1.msra.mxu0 0.0
        %565 = vmatprep.subr.mxu0 0.0
        %566 = vmatpush1.msra.mxu0 0.0
        %567 = vmatprep.subr.mxu0 0.0
        %568 = vmatpush1.msra.mxu0 0.0
        %569 = vmatprep.subr.mxu0 0.0
        %570 = vmatpush1.msra.mxu0 0.0
        %571 = vmatprep.subr.mxu0 0.0
        %572 = vmatpush1.msra.mxu0 0.0
        %573 = vmatprep.subr.mxu0 0.0
        %574 = vmatpush1.msra.mxu0 0.0
        %575 = vmatprep.subr.mxu0 0.0
        %576 = vmatpush1.msra.mxu0 0.0
        %577 = vmatprep.subr.mxu0 0.0
        %578 = vmatpush1.msra.mxu0 0.0
        %579 = vmatprep.subr.mxu0 0.0
        %580 = vmatpush1.msra.mxu0 0.0
        %581 = vmatprep.subr.mxu0 0.0
        %582 = vmatpush1.msra.mxu0 0.0
        %583 = vmatprep.subr.mxu0 0.0
        %584 = vmatpush1.msra.mxu0 0.0
        %585 = vmatprep.subr.mxu0 0.0
        %586 = vmatpush1.msra.mxu0 0.0
        %587 = vmatprep.subr.mxu0 0.0
        %588 = vmatpush1.msra.mxu0 0.0
        %589 = vmatprep.subr.mxu0 0.0
        %590 = vmatpush1.msra.mxu0 0.0
        %591 = vmatprep.subr.mxu0 0.0
        %592 = vmatpush1.msra.mxu0 0.0
        %593 = vmatprep.subr.mxu0 0.0
        %594 = vmatpush1.msra.mxu0 0.0
        %595 = vmatprep.subr.mxu0 0.0
        %596 = vmatpush1.msra.mxu0 0.0
        %597 = vmatprep.subr.mxu0 0.0
        %598 = vmatpush1.msra.mxu0 0.0
        %599 = vmatprep.subr.mxu0 0.0
        %600 = vmatpush1.msra.mxu0 0.0
        %601 = vmatprep.subr.mxu0 0.0
        %602 = vmatpush1.msra.mxu0 0.0
        %603 = vmatprep.subr.mxu0 0.0
        %604 = vmatpush1.msra.mxu0 0.0
        %605 = vmatprep.subr.mxu0 0.0
        %606 = vmatpush1.msra.mxu0 0.0
        %607 = vmatprep.subr.mxu0 0.0
        %608 = vmatpush1.msra.mxu0 0.0
        %609 = vmatprep.subr.mxu0 0.0
        %610 = vmatpush1.msra.mxu0 0.0
        %611 = vmatprep.mubr.f32.mxu0 0.0
        %612 = vmatmul.mubr.f32.gmra.mrb[0].mxu0 %v242
        %v613 = vpop.f32.mrb[0].mxu0
        %v614 = vadd.f32 0.0, %v613
        %v615 = vpop.f32.mrb[0].mxu0
        %616 = vdwg.mxu0
        %v622 = vcombine.high %v187, %v187
        %v623 = vcombine.high %v188, %v188
        %v624 = vcombine.high %v189, %v189
        %v625 = vcombine.high %v190, %v190
        %v627 = vsel %vm240, %v192, 0
        %v629 = vsel %vm244, %v187, 0
        %v631 = vsel %vm244, %v622, 0
        %v633 = vsel %vm244, %v188, 0
        %v635 = vsel %vm244, %v623, 0
        %v637 = vsel %vm244, %v189, 0
        %v639 = vsel %vm244, %v624, 0
        %v641 = vsel %vm244, %v190, 0
        %v643 = vsel %vm244, %v625, 0
        %v645 = vsel %vm244, %v191, 0
        %647 = vmatprep.subr.mxu0 %v631
        %648 = vmatpush1.msra.mxu0 %v629
        %649 = vmatprep.subr.mxu0 0.0
        %650 = vmatpush1.msra.mxu0 0.0
        %651 = vmatprep.subr.mxu0 0.0
        %652 = vmatpush1.msra.mxu0 0.0
        %653 = vmatprep.subr.mxu0 0.0
        %654 = vmatpush1.msra.mxu0 0.0
        %655 = vmatprep.subr.mxu0 0.0
        %656 = vmatpush1.msra.mxu0 0.0
        %657 = vmatprep.subr.mxu0 0.0
        %658 = vmatpush1.msra.mxu0 0.0
        %659 = vmatprep.subr.mxu0 0.0
        %660 = vmatpush1.msra.mxu0 0.0
        %661 = vmatprep.subr.mxu0 0.0
        %662 = vmatpush1.msra.mxu0 0.0
        %663 = vmatprep.subr.mxu0 0.0
        %664 = vmatpush1.msra.mxu0 0.0
        %665 = vmatprep.subr.mxu0 0.0
        %666 = vmatpush1.msra.mxu0 0.0
        %667 = vmatprep.subr.mxu0 0.0
        %668 = vmatpush1.msra.mxu0 0.0
        %669 = vmatprep.subr.mxu0 0.0
        %670 = vmatpush1.msra.mxu0 0.0
        %671 = vmatprep.subr.mxu0 0.0
        %672 = vmatpush1.msra.mxu0 0.0
        %673 = vmatprep.subr.mxu0 0.0
        %674 = vmatpush1.msra.mxu0 0.0
        %675 = vmatprep.subr.mxu0 0.0
        %676 = vmatpush1.msra.mxu0 0.0
        %677 = vmatprep.subr.mxu0 0.0
        %678 = vmatpush1.msra.mxu0 0.0
        %679 = vmatprep.subr.mxu0 0.0
        %680 = vmatpush1.msra.mxu0 0.0
        %681 = vmatprep.subr.mxu0 0.0
        %682 = vmatpush1.msra.mxu0 0.0
        %683 = vmatprep.subr.mxu0 0.0
        %684 = vmatpush1.msra.mxu0 0.0
        %685 = vmatprep.subr.mxu0 0.0
        %686 = vmatpush1.msra.mxu0 0.0
        %687 = vmatprep.subr.mxu0 0.0
        %688 = vmatpush1.msra.mxu0 0.0
        %689 = vmatprep.subr.mxu0 0.0
        %690 = vmatpush1.msra.mxu0 0.0
        %691 = vmatprep.subr.mxu0 0.0
        %692 = vmatpush1.msra.mxu0 0.0
        %693 = vmatprep.subr.mxu0 0.0
        %694 = vmatpush1.msra.mxu0 0.0
        %695 = vmatprep.subr.mxu0 0.0
        %696 = vmatpush1.msra.mxu0 0.0
        %697 = vmatprep.subr.mxu0 0.0
        %698 = vmatpush1.msra.mxu0 0.0
        %699 = vmatprep.subr.mxu0 0.0
        %700 = vmatpush1.msra.mxu0 0.0
        %701 = vmatprep.subr.mxu0 0.0
        %702 = vmatpush1.msra.mxu0 0.0
        %703 = vmatprep.subr.mxu0 0.0
        %704 = vmatpush1.msra.mxu0 0.0
        %705 = vmatprep.subr.mxu0 0.0
        %706 = vmatpush1.msra.mxu0 0.0
        %707 = vmatprep.subr.mxu0 0.0
        %708 = vmatpush1.msra.mxu0 0.0
        %709 = vmatprep.subr.mxu0 0.0
        %710 = vmatpush1.msra.mxu0 0.0
        %711 = vmatprep.mubr.f32.mxu0 0.0
        %712 = vmatmul.mubr.f32.gmra.mrb[0].mxu0 %v627
        %v713 = vpop.f32.mrb[0].mxu0
        %v714 = vadd.f32 %v330, %v713
        %v715 = vpop.f32.mrb[0].mxu0
        %v716 = vadd.f32 %v332, %v715
        %717 = vdwg.mxu0
        %718 = vmatprep.subr.mxu0 %v635
        %719 = vmatpush1.msra.mxu0 %v633
        %720 = vmatprep.subr.mxu0 0.0
        %721 = vmatpush1.msra.mxu0 0.0
        %722 = vmatprep.subr.mxu0 0.0
        %723 = vmatpush1.msra.mxu0 0.0
        %724 = vmatprep.subr.mxu0 0.0
        %725 = vmatpush1.msra.mxu0 0.0
        %726 = vmatprep.subr.mxu0 0.0
        %727 = vmatpush1.msra.mxu0 0.0
        %728 = vmatprep.subr.mxu0 0.0
        %729 = vmatpush1.msra.mxu0 0.0
        %730 = vmatprep.subr.mxu0 0.0
        %731 = vmatpush1.msra.mxu0 0.0
        %732 = vmatprep.subr.mxu0 0.0
        %733 = vmatpush1.msra.mxu0 0.0
        %734 = vmatprep.subr.mxu0 0.0
        %735 = vmatpush1.msra.mxu0 0.0
        %736 = vmatprep.subr.mxu0 0.0
        %737 = vmatpush1.msra.mxu0 0.0
        %738 = vmatprep.subr.mxu0 0.0
        %739 = vmatpush1.msra.mxu0 0.0
        %740 = vmatprep.subr.mxu0 0.0
        %741 = vmatpush1.msra.mxu0 0.0
        %742 = vmatprep.subr.mxu0 0.0
        %743 = vmatpush1.msra.mxu0 0.0
        %744 = vmatprep.subr.mxu0 0.0
        %745 = vmatpush1.msra.mxu0 0.0
        %746 = vmatprep.subr.mxu0 0.0
        %747 = vmatpush1.msra.mxu0 0.0
        %748 = vmatprep.subr.mxu0 0.0
        %749 = vmatpush1.msra.mxu0 0.0
        %750 = vmatprep.subr.mxu0 0.0
        %751 = vmatpush1.msra.mxu0 0.0
        %752 = vmatprep.subr.mxu0 0.0
        %753 = vmatpush1.msra.mxu0 0.0
        %754 = vmatprep.subr.mxu0 0.0
        %755 = vmatpush1.msra.mxu0 0.0
        %756 = vmatprep.subr.mxu0 0.0
        %757 = vmatpush1.msra.mxu0 0.0
        %758 = vmatprep.subr.mxu0 0.0
        %759 = vmatpush1.msra.mxu0 0.0
        %760 = vmatprep.subr.mxu0 0.0
        %761 = vmatpush1.msra.mxu0 0.0
        %762 = vmatprep.subr.mxu0 0.0
        %763 = vmatpush1.msra.mxu0 0.0
        %764 = vmatprep.subr.mxu0 0.0
        %765 = vmatpush1.msra.mxu0 0.0
        %766 = vmatprep.subr.mxu0 0.0
        %767 = vmatpush1.msra.mxu0 0.0
        %768 = vmatprep.subr.mxu0 0.0
        %769 = vmatpush1.msra.mxu0 0.0
        %770 = vmatprep.subr.mxu0 0.0
        %771 = vmatpush1.msra.mxu0 0.0
        %772 = vmatprep.subr.mxu0 0.0
        %773 = vmatpush1.msra.mxu0 0.0
        %774 = vmatprep.subr.mxu0 0.0
        %775 = vmatpush1.msra.mxu0 0.0
        %776 = vmatprep.subr.mxu0 0.0
        %777 = vmatpush1.msra.mxu0 0.0
        %778 = vmatprep.subr.mxu0 0.0
        %779 = vmatpush1.msra.mxu0 0.0
        %780 = vmatprep.subr.mxu0 0.0
        %781 = vmatpush1.msra.mxu0 0.0
        %782 = vmatprep.mubr.f32.mxu0 0.0
        %783 = vmatmul.mubr.f32.gmra.mrb[0].mxu0 %v627
        %v784 = vpop.f32.mrb[0].mxu0
        %v785 = vadd.f32 %v401, %v784
        %v786 = vpop.f32.mrb[0].mxu0
        %v787 = vadd.f32 %v403, %v786
        %788 = vdwg.mxu0
        %789 = vmatprep.subr.mxu0 %v639
        %790 = vmatpush1.msra.mxu0 %v637
        %791 = vmatprep.subr.mxu0 0.0
        %792 = vmatpush1.msra.mxu0 0.0
        %793 = vmatprep.subr.mxu0 0.0
        %794 = vmatpush1.msra.mxu0 0.0
        %795 = vmatprep.subr.mxu0 0.0
        %796 = vmatpush1.msra.mxu0 0.0
        %797 = vmatprep.subr.mxu0 0.0
        %798 = vmatpush1.msra.mxu0 0.0
        %799 = vmatprep.subr.mxu0 0.0
        %800 = vmatpush1.msra.mxu0 0.0
        %801 = vmatprep.subr.mxu0 0.0
        %802 = vmatpush1.msra.mxu0 0.0
        %803 = vmatprep.subr.mxu0 0.0
        %804 = vmatpush1.msra.mxu0 0.0
        %805 = vmatprep.subr.mxu0 0.0
        %806 = vmatpush1.msra.mxu0 0.0
        %807 = vmatprep.subr.mxu0 0.0
        %808 = vmatpush1.msra.mxu0 0.0
        %809 = vmatprep.subr.mxu0 0.0
        %810 = vmatpush1.msra.mxu0 0.0
        %811 = vmatprep.subr.mxu0 0.0
        %812 = vmatpush1.msra.mxu0 0.0
        %813 = vmatprep.subr.mxu0 0.0
        %814 = vmatpush1.msra.mxu0 0.0
        %815 = vmatprep.subr.mxu0 0.0
        %816 = vmatpush1.msra.mxu0 0.0
        %817 = vmatprep.subr.mxu0 0.0
        %818 = vmatpush1.msra.mxu0 0.0
        %819 = vmatprep.subr.mxu0 0.0
        %820 = vmatpush1.msra.mxu0 0.0
        %821 = vmatprep.subr.mxu0 0.0
        %822 = vmatpush1.msra.mxu0 0.0
        %823 = vmatprep.subr.mxu0 0.0
        %824 = vmatpush1.msra.mxu0 0.0
        %825 = vmatprep.subr.mxu0 0.0
        %826 = vmatpush1.msra.mxu0 0.0
        %827 = vmatprep.subr.mxu0 0.0
        %828 = vmatpush1.msra.mxu0 0.0
        %829 = vmatprep.subr.mxu0 0.0
        %830 = vmatpush1.msra.mxu0 0.0
        %831 = vmatprep.subr.mxu0 0.0
        %832 = vmatpush1.msra.mxu0 0.0
        %833 = vmatprep.subr.mxu0 0.0
        %834 = vmatpush1.msra.mxu0 0.0
        %835 = vmatprep.subr.mxu0 0.0
        %836 = vmatpush1.msra.mxu0 0.0
        %837 = vmatprep.subr.mxu0 0.0
        %838 = vmatpush1.msra.mxu0 0.0
        %839 = vmatprep.subr.mxu0 0.0
        %840 = vmatpush1.msra.mxu0 0.0
        %841 = vmatprep.subr.mxu0 0.0
        %842 = vmatpush1.msra.mxu0 0.0
        %843 = vmatprep.subr.mxu0 0.0
        %844 = vmatpush1.msra.mxu0 0.0
        %845 = vmatprep.subr.mxu0 0.0
        %846 = vmatpush1.msra.mxu0 0.0
        %847 = vmatprep.subr.mxu0 0.0
        %848 = vmatpush1.msra.mxu0 0.0
        %849 = vmatprep.subr.mxu0 0.0
        %850 = vmatpush1.msra.mxu0 0.0
        %851 = vmatprep.subr.mxu0 0.0
        %852 = vmatpush1.msra.mxu0 0.0
        %853 = vmatprep.mubr.f32.mxu0 0.0
        %854 = vmatmul.mubr.f32.gmra.mrb[0].mxu0 %v627
        %v855 = vpop.f32.mrb[0].mxu0
        %v856 = vadd.f32 %v472, %v855
        %v857 = vpop.f32.mrb[0].mxu0
        %v858 = vadd.f32 %v474, %v857
        %859 = vdwg.mxu0
        %860 = vmatprep.subr.mxu0 %v643
        %861 = vmatpush1.msra.mxu0 %v641
        %862 = vmatprep.subr.mxu0 0.0
        %863 = vmatpush1.msra.mxu0 0.0
        %864 = vmatprep.subr.mxu0 0.0
        %865 = vmatpush1.msra.mxu0 0.0
        %866 = vmatprep.subr.mxu0 0.0
        %867 = vmatpush1.msra.mxu0 0.0
        %868 = vmatprep.subr.mxu0 0.0
        %869 = vmatpush1.msra.mxu0 0.0
        %870 = vmatprep.subr.mxu0 0.0
        %871 = vmatpush1.msra.mxu0 0.0
        %872 = vmatprep.subr.mxu0 0.0
        %873 = vmatpush1.msra.mxu0 0.0
        %874 = vmatprep.subr.mxu0 0.0
        %875 = vmatpush1.msra.mxu0 0.0
        %876 = vmatprep.subr.mxu0 0.0
        %877 = vmatpush1.msra.mxu0 0.0
        %878 = vmatprep.subr.mxu0 0.0
        %879 = vmatpush1.msra.mxu0 0.0
        %880 = vmatprep.subr.mxu0 0.0
        %881 = vmatpush1.msra.mxu0 0.0
        %882 = vmatprep.subr.mxu0 0.0
        %883 = vmatpush1.msra.mxu0 0.0
        %884 = vmatprep.subr.mxu0 0.0
        %885 = vmatpush1.msra.mxu0 0.0
        %886 = vmatprep.subr.mxu0 0.0
        %887 = vmatpush1.msra.mxu0 0.0
        %888 = vmatprep.subr.mxu0 0.0
        %889 = vmatpush1.msra.mxu0 0.0
        %890 = vmatprep.subr.mxu0 0.0
        %891 = vmatpush1.msra.mxu0 0.0
        %892 = vmatprep.subr.mxu0 0.0
        %893 = vmatpush1.msra.mxu0 0.0
        %894 = vmatprep.subr.mxu0 0.0
        %895 = vmatpush1.msra.mxu0 0.0
        %896 = vmatprep.subr.mxu0 0.0
        %897 = vmatpush1.msra.mxu0 0.0
        %898 = vmatprep.subr.mxu0 0.0
        %899 = vmatpush1.msra.mxu0 0.0
        %900 = vmatprep.subr.mxu0 0.0
        %901 = vmatpush1.msra.mxu0 0.0
        %902 = vmatprep.subr.mxu0 0.0
        %903 = vmatpush1.msra.mxu0 0.0
        %904 = vmatprep.subr.mxu0 0.0
        %905 = vmatpush1.msra.mxu0 0.0
        %906 = vmatprep.subr.mxu0 0.0
        %907 = vmatpush1.msra.mxu0 0.0
        %908 = vmatprep.subr.mxu0 0.0
        %909 = vmatpush1.msra.mxu0 0.0
        %910 = vmatprep.subr.mxu0 0.0
        %911 = vmatpush1.msra.mxu0 0.0
        %912 = vmatprep.subr.mxu0 0.0
        %913 = vmatpush1.msra.mxu0 0.0
        %914 = vmatprep.subr.mxu0 0.0
        %915 = vmatpush1.msra.mxu0 0.0
        %916 = vmatprep.subr.mxu0 0.0
        %917 = vmatpush1.msra.mxu0 0.0
        %918 = vmatprep.subr.mxu0 0.0
        %919 = vmatpush1.msra.mxu0 0.0
        %920 = vmatprep.subr.mxu0 0.0
        %921 = vmatpush1.msra.mxu0 0.0
        %922 = vmatprep.subr.mxu0 0.0
        %923 = vmatpush1.msra.mxu0 0.0
        %924 = vmatprep.mubr.f32.mxu0 0.0
        %925 = vmatmul.mubr.f32.gmra.mrb[0].mxu0 %v627
        %v926 = vpop.f32.mrb[0].mxu0
        %v927 = vadd.f32 %v543, %v926
        %v928 = vpop.f32.mrb[0].mxu0
        %v929 = vadd.f32 %v545, %v928
        %930 = vdwg.mxu0
        %931 = vmatprep.subr.mxu0 0.0
        %932 = vmatpush1.msra.mxu0 %v645
        %933 = vmatprep.subr.mxu0 0.0
        %934 = vmatpush1.msra.mxu0 0.0
        %935 = vmatprep.subr.mxu0 0.0
        %936 = vmatpush1.msra.mxu0 0.0
        %937 = vmatprep.subr.mxu0 0.0
        %938 = vmatpush1.msra.mxu0 0.0
        %939 = vmatprep.subr.mxu0 0.0
        %940 = vmatpush1.msra.mxu0 0.0
        %941 = vmatprep.subr.mxu0 0.0
        %942 = vmatpush1.msra.mxu0 0.0
        %943 = vmatprep.subr.mxu0 0.0
        %944 = vmatpush1.msra.mxu0 0.0
        %945 = vmatprep.subr.mxu0 0.0
        %946 = vmatpush1.msra.mxu0 0.0
        %947 = vmatprep.subr.mxu0 0.0
        %948 = vmatpush1.msra.mxu0 0.0
        %949 = vmatprep.subr.mxu0 0.0
        %950 = vmatpush1.msra.mxu0 0.0
        %951 = vmatprep.subr.mxu0 0.0
        %952 = vmatpush1.msra.mxu0 0.0
        %953 = vmatprep.subr.mxu0 0.0
        %954 = vmatpush1.msra.mxu0 0.0
        %955 = vmatprep.subr.mxu0 0.0
        %956 = vmatpush1.msra.mxu0 0.0
        %957 = vmatprep.subr.mxu0 0.0
        %958 = vmatpush1.msra.mxu0 0.0
        %959 = vmatprep.subr.mxu0 0.0
        %960 = vmatpush1.msra.mxu0 0.0
        %961 = vmatprep.subr.mxu0 0.0
        %962 = vmatpush1.msra.mxu0 0.0
        %963 = vmatprep.subr.mxu0 0.0
        %964 = vmatpush1.msra.mxu0 0.0
        %965 = vmatprep.subr.mxu0 0.0
        %966 = vmatpush1.msra.mxu0 0.0
        %967 = vmatprep.subr.mxu0 0.0
        %968 = vmatpush1.msra.mxu0 0.0
        %969 = vmatprep.subr.mxu0 0.0
        %970 = vmatpush1.msra.mxu0 0.0
        %971 = vmatprep.subr.mxu0 0.0
        %972 = vmatpush1.msra.mxu0 0.0
        %973 = vmatprep.subr.mxu0 0.0
        %974 = vmatpush1.msra.mxu0 0.0
        %975 = vmatprep.subr.mxu0 0.0
        %976 = vmatpush1.msra.mxu0 0.0
        %977 = vmatprep.subr.mxu0 0.0
        %978 = vmatpush1.msra.mxu0 0.0
        %979 = vmatprep.subr.mxu0 0.0
        %980 = vmatpush1.msra.mxu0 0.0
        %981 = vmatprep.subr.mxu0 0.0
        %982 = vmatpush1.msra.mxu0 0.0
        %983 = vmatprep.subr.mxu0 0.0
        %984 = vmatpush1.msra.mxu0 0.0
        %985 = vmatprep.subr.mxu0 0.0
        %986 = vmatpush1.msra.mxu0 0.0
        %987 = vmatprep.subr.mxu0 0.0
        %988 = vmatpush1.msra.mxu0 0.0
        %989 = vmatprep.subr.mxu0 0.0
        %990 = vmatpush1.msra.mxu0 0.0
        %991 = vmatprep.subr.mxu0 0.0
        %992 = vmatpush1.msra.mxu0 0.0
        %993 = vmatprep.subr.mxu0 0.0
        %994 = vmatpush1.msra.mxu0 0.0
        %995 = vmatprep.mubr.f32.mxu0 0.0
        %996 = vmatmul.mubr.f32.gmra.mrb[0].mxu0 %v627
        %v997 = vpop.f32.mrb[0].mxu0
        %v998 = vadd.f32 %v614, %v997
        %v999 = vpop.f32.mrb[0].mxu0
        %1000 = vdwg.mxu0
        %v1001 = vld [vmem:[%s164] sm:$0xff]
        %v1002 = vld [vmem:[%s164 + $0x8] sm:$0xff]
        %v1003 = vld [vmem:[%s164 + $0x10] sm:$0xff]
        %v1004 = vld [vmem:[%s164 + $0x18] sm:$0xff]
        %v1005 = vld [vmem:[%s164 + $0x20] sm:$0xff]
        %s1006 = scalar_lea.vmem %s1, 8
        %v1007 = vld [vmem:[%s1006] sm:$0xf]
        %v1013 = vcombine.high %v1001, %v1001
        %v1014 = vcombine.high %v1002, %v1002
        %v1015 = vcombine.high %v1003, %v1003
        %v1016 = vcombine.high %v1004, %v1004
        %v1017 = vcombine.high %v1005, %v1005
        %1018 = vrot.lane.b32.xlu0 %v1001, 126
        %v1019 = vpop.permute.xlu0 %1018
        %1020 = vrot.lane.b32.xlu0 %v1013, 126
        %v1021 = vpop.permute.xlu0 %1020
        %1022 = vrot.lane.b32.xlu0 %v1002, 126
        %v1023 = vpop.permute.xlu0 %1022
        %1024 = vrot.lane.b32.xlu0 %v1014, 126
        %v1025 = vpop.permute.xlu0 %1024
        %1026 = vrot.lane.b32.xlu0 %v1003, 126
        %v1027 = vpop.permute.xlu0 %1026
        %1028 = vrot.lane.b32.xlu0 %v1015, 126
        %v1029 = vpop.permute.xlu0 %1028
        %1030 = vrot.lane.b32.xlu0 %v1004, 126
        %v1031 = vpop.permute.xlu0 %1030
        %1032 = vrot.lane.b32.xlu0 %v1016, 126
        %v1033 = vpop.permute.xlu0 %1032
        %1034 = vrot.lane.b32.xlu0 %v1005, 126
        %v1035 = vpop.permute.xlu0 %1034
        %1036 = vrot.lane.b32.xlu0 %v1017, 126
        %v1037 = vpop.permute.xlu0 %1036
        %vm1038 = vcmask 1031168
        %v1039 = vsel %vm1038, %v1019, %v1021
        %v1040 = vsel %vm1038, %v1021, %v1023
        %v1041 = vsel %vm1038, %v1023, %v1025
        %v1042 = vsel %vm1038, %v1025, %v1027
        %v1043 = vsel %vm1038, %v1027, %v1029
        %v1044 = vsel %vm1038, %v1029, %v1031
        %v1045 = vsel %vm1038, %v1031, %v1033
        %v1046 = vsel %vm1038, %v1033, %v1035
        %v1047 = vsel %vm1038, %v1035, %v1037
        %v1049 = vsel %vm240, %v1007, 0
        %v1051 = vsel %vm244, %v1039, 0
        %v1053 = vsel %vm244, %v1040, 0
        %v1055 = vsel %vm244, %v1041, 0
        %v1057 = vsel %vm244, %v1042, 0
        %v1059 = vsel %vm244, %v1043, 0
        %v1061 = vsel %vm244, %v1044, 0
        %v1063 = vsel %vm244, %v1045, 0
        %v1065 = vsel %vm244, %v1046, 0
        %v1067 = vsel %vm244, %v1047, 0
        %1069 = vmatprep.subr.mxu0 %v1053
        %1070 = vmatpush1.msra.mxu0 %v1051
        %1071 = vmatprep.subr.mxu0 0.0
        %1072 = vmatpush1.msra.mxu0 0.0
        %1073 = vmatprep.subr.mxu0 0.0
        %1074 = vmatpush1.msra.mxu0 0.0
        %1075 = vmatprep.subr.mxu0 0.0
        %1076 = vmatpush1.msra.mxu0 0.0
        %1077 = vmatprep.subr.mxu0 0.0
        %1078 = vmatpush1.msra.mxu0 0.0
        %1079 = vmatprep.subr.mxu0 0.0
        %1080 = vmatpush1.msra.mxu0 0.0
        %1081 = vmatprep.subr.mxu0 0.0
        %1082 = vmatpush1.msra.mxu0 0.0
        %1083 = vmatprep.subr.mxu0 0.0
        %1084 = vmatpush1.msra.mxu0 0.0
        %1085 = vmatprep.subr.mxu0 0.0
        %1086 = vmatpush1.msra.mxu0 0.0
        %1087 = vmatprep.subr.mxu0 0.0
        %1088 = vmatpush1.msra.mxu0 0.0
        %1089 = vmatprep.subr.mxu0 0.0
        %1090 = vmatpush1.msra.mxu0 0.0
        %1091 = vmatprep.subr.mxu0 0.0
        %1092 = vmatpush1.msra.mxu0 0.0
        %1093 = vmatprep.subr.mxu0 0.0
        %1094 = vmatpush1.msra.mxu0 0.0
        %1095 = vmatprep.subr.mxu0 0.0
        %1096 = vmatpush1.msra.mxu0 0.0
        %1097 = vmatprep.subr.mxu0 0.0
        %1098 = vmatpush1.msra.mxu0 0.0
        %1099 = vmatprep.subr.mxu0 0.0
        %1100 = vmatpush1.msra.mxu0 0.0
        %1101 = vmatprep.subr.mxu0 0.0
        %1102 = vmatpush1.msra.mxu0 0.0
        %1103 = vmatprep.subr.mxu0 0.0
        %1104 = vmatpush1.msra.mxu0 0.0
        %1105 = vmatprep.subr.mxu0 0.0
        %1106 = vmatpush1.msra.mxu0 0.0
        %1107 = vmatprep.subr.mxu0 0.0
        %1108 = vmatpush1.msra.mxu0 0.0
        %1109 = vmatprep.subr.mxu0 0.0
        %1110 = vmatpush1.msra.mxu0 0.0
        %1111 = vmatprep.subr.mxu0 0.0
        %1112 = vmatpush1.msra.mxu0 0.0
        %1113 = vmatprep.subr.mxu0 0.0
        %1114 = vmatpush1.msra.mxu0 0.0
        %1115 = vmatprep.subr.mxu0 0.0
        %1116 = vmatpush1.msra.mxu0 0.0
        %1117 = vmatprep.subr.mxu0 0.0
        %1118 = vmatpush1.msra.mxu0 0.0
        %1119 = vmatprep.subr.mxu0 0.0
        %1120 = vmatpush1.msra.mxu0 0.0
        %1121 = vmatprep.subr.mxu0 0.0
        %1122 = vmatpush1.msra.mxu0 0.0
        %1123 = vmatprep.subr.mxu0 0.0
        %1124 = vmatpush1.msra.mxu0 0.0
        %1125 = vmatprep.subr.mxu0 0.0
        %1126 = vmatpush1.msra.mxu0 0.0
        %1127 = vmatprep.subr.mxu0 0.0
        %1128 = vmatpush1.msra.mxu0 0.0
        %1129 = vmatprep.subr.mxu0 0.0
        %1130 = vmatpush1.msra.mxu0 0.0
        %1131 = vmatprep.subr.mxu0 0.0
        %1132 = vmatpush1.msra.mxu0 0.0
        %1133 = vmatprep.mubr.f32.mxu0 0.0
        %1134 = vmatmul.mubr.f32.gmra.mrb[0].mxu0 %v1049
        %v1135 = vpop.f32.mrb[0].mxu0
        %v1136 = vadd.f32 0.0, %v1135
        %v1137 = vpop.f32.mrb[0].mxu0
        %v1138 = vadd.f32 0.0, %v1137
        %1139 = vdwg.mxu0
        %1140 = vmatprep.subr.mxu0 %v1057
        %1141 = vmatpush1.msra.mxu0 %v1055
        %1142 = vmatprep.subr.mxu0 0.0
        %1143 = vmatpush1.msra.mxu0 0.0
        %1144 = vmatprep.subr.mxu0 0.0
        %1145 = vmatpush1.msra.mxu0 0.0
        %1146 = vmatprep.subr.mxu0 0.0
        %1147 = vmatpush1.msra.mxu0 0.0
        %1148 = vmatprep.subr.mxu0 0.0
        %1149 = vmatpush1.msra.mxu0 0.0
        %1150 = vmatprep.subr.mxu0 0.0
        %1151 = vmatpush1.msra.mxu0 0.0
        %1152 = vmatprep.subr.mxu0 0.0
        %1153 = vmatpush1.msra.mxu0 0.0
        %1154 = vmatprep.subr.mxu0 0.0
        %1155 = vmatpush1.msra.mxu0 0.0
        %1156 = vmatprep.subr.mxu0 0.0
        %1157 = vmatpush1.msra.mxu0 0.0
        %1158 = vmatprep.subr.mxu0 0.0
        %1159 = vmatpush1.msra.mxu0 0.0
        %1160 = vmatprep.subr.mxu0 0.0
        %1161 = vmatpush1.msra.mxu0 0.0
        %1162 = vmatprep.subr.mxu0 0.0
        %1163 = vmatpush1.msra.mxu0 0.0
        %1164 = vmatprep.subr.mxu0 0.0
        %1165 = vmatpush1.msra.mxu0 0.0
        %1166 = vmatprep.subr.mxu0 0.0
        %1167 = vmatpush1.msra.mxu0 0.0
        %1168 = vmatprep.subr.mxu0 0.0
        %1169 = vmatpush1.msra.mxu0 0.0
        %1170 = vmatprep.subr.mxu0 0.0
        %1171 = vmatpush1.msra.mxu0 0.0
        %1172 = vmatprep.subr.mxu0 0.0
        %1173 = vmatpush1.msra.mxu0 0.0
        %1174 = vmatprep.subr.mxu0 0.0
        %1175 = vmatpush1.msra.mxu0 0.0
        %1176 = vmatprep.subr.mxu0 0.0
        %1177 = vmatpush1.msra.mxu0 0.0
        %1178 = vmatprep.subr.mxu0 0.0
        %1179 = vmatpush1.msra.mxu0 0.0
        %1180 = vmatprep.subr.mxu0 0.0
        %1181 = vmatpush1.msra.mxu0 0.0
        %1182 = vmatprep.subr.mxu0 0.0
        %1183 = vmatpush1.msra.mxu0 0.0
        %1184 = vmatprep.subr.mxu0 0.0
        %1185 = vmatpush1.msra.mxu0 0.0
        %1186 = vmatprep.subr.mxu0 0.0
        %1187 = vmatpush1.msra.mxu0 0.0
        %1188 = vmatprep.subr.mxu0 0.0
        %1189 = vmatpush1.msra.mxu0 0.0
        %1190 = vmatprep.subr.mxu0 0.0
        %1191 = vmatpush1.msra.mxu0 0.0
        %1192 = vmatprep.subr.mxu0 0.0
        %1193 = vmatpush1.msra.mxu0 0.0
        %1194 = vmatprep.subr.mxu0 0.0
        %1195 = vmatpush1.msra.mxu0 0.0
        %1196 = vmatprep.subr.mxu0 0.0
        %1197 = vmatpush1.msra.mxu0 0.0
        %1198 = vmatprep.subr.mxu0 0.0
        %1199 = vmatpush1.msra.mxu0 0.0
        %1200 = vmatprep.subr.mxu0 0.0
        %1201 = vmatpush1.msra.mxu0 0.0
        %1202 = vmatprep.subr.mxu0 0.0
        %1203 = vmatpush1.msra.mxu0 0.0
        %1204 = vmatprep.mubr.f32.mxu0 0.0
        %1205 = vmatmul.mubr.f32.gmra.mrb[0].mxu0 %v1049
        %v1206 = vpop.f32.mrb[0].mxu0
        %v1207 = vadd.f32 0.0, %v1206
        %v1208 = vpop.f32.mrb[0].mxu0
        %v1209 = vadd.f32 0.0, %v1208
        %1210 = vdwg.mxu0
        %1211 = vmatprep.subr.mxu0 %v1061
        %1212 = vmatpush1.msra.mxu0 %v1059
        %1213 = vmatprep.subr.mxu0 0.0
        %1214 = vmatpush1.msra.mxu0 0.0
        %1215 = vmatprep.subr.mxu0 0.0
        %1216 = vmatpush1.msra.mxu0 0.0
        %1217 = vmatprep.subr.mxu0 0.0
        %1218 = vmatpush1.msra.mxu0 0.0
        %1219 = vmatprep.subr.mxu0 0.0
        %1220 = vmatpush1.msra.mxu0 0.0
        %1221 = vmatprep.subr.mxu0 0.0
        %1222 = vmatpush1.msra.mxu0 0.0
        %1223 = vmatprep.subr.mxu0 0.0
        %1224 = vmatpush1.msra.mxu0 0.0
        %1225 = vmatprep.subr.mxu0 0.0
        %1226 = vmatpush1.msra.mxu0 0.0
        %1227 = vmatprep.subr.mxu0 0.0
        %1228 = vmatpush1.msra.mxu0 0.0
        %1229 = vmatprep.subr.mxu0 0.0
        %1230 = vmatpush1.msra.mxu0 0.0
        %1231 = vmatprep.subr.mxu0 0.0
        %1232 = vmatpush1.msra.mxu0 0.0
        %1233 = vmatprep.subr.mxu0 0.0
        %1234 = vmatpush1.msra.mxu0 0.0
        %1235 = vmatprep.subr.mxu0 0.0
        %1236 = vmatpush1.msra.mxu0 0.0
        %1237 = vmatprep.subr.mxu0 0.0
        %1238 = vmatpush1.msra.mxu0 0.0
        %1239 = vmatprep.subr.mxu0 0.0
        %1240 = vmatpush1.msra.mxu0 0.0
        %1241 = vmatprep.subr.mxu0 0.0
        %1242 = vmatpush1.msra.mxu0 0.0
        %1243 = vmatprep.subr.mxu0 0.0
        %1244 = vmatpush1.msra.mxu0 0.0
        %1245 = vmatprep.subr.mxu0 0.0
        %1246 = vmatpush1.msra.mxu0 0.0
        %1247 = vmatprep.subr.mxu0 0.0
        %1248 = vmatpush1.msra.mxu0 0.0
        %1249 = vmatprep.subr.mxu0 0.0
        %1250 = vmatpush1.msra.mxu0 0.0
        %1251 = vmatprep.subr.mxu0 0.0
        %1252 = vmatpush1.msra.mxu0 0.0
        %1253 = vmatprep.subr.mxu0 0.0
        %1254 = vmatpush1.msra.mxu0 0.0
        %1255 = vmatprep.subr.mxu0 0.0
        %1256 = vmatpush1.msra.mxu0 0.0
        %1257 = vmatprep.subr.mxu0 0.0
        %1258 = vmatpush1.msra.mxu0 0.0
        %1259 = vmatprep.subr.mxu0 0.0
        %1260 = vmatpush1.msra.mxu0 0.0
        %1261 = vmatprep.subr.mxu0 0.0
        %1262 = vmatpush1.msra.mxu0 0.0
        %1263 = vmatprep.subr.mxu0 0.0
        %1264 = vmatpush1.msra.mxu0 0.0
        %1265 = vmatprep.subr.mxu0 0.0
        %1266 = vmatpush1.msra.mxu0 0.0
        %1267 = vmatprep.subr.mxu0 0.0
        %1268 = vmatpush1.msra.mxu0 0.0
        %1269 = vmatprep.subr.mxu0 0.0
        %1270 = vmatpush1.msra.mxu0 0.0
        %1271 = vmatprep.subr.mxu0 0.0
        %1272 = vmatpush1.msra.mxu0 0.0
        %1273 = vmatprep.subr.mxu0 0.0
        %1274 = vmatpush1.msra.mxu0 0.0
        %1275 = vmatprep.mubr.f32.mxu0 0.0
        %1276 = vmatmul.mubr.f32.gmra.mrb[0].mxu0 %v1049
        %v1277 = vpop.f32.mrb[0].mxu0
        %v1278 = vadd.f32 0.0, %v1277
        %v1279 = vpop.f32.mrb[0].mxu0
        %v1280 = vadd.f32 0.0, %v1279
        %1281 = vdwg.mxu0
        %1282 = vmatprep.subr.mxu0 %v1065
        %1283 = vmatpush1.msra.mxu0 %v1063
        %1284 = vmatprep.subr.mxu0 0.0
        %1285 = vmatpush1.msra.mxu0 0.0
        %1286 = vmatprep.subr.mxu0 0.0
        %1287 = vmatpush1.msra.mxu0 0.0
        %1288 = vmatprep.subr.mxu0 0.0
        %1289 = vmatpush1.msra.mxu0 0.0
        %1290 = vmatprep.subr.mxu0 0.0
        %1291 = vmatpush1.msra.mxu0 0.0
        %1292 = vmatprep.subr.mxu0 0.0
        %1293 = vmatpush1.msra.mxu0 0.0
        %1294 = vmatprep.subr.mxu0 0.0
        %1295 = vmatpush1.msra.mxu0 0.0
        %1296 = vmatprep.subr.mxu0 0.0
        %1297 = vmatpush1.msra.mxu0 0.0
        %1298 = vmatprep.subr.mxu0 0.0
        %1299 = vmatpush1.msra.mxu0 0.0
        %1300 = vmatprep.subr.mxu0 0.0
        %1301 = vmatpush1.msra.mxu0 0.0
        %1302 = vmatprep.subr.mxu0 0.0
        %1303 = vmatpush1.msra.mxu0 0.0
        %1304 = vmatprep.subr.mxu0 0.0
        %1305 = vmatpush1.msra.mxu0 0.0
        %1306 = vmatprep.subr.mxu0 0.0
        %1307 = vmatpush1.msra.mxu0 0.0
        %1308 = vmatprep.subr.mxu0 0.0
        %1309 = vmatpush1.msra.mxu0 0.0
        %1310 = vmatprep.subr.mxu0 0.0
        %1311 = vmatpush1.msra.mxu0 0.0
        %1312 = vmatprep.subr.mxu0 0.0
        %1313 = vmatpush1.msra.mxu0 0.0
        %1314 = vmatprep.subr.mxu0 0.0
        %1315 = vmatpush1.msra.mxu0 0.0
        %1316 = vmatprep.subr.mxu0 0.0
        %1317 = vmatpush1.msra.mxu0 0.0
        %1318 = vmatprep.subr.mxu0 0.0
        %1319 = vmatpush1.msra.mxu0 0.0
        %1320 = vmatprep.subr.mxu0 0.0
        %1321 = vmatpush1.msra.mxu0 0.0
        %1322 = vmatprep.subr.mxu0 0.0
        %1323 = vmatpush1.msra.mxu0 0.0
        %1324 = vmatprep.subr.mxu0 0.0
        %1325 = vmatpush1.msra.mxu0 0.0
        %1326 = vmatprep.subr.mxu0 0.0
        %1327 = vmatpush1.msra.mxu0 0.0
        %1328 = vmatprep.subr.mxu0 0.0
        %1329 = vmatpush1.msra.mxu0 0.0
        %1330 = vmatprep.subr.mxu0 0.0
        %1331 = vmatpush1.msra.mxu0 0.0
        %1332 = vmatprep.subr.mxu0 0.0
        %1333 = vmatpush1.msra.mxu0 0.0
        %1334 = vmatprep.subr.mxu0 0.0
        %1335 = vmatpush1.msra.mxu0 0.0
        %1336 = vmatprep.subr.mxu0 0.0
        %1337 = vmatpush1.msra.mxu0 0.0
        %1338 = vmatprep.subr.mxu0 0.0
        %1339 = vmatpush1.msra.mxu0 0.0
        %1340 = vmatprep.subr.mxu0 0.0
        %1341 = vmatpush1.msra.mxu0 0.0
        %1342 = vmatprep.subr.mxu0 0.0
        %1343 = vmatpush1.msra.mxu0 0.0
        %1344 = vmatprep.subr.mxu0 0.0
        %1345 = vmatpush1.msra.mxu0 0.0
        %1346 = vmatprep.mubr.f32.mxu0 0.0
        %1347 = vmatmul.mubr.f32.gmra.mrb[0].mxu0 %v1049
        %v1348 = vpop.f32.mrb[0].mxu0
        %v1349 = vadd.f32 0.0, %v1348
        %v1350 = vpop.f32.mrb[0].mxu0
        %v1351 = vadd.f32 0.0, %v1350
        %1352 = vdwg.mxu0
        %1353 = vmatprep.subr.mxu0 0.0
        %1354 = vmatpush1.msra.mxu0 %v1067
        %1355 = vmatprep.subr.mxu0 0.0
        %1356 = vmatpush1.msra.mxu0 0.0
        %1357 = vmatprep.subr.mxu0 0.0
        %1358 = vmatpush1.msra.mxu0 0.0
        %1359 = vmatprep.subr.mxu0 0.0
        %1360 = vmatpush1.msra.mxu0 0.0
        %1361 = vmatprep.subr.mxu0 0.0
        %1362 = vmatpush1.msra.mxu0 0.0
        %1363 = vmatprep.subr.mxu0 0.0
        %1364 = vmatpush1.msra.mxu0 0.0
        %1365 = vmatprep.subr.mxu0 0.0
        %1366 = vmatpush1.msra.mxu0 0.0
        %1367 = vmatprep.subr.mxu0 0.0
        %1368 = vmatpush1.msra.mxu0 0.0
        %1369 = vmatprep.subr.mxu0 0.0
        %1370 = vmatpush1.msra.mxu0 0.0
        %1371 = vmatprep.subr.mxu0 0.0
        %1372 = vmatpush1.msra.mxu0 0.0
        %1373 = vmatprep.subr.mxu0 0.0
        %1374 = vmatpush1.msra.mxu0 0.0
        %1375 = vmatprep.subr.mxu0 0.0
        %1376 = vmatpush1.msra.mxu0 0.0
        %1377 = vmatprep.subr.mxu0 0.0
        %1378 = vmatpush1.msra.mxu0 0.0
        %1379 = vmatprep.subr.mxu0 0.0
        %1380 = vmatpush1.msra.mxu0 0.0
        %1381 = vmatprep.subr.mxu0 0.0
        %1382 = vmatpush1.msra.mxu0 0.0
        %1383 = vmatprep.subr.mxu0 0.0
        %1384 = vmatpush1.msra.mxu0 0.0
        %1385 = vmatprep.subr.mxu0 0.0
        %1386 = vmatpush1.msra.mxu0 0.0
        %1387 = vmatprep.subr.mxu0 0.0
        %1388 = vmatpush1.msra.mxu0 0.0
        %1389 = vmatprep.subr.mxu0 0.0
        %1390 = vmatpush1.msra.mxu0 0.0
        %1391 = vmatprep.subr.mxu0 0.0
        %1392 = vmatpush1.msra.mxu0 0.0
        %1393 = vmatprep.subr.mxu0 0.0
        %1394 = vmatpush1.msra.mxu0 0.0
        %1395 = vmatprep.subr.mxu0 0.0
        %1396 = vmatpush1.msra.mxu0 0.0
        %1397 = vmatprep.subr.mxu0 0.0
        %1398 = vmatpush1.msra.mxu0 0.0
        %1399 = vmatprep.subr.mxu0 0.0
        %1400 = vmatpush1.msra.mxu0 0.0
        %1401 = vmatprep.subr.mxu0 0.0
        %1402 = vmatpush1.msra.mxu0 0.0
        %1403 = vmatprep.subr.mxu0 0.0
        %1404 = vmatpush1.msra.mxu0 0.0
        %1405 = vmatprep.subr.mxu0 0.0
        %1406 = vmatpush1.msra.mxu0 0.0
        %1407 = vmatprep.subr.mxu0 0.0
        %1408 = vmatpush1.msra.mxu0 0.0
        %1409 = vmatprep.subr.mxu0 0.0
        %1410 = vmatpush1.msra.mxu0 0.0
        %1411 = vmatprep.subr.mxu0 0.0
        %1412 = vmatpush1.msra.mxu0 0.0
        %1413 = vmatprep.subr.mxu0 0.0
        %1414 = vmatpush1.msra.mxu0 0.0
        %1415 = vmatprep.subr.mxu0 0.0
        %1416 = vmatpush1.msra.mxu0 0.0
        %1417 = vmatprep.mubr.f32.mxu0 0.0
        %1418 = vmatmul.mubr.f32.gmra.mrb[0].mxu0 %v1049
        %v1419 = vpop.f32.mrb[0].mxu0
        %v1420 = vadd.f32 0.0, %v1419
        %v1421 = vpop.f32.mrb[0].mxu0
        %1422 = vdwg.mxu0
        %v1423 = vadd.f32 %v714, %v1136
        %v1424 = vadd.f32 %v716, %v1138
        %v1425 = vadd.f32 %v785, %v1207
        %v1426 = vadd.f32 %v787, %v1209
        %v1427 = vadd.f32 %v856, %v1278
        %v1428 = vadd.f32 %v858, %v1280
        %v1429 = vadd.f32 %v927, %v1349
        %v1430 = vadd.f32 %v929, %v1351
        %v1431 = vadd.f32 %v998, %v1420
        %v1432 = vld [vmem:[%s164] sm:$0xff]
        %v1433 = vld [vmem:[%s164 + $0x8] sm:$0xff]
        %v1434 = vld [vmem:[%s164 + $0x10] sm:$0xff]
        %v1435 = vld [vmem:[%s164 + $0x18] sm:$0xff]
        %v1436 = vld [vmem:[%s164 + $0x20] sm:$0xff]
        %s1437 = scalar_lea.vmem %s1, 12
        %v1438 = vld [vmem:[%s1437] sm:$0xf]
        %v1444 = vcombine.high %v1432, %v1432
        %v1445 = vcombine.high %v1433, %v1433
        %v1446 = vcombine.high %v1434, %v1434
        %v1447 = vcombine.high %v1435, %v1435
        %v1448 = vcombine.high %v1436, %v1436
        %1449 = vrot.lane.b32.xlu0 %v1432, 94
        %v1450 = vpop.permute.xlu0 %1449
        %1451 = vrot.lane.b32.xlu0 %v1444, 94
        %v1452 = vpop.permute.xlu0 %1451
        %1453 = vrot.lane.b32.xlu0 %v1433, 94
        %v1454 = vpop.permute.xlu0 %1453
        %1455 = vrot.lane.b32.xlu0 %v1445, 94
        %v1456 = vpop.permute.xlu0 %1455
        %1457 = vrot.lane.b32.xlu0 %v1434, 94
        %v1458 = vpop.permute.xlu0 %1457
        %1459 = vrot.lane.b32.xlu0 %v1446, 94
        %v1460 = vpop.permute.xlu0 %1459
        %1461 = vrot.lane.b32.xlu0 %v1435, 94
        %v1462 = vpop.permute.xlu0 %1461
        %1463 = vrot.lane.b32.xlu0 %v1447, 94
        %v1464 = vpop.permute.xlu0 %1463
        %1465 = vrot.lane.b32.xlu0 %v1436, 94
        %v1466 = vpop.permute.xlu0 %1465
        %1467 = vrot.lane.b32.xlu0 %v1448, 94
        %v1468 = vpop.permute.xlu0 %1467
        %vm1469 = vcmask 769024
        %v1470 = vsel %vm1469, %v1450, %v1452
        %v1471 = vsel %vm1469, %v1452, %v1454
        %v1472 = vsel %vm1469, %v1454, %v1456
        %v1473 = vsel %vm1469, %v1456, %v1458
        %v1474 = vsel %vm1469, %v1458, %v1460
        %v1475 = vsel %vm1469, %v1460, %v1462
        %v1476 = vsel %vm1469, %v1462, %v1464
        %v1477 = vsel %vm1469, %v1464, %v1466
        %v1478 = vsel %vm1469, %v1466, %v1468
        %v1480 = vsel %vm240, %v1438, 0
        %v1482 = vsel %vm244, %v1470, 0
        %v1484 = vsel %vm244, %v1471, 0
        %v1486 = vsel %vm244, %v1472, 0
        %v1488 = vsel %vm244, %v1473, 0
        %v1490 = vsel %vm244, %v1474, 0
        %v1492 = vsel %vm244, %v1475, 0
        %v1494 = vsel %vm244, %v1476, 0
        %v1496 = vsel %vm244, %v1477, 0
        %v1498 = vsel %vm244, %v1478, 0
        %1500 = vmatprep.subr.mxu0 %v1484
        %1501 = vmatpush1.msra.mxu0 %v1482
        %1502 = vmatprep.subr.mxu0 0.0
        %1503 = vmatpush1.msra.mxu0 0.0
        %1504 = vmatprep.subr.mxu0 0.0
        %1505 = vmatpush1.msra.mxu0 0.0
        %1506 = vmatprep.subr.mxu0 0.0
        %1507 = vmatpush1.msra.mxu0 0.0
        %1508 = vmatprep.subr.mxu0 0.0
        %1509 = vmatpush1.msra.mxu0 0.0
        %1510 = vmatprep.subr.mxu0 0.0
        %1511 = vmatpush1.msra.mxu0 0.0
        %1512 = vmatprep.subr.mxu0 0.0
        %1513 = vmatpush1.msra.mxu0 0.0
        %1514 = vmatprep.subr.mxu0 0.0
        %1515 = vmatpush1.msra.mxu0 0.0
        %1516 = vmatprep.subr.mxu0 0.0
        %1517 = vmatpush1.msra.mxu0 0.0
        %1518 = vmatprep.subr.mxu0 0.0
        %1519 = vmatpush1.msra.mxu0 0.0
        %1520 = vmatprep.subr.mxu0 0.0
        %1521 = vmatpush1.msra.mxu0 0.0
        %1522 = vmatprep.subr.mxu0 0.0
        %1523 = vmatpush1.msra.mxu0 0.0
        %1524 = vmatprep.subr.mxu0 0.0
        %1525 = vmatpush1.msra.mxu0 0.0
        %1526 = vmatprep.subr.mxu0 0.0
        %1527 = vmatpush1.msra.mxu0 0.0
        %1528 = vmatprep.subr.mxu0 0.0
        %1529 = vmatpush1.msra.mxu0 0.0
        %1530 = vmatprep.subr.mxu0 0.0
        %1531 = vmatpush1.msra.mxu0 0.0
        %1532 = vmatprep.subr.mxu0 0.0
        %1533 = vmatpush1.msra.mxu0 0.0
        %1534 = vmatprep.subr.mxu0 0.0
        %1535 = vmatpush1.msra.mxu0 0.0
        %1536 = vmatprep.subr.mxu0 0.0
        %1537 = vmatpush1.msra.mxu0 0.0
        %1538 = vmatprep.subr.mxu0 0.0
        %1539 = vmatpush1.msra.mxu0 0.0
        %1540 = vmatprep.subr.mxu0 0.0
        %1541 = vmatpush1.msra.mxu0 0.0
        %1542 = vmatprep.subr.mxu0 0.0
        %1543 = vmatpush1.msra.mxu0 0.0
        %1544 = vmatprep.subr.mxu0 0.0
        %1545 = vmatpush1.msra.mxu0 0.0
        %1546 = vmatprep.subr.mxu0 0.0
        %1547 = vmatpush1.msra.mxu0 0.0
        %1548 = vmatprep.subr.mxu0 0.0
        %1549 = vmatpush1.msra.mxu0 0.0
        %1550 = vmatprep.subr.mxu0 0.0
        %1551 = vmatpush1.msra.mxu0 0.0
        %1552 = vmatprep.subr.mxu0 0.0
        %1553 = vmatpush1.msra.mxu0 0.0
        %1554 = vmatprep.subr.mxu0 0.0
        %1555 = vmatpush1.msra.mxu0 0.0
        %1556 = vmatprep.subr.mxu0 0.0
        %1557 = vmatpush1.msra.mxu0 0.0
        %1558 = vmatprep.subr.mxu0 0.0
        %1559 = vmatpush1.msra.mxu0 0.0
        %1560 = vmatprep.subr.mxu0 0.0
        %1561 = vmatpush1.msra.mxu0 0.0
        %1562 = vmatprep.subr.mxu0 0.0
        %1563 = vmatpush1.msra.mxu0 0.0
        %1564 = vmatprep.mubr.f32.mxu0 0.0
        %1565 = vmatmul.mubr.f32.gmra.mrb[0].mxu0 %v1480
        %v1566 = vpop.f32.mrb[0].mxu0
        %v1567 = vadd.f32 0.0, %v1566
        %v1568 = vpop.f32.mrb[0].mxu0
        %v1569 = vadd.f32 0.0, %v1568
        %1570 = vdwg.mxu0
        %1571 = vmatprep.subr.mxu0 %v1488
        %1572 = vmatpush1.msra.mxu0 %v1486
        %1573 = vmatprep.subr.mxu0 0.0
        %1574 = vmatpush1.msra.mxu0 0.0
        %1575 = vmatprep.subr.mxu0 0.0
        %1576 = vmatpush1.msra.mxu0 0.0
        %1577 = vmatprep.subr.mxu0 0.0
        %1578 = vmatpush1.msra.mxu0 0.0
        %1579 = vmatprep.subr.mxu0 0.0
        %1580 = vmatpush1.msra.mxu0 0.0
        %1581 = vmatprep.subr.mxu0 0.0
        %1582 = vmatpush1.msra.mxu0 0.0
        %1583 = vmatprep.subr.mxu0 0.0
        %1584 = vmatpush1.msra.mxu0 0.0
        %1585 = vmatprep.subr.mxu0 0.0
        %1586 = vmatpush1.msra.mxu0 0.0
        %1587 = vmatprep.subr.mxu0 0.0
        %1588 = vmatpush1.msra.mxu0 0.0
        %1589 = vmatprep.subr.mxu0 0.0
        %1590 = vmatpush1.msra.mxu0 0.0
        %1591 = vmatprep.subr.mxu0 0.0
        %1592 = vmatpush1.msra.mxu0 0.0
        %1593 = vmatprep.subr.mxu0 0.0
        %1594 = vmatpush1.msra.mxu0 0.0
        %1595 = vmatprep.subr.mxu0 0.0
        %1596 = vmatpush1.msra.mxu0 0.0
        %1597 = vmatprep.subr.mxu0 0.0
        %1598 = vmatpush1.msra.mxu0 0.0
        %1599 = vmatprep.subr.mxu0 0.0
        %1600 = vmatpush1.msra.mxu0 0.0
        %1601 = vmatprep.subr.mxu0 0.0
        %1602 = vmatpush1.msra.mxu0 0.0
        %1603 = vmatprep.subr.mxu0 0.0
        %1604 = vmatpush1.msra.mxu0 0.0
        %1605 = vmatprep.subr.mxu0 0.0
        %1606 = vmatpush1.msra.mxu0 0.0
        %1607 = vmatprep.subr.mxu0 0.0
        %1608 = vmatpush1.msra.mxu0 0.0
        %1609 = vmatprep.subr.mxu0 0.0
        %1610 = vmatpush1.msra.mxu0 0.0
        %1611 = vmatprep.subr.mxu0 0.0
        %1612 = vmatpush1.msra.mxu0 0.0
        %1613 = vmatprep.subr.mxu0 0.0
        %1614 = vmatpush1.msra.mxu0 0.0
        %1615 = vmatprep.subr.mxu0 0.0
        %1616 = vmatpush1.msra.mxu0 0.0
        %1617 = vmatprep.subr.mxu0 0.0
        %1618 = vmatpush1.msra.mxu0 0.0
        %1619 = vmatprep.subr.mxu0 0.0
        %1620 = vmatpush1.msra.mxu0 0.0
        %1621 = vmatprep.subr.mxu0 0.0
        %1622 = vmatpush1.msra.mxu0 0.0
        %1623 = vmatprep.subr.mxu0 0.0
        %1624 = vmatpush1.msra.mxu0 0.0
        %1625 = vmatprep.subr.mxu0 0.0
        %1626 = vmatpush1.msra.mxu0 0.0
        %1627 = vmatprep.subr.mxu0 0.0
        %1628 = vmatpush1.msra.mxu0 0.0
        %1629 = vmatprep.subr.mxu0 0.0
        %1630 = vmatpush1.msra.mxu0 0.0
        %1631 = vmatprep.subr.mxu0 0.0
        %1632 = vmatpush1.msra.mxu0 0.0
        %1633 = vmatprep.subr.mxu0 0.0
        %1634 = vmatpush1.msra.mxu0 0.0
        %1635 = vmatprep.mubr.f32.mxu0 0.0
        %1636 = vmatmul.mubr.f32.gmra.mrb[0].mxu0 %v1480
        %v1637 = vpop.f32.mrb[0].mxu0
        %v1638 = vadd.f32 0.0, %v1637
        %v1639 = vpop.f32.mrb[0].mxu0
        %v1640 = vadd.f32 0.0, %v1639
        %1641 = vdwg.mxu0
        %1642 = vmatprep.subr.mxu0 %v1492
        %1643 = vmatpush1.msra.mxu0 %v1490
        %1644 = vmatprep.subr.mxu0 0.0
        %1645 = vmatpush1.msra.mxu0 0.0
        %1646 = vmatprep.subr.mxu0 0.0
        %1647 = vmatpush1.msra.mxu0 0.0
        %1648 = vmatprep.subr.mxu0 0.0
        %1649 = vmatpush1.msra.mxu0 0.0
        %1650 = vmatprep.subr.mxu0 0.0
        %1651 = vmatpush1.msra.mxu0 0.0
        %1652 = vmatprep.subr.mxu0 0.0
        %1653 = vmatpush1.msra.mxu0 0.0
        %1654 = vmatprep.subr.mxu0 0.0
        %1655 = vmatpush1.msra.mxu0 0.0
        %1656 = vmatprep.subr.mxu0 0.0
        %1657 = vmatpush1.msra.mxu0 0.0
        %1658 = vmatprep.subr.mxu0 0.0
        %1659 = vmatpush1.msra.mxu0 0.0
        %1660 = vmatprep.subr.mxu0 0.0
        %1661 = vmatpush1.msra.mxu0 0.0
        %1662 = vmatprep.subr.mxu0 0.0
        %1663 = vmatpush1.msra.mxu0 0.0
        %1664 = vmatprep.subr.mxu0 0.0
        %1665 = vmatpush1.msra.mxu0 0.0
        %1666 = vmatprep.subr.mxu0 0.0
        %1667 = vmatpush1.msra.mxu0 0.0
        %1668 = vmatprep.subr.mxu0 0.0
        %1669 = vmatpush1.msra.mxu0 0.0
        %1670 = vmatprep.subr.mxu0 0.0
        %1671 = vmatpush1.msra.mxu0 0.0
        %1672 = vmatprep.subr.mxu0 0.0
        %1673 = vmatpush1.msra.mxu0 0.0
        %1674 = vmatprep.subr.mxu0 0.0
        %1675 = vmatpush1.msra.mxu0 0.0
        %1676 = vmatprep.subr.mxu0 0.0
        %1677 = vmatpush1.msra.mxu0 0.0
        %1678 = vmatprep.subr.mxu0 0.0
        %1679 = vmatpush1.msra.mxu0 0.0
        %1680 = vmatprep.subr.mxu0 0.0
        %1681 = vmatpush1.msra.mxu0 0.0
        %1682 = vmatprep.subr.mxu0 0.0
        %1683 = vmatpush1.msra.mxu0 0.0
        %1684 = vmatprep.subr.mxu0 0.0
        %1685 = vmatpush1.msra.mxu0 0.0
        %1686 = vmatprep.subr.mxu0 0.0
        %1687 = vmatpush1.msra.mxu0 0.0
        %1688 = vmatprep.subr.mxu0 0.0
        %1689 = vmatpush1.msra.mxu0 0.0
        %1690 = vmatprep.subr.mxu0 0.0
        %1691 = vmatpush1.msra.mxu0 0.0
        %1692 = vmatprep.subr.mxu0 0.0
        %1693 = vmatpush1.msra.mxu0 0.0
        %1694 = vmatprep.subr.mxu0 0.0
        %1695 = vmatpush1.msra.mxu0 0.0
        %1696 = vmatprep.subr.mxu0 0.0
        %1697 = vmatpush1.msra.mxu0 0.0
        %1698 = vmatprep.subr.mxu0 0.0
        %1699 = vmatpush1.msra.mxu0 0.0
        %1700 = vmatprep.subr.mxu0 0.0
        %1701 = vmatpush1.msra.mxu0 0.0
        %1702 = vmatprep.subr.mxu0 0.0
        %1703 = vmatpush1.msra.mxu0 0.0
        %1704 = vmatprep.subr.mxu0 0.0
        %1705 = vmatpush1.msra.mxu0 0.0
        %1706 = vmatprep.mubr.f32.mxu0 0.0
        %1707 = vmatmul.mubr.f32.gmra.mrb[0].mxu0 %v1480
        %v1708 = vpop.f32.mrb[0].mxu0
        %v1709 = vadd.f32 0.0, %v1708
        %v1710 = vpop.f32.mrb[0].mxu0
        %v1711 = vadd.f32 0.0, %v1710
        %1712 = vdwg.mxu0
        %1713 = vmatprep.subr.mxu0 %v1496
        %1714 = vmatpush1.msra.mxu0 %v1494
        %1715 = vmatprep.subr.mxu0 0.0
        %1716 = vmatpush1.msra.mxu0 0.0
        %1717 = vmatprep.subr.mxu0 0.0
        %1718 = vmatpush1.msra.mxu0 0.0
        %1719 = vmatprep.subr.mxu0 0.0
        %1720 = vmatpush1.msra.mxu0 0.0
        %1721 = vmatprep.subr.mxu0 0.0
        %1722 = vmatpush1.msra.mxu0 0.0
        %1723 = vmatprep.subr.mxu0 0.0
        %1724 = vmatpush1.msra.mxu0 0.0
        %1725 = vmatprep.subr.mxu0 0.0
        %1726 = vmatpush1.msra.mxu0 0.0
        %1727 = vmatprep.subr.mxu0 0.0
        %1728 = vmatpush1.msra.mxu0 0.0
        %1729 = vmatprep.subr.mxu0 0.0
        %1730 = vmatpush1.msra.mxu0 0.0
        %1731 = vmatprep.subr.mxu0 0.0
        %1732 = vmatpush1.msra.mxu0 0.0
        %1733 = vmatprep.subr.mxu0 0.0
        %1734 = vmatpush1.msra.mxu0 0.0
        %1735 = vmatprep.subr.mxu0 0.0
        %1736 = vmatpush1.msra.mxu0 0.0
        %1737 = vmatprep.subr.mxu0 0.0
        %1738 = vmatpush1.msra.mxu0 0.0
        %1739 = vmatprep.subr.mxu0 0.0
        %1740 = vmatpush1.msra.mxu0 0.0
        %1741 = vmatprep.subr.mxu0 0.0
        %1742 = vmatpush1.msra.mxu0 0.0
        %1743 = vmatprep.subr.mxu0 0.0
        %1744 = vmatpush1.msra.mxu0 0.0
        %1745 = vmatprep.subr.mxu0 0.0
        %1746 = vmatpush1.msra.mxu0 0.0
        %1747 = vmatprep.subr.mxu0 0.0
        %1748 = vmatpush1.msra.mxu0 0.0
        %1749 = vmatprep.subr.mxu0 0.0
        %1750 = vmatpush1.msra.mxu0 0.0
        %1751 = vmatprep.subr.mxu0 0.0
        %1752 = vmatpush1.msra.mxu0 0.0
        %1753 = vmatprep.subr.mxu0 0.0
        %1754 = vmatpush1.msra.mxu0 0.0
        %1755 = vmatprep.subr.mxu0 0.0
        %1756 = vmatpush1.msra.mxu0 0.0
        %1757 = vmatprep.subr.mxu0 0.0
        %1758 = vmatpush1.msra.mxu0 0.0
        %1759 = vmatprep.subr.mxu0 0.0
        %1760 = vmatpush1.msra.mxu0 0.0
        %1761 = vmatprep.subr.mxu0 0.0
        %1762 = vmatpush1.msra.mxu0 0.0
        %1763 = vmatprep.subr.mxu0 0.0
        %1764 = vmatpush1.msra.mxu0 0.0
        %1765 = vmatprep.subr.mxu0 0.0
        %1766 = vmatpush1.msra.mxu0 0.0
        %1767 = vmatprep.subr.mxu0 0.0
        %1768 = vmatpush1.msra.mxu0 0.0
        %1769 = vmatprep.subr.mxu0 0.0
        %1770 = vmatpush1.msra.mxu0 0.0
        %1771 = vmatprep.subr.mxu0 0.0
        %1772 = vmatpush1.msra.mxu0 0.0
        %1773 = vmatprep.subr.mxu0 0.0
        %1774 = vmatpush1.msra.mxu0 0.0
        %1775 = vmatprep.subr.mxu0 0.0
        %1776 = vmatpush1.msra.mxu0 0.0
        %1777 = vmatprep.mubr.f32.mxu0 0.0
        %1778 = vmatmul.mubr.f32.gmra.mrb[0].mxu0 %v1480
        %v1779 = vpop.f32.mrb[0].mxu0
        %v1780 = vadd.f32 0.0, %v1779
        %v1781 = vpop.f32.mrb[0].mxu0
        %v1782 = vadd.f32 0.0, %v1781
        %1783 = vdwg.mxu0
        %1784 = vmatprep.subr.mxu0 0.0
        %1785 = vmatpush1.msra.mxu0 %v1498
        %1786 = vmatprep.subr.mxu0 0.0
        %1787 = vmatpush1.msra.mxu0 0.0
        %1788 = vmatprep.subr.mxu0 0.0
        %1789 = vmatpush1.msra.mxu0 0.0
        %1790 = vmatprep.subr.mxu0 0.0
        %1791 = vmatpush1.msra.mxu0 0.0
        %1792 = vmatprep.subr.mxu0 0.0
        %1793 = vmatpush1.msra.mxu0 0.0
        %1794 = vmatprep.subr.mxu0 0.0
        %1795 = vmatpush1.msra.mxu0 0.0
        %1796 = vmatprep.subr.mxu0 0.0
        %1797 = vmatpush1.msra.mxu0 0.0
        %1798 = vmatprep.subr.mxu0 0.0
        %1799 = vmatpush1.msra.mxu0 0.0
        %1800 = vmatprep.subr.mxu0 0.0
        %1801 = vmatpush1.msra.mxu0 0.0
        %1802 = vmatprep.subr.mxu0 0.0
        %1803 = vmatpush1.msra.mxu0 0.0
        %1804 = vmatprep.subr.mxu0 0.0
        %1805 = vmatpush1.msra.mxu0 0.0
        %1806 = vmatprep.subr.mxu0 0.0
        %1807 = vmatpush1.msra.mxu0 0.0
        %1808 = vmatprep.subr.mxu0 0.0
        %1809 = vmatpush1.msra.mxu0 0.0
        %1810 = vmatprep.subr.mxu0 0.0
        %1811 = vmatpush1.msra.mxu0 0.0
        %1812 = vmatprep.subr.mxu0 0.0
        %1813 = vmatpush1.msra.mxu0 0.0
        %1814 = vmatprep.subr.mxu0 0.0
        %1815 = vmatpush1.msra.mxu0 0.0
        %1816 = vmatprep.subr.mxu0 0.0
        %1817 = vmatpush1.msra.mxu0 0.0
        %1818 = vmatprep.subr.mxu0 0.0
        %1819 = vmatpush1.msra.mxu0 0.0
        %1820 = vmatprep.subr.mxu0 0.0
        %1821 = vmatpush1.msra.mxu0 0.0
        %1822 = vmatprep.subr.mxu0 0.0
        %1823 = vmatpush1.msra.mxu0 0.0
        %1824 = vmatprep.subr.mxu0 0.0
        %1825 = vmatpush1.msra.mxu0 0.0
        %1826 = vmatprep.subr.mxu0 0.0
        %1827 = vmatpush1.msra.mxu0 0.0
        %1828 = vmatprep.subr.mxu0 0.0
        %1829 = vmatpush1.msra.mxu0 0.0
        %1830 = vmatprep.subr.mxu0 0.0
        %1831 = vmatpush1.msra.mxu0 0.0
        %1832 = vmatprep.subr.mxu0 0.0
        %1833 = vmatpush1.msra.mxu0 0.0
        %1834 = vmatprep.subr.mxu0 0.0
        %1835 = vmatpush1.msra.mxu0 0.0
        %1836 = vmatprep.subr.mxu0 0.0
        %1837 = vmatpush1.msra.mxu0 0.0
        %1838 = vmatprep.subr.mxu0 0.0
        %1839 = vmatpush1.msra.mxu0 0.0
        %1840 = vmatprep.subr.mxu0 0.0
        %1841 = vmatpush1.msra.mxu0 0.0
        %1842 = vmatprep.subr.mxu0 0.0
        %1843 = vmatpush1.msra.mxu0 0.0
        %1844 = vmatprep.subr.mxu0 0.0
        %1845 = vmatpush1.msra.mxu0 0.0
        %1846 = vmatprep.subr.mxu0 0.0
        %1847 = vmatpush1.msra.mxu0 0.0
        %1848 = vmatprep.mubr.f32.mxu0 0.0
        %1849 = vmatmul.mubr.f32.gmra.mrb[0].mxu0 %v1480
        %v1850 = vpop.f32.mrb[0].mxu0
        %v1851 = vadd.f32 0.0, %v1850
        %v1852 = vpop.f32.mrb[0].mxu0
        %1853 = vdwg.mxu0
        %v1854 = vadd.f32 %v1423, %v1567
        %v1855 = vadd.f32 %v1424, %v1569
        %v1856 = vadd.f32 %v1425, %v1638
        %v1857 = vadd.f32 %v1426, %v1640
        %v1858 = vadd.f32 %v1427, %v1709
        %v1859 = vadd.f32 %v1428, %v1711
        %v1860 = vadd.f32 %v1429, %v1780
        %v1861 = vadd.f32 %v1430, %v1782
        %v1862 = vadd.f32 %v1431, %v1851
        %v1863 = vld [vmem:[%s164] sm:$0xff]
        %v1864 = vld [vmem:[%s164 + $0x8] sm:$0xff]
        %v1865 = vld [vmem:[%s164 + $0x10] sm:$0xff]
        %v1866 = vld [vmem:[%s164 + $0x18] sm:$0xff]
        %v1867 = vld [vmem:[%s164 + $0x20] sm:$0xff]
        %s1868 = scalar_lea.vmem %s1, 16
        %v1869 = vld [vmem:[%s1868] sm:$0xf]
        %v1875 = vcombine.high %v1863, %v1863
        %v1876 = vcombine.high %v1864, %v1864
        %v1877 = vcombine.high %v1865, %v1865
        %v1878 = vcombine.high %v1866, %v1866
        %v1879 = vcombine.high %v1867, %v1867
        %1880 = vrot.lane.b32.xlu0 %v1863, 93
        %v1881 = vpop.permute.xlu0 %1880
        %1882 = vrot.lane.b32.xlu0 %v1875, 93
        %v1883 = vpop.permute.xlu0 %1882
        %1884 = vrot.lane.b32.xlu0 %v1864, 93
        %v1885 = vpop.permute.xlu0 %1884
        %1886 = vrot.lane.b32.xlu0 %v1876, 93
        %v1887 = vpop.permute.xlu0 %1886
        %1888 = vrot.lane.b32.xlu0 %v1865, 93
        %v1889 = vpop.permute.xlu0 %1888
        %1890 = vrot.lane.b32.xlu0 %v1877, 93
        %v1891 = vpop.permute.xlu0 %1890
        %1892 = vrot.lane.b32.xlu0 %v1866, 93
        %v1893 = vpop.permute.xlu0 %1892
        %1894 = vrot.lane.b32.xlu0 %v1878, 93
        %v1895 = vpop.permute.xlu0 %1894
        %1896 = vrot.lane.b32.xlu0 %v1867, 93
        %v1897 = vpop.permute.xlu0 %1896
        %1898 = vrot.lane.b32.xlu0 %v1879, 93
        %v1899 = vpop.permute.xlu0 %1898
        %vm1900 = vcmask 760832
        %v1901 = vsel %vm1900, %v1881, %v1883
        %v1902 = vsel %vm1900, %v1883, %v1885
        %v1903 = vsel %vm1900, %v1885, %v1887
        %v1904 = vsel %vm1900, %v1887, %v1889
        %v1905 = vsel %vm1900, %v1889, %v1891
        %v1906 = vsel %vm1900, %v1891, %v1893
        %v1907 = vsel %vm1900, %v1893, %v1895
        %v1908 = vsel %vm1900, %v1895, %v1897
        %v1909 = vsel %vm1900, %v1897, %v1899
        %v1911 = vsel %vm240, %v1869, 0
        %v1913 = vsel %vm244, %v1901, 0
        %v1915 = vsel %vm244, %v1902, 0
        %v1917 = vsel %vm244, %v1903, 0
        %v1919 = vsel %vm244, %v1904, 0
        %v1921 = vsel %vm244, %v1905, 0
        %v1923 = vsel %vm244, %v1906, 0
        %v1925 = vsel %vm244, %v1907, 0
        %v1927 = vsel %vm244, %v1908, 0
        %v1929 = vsel %vm244, %v1909, 0
        %1931 = vmatprep.subr.mxu0 %v1915
        %1932 = vmatpush1.msra.mxu0 %v1913
        %1933 = vmatprep.subr.mxu0 0.0
        %1934 = vmatpush1.msra.mxu0 0.0
        %1935 = vmatprep.subr.mxu0 0.0
        %1936 = vmatpush1.msra.mxu0 0.0
        %1937 = vmatprep.subr.mxu0 0.0
        %1938 = vmatpush1.msra.mxu0 0.0
        %1939 = vmatprep.subr.mxu0 0.0
        %1940 = vmatpush1.msra.mxu0 0.0
        %1941 = vmatprep.subr.mxu0 0.0
        %1942 = vmatpush1.msra.mxu0 0.0
        %1943 = vmatprep.subr.mxu0 0.0
        %1944 = vmatpush1.msra.mxu0 0.0
        %1945 = vmatprep.subr.mxu0 0.0
        %1946 = vmatpush1.msra.mxu0 0.0
        %1947 = vmatprep.subr.mxu0 0.0
        %1948 = vmatpush1.msra.mxu0 0.0
        %1949 = vmatprep.subr.mxu0 0.0
        %1950 = vmatpush1.msra.mxu0 0.0
        %1951 = vmatprep.subr.mxu0 0.0
        %1952 = vmatpush1.msra.mxu0 0.0
        %1953 = vmatprep.subr.mxu0 0.0
        %1954 = vmatpush1.msra.mxu0 0.0
        %1955 = vmatprep.subr.mxu0 0.0
        %1956 = vmatpush1.msra.mxu0 0.0
        %1957 = vmatprep.subr.mxu0 0.0
        %1958 = vmatpush1.msra.mxu0 0.0
        %1959 = vmatprep.subr.mxu0 0.0
        %1960 = vmatpush1.msra.mxu0 0.0
        %1961 = vmatprep.subr.mxu0 0.0
        %1962 = vmatpush1.msra.mxu0 0.0
        %1963 = vmatprep.subr.mxu0 0.0
        %1964 = vmatpush1.msra.mxu0 0.0
        %1965 = vmatprep.subr.mxu0 0.0
        %1966 = vmatpush1.msra.mxu0 0.0
        %1967 = vmatprep.subr.mxu0 0.0
        %1968 = vmatpush1.msra.mxu0 0.0
        %1969 = vmatprep.subr.mxu0 0.0
        %1970 = vmatpush1.msra.mxu0 0.0
        %1971 = vmatprep.subr.mxu0 0.0
        %1972 = vmatpush1.msra.mxu0 0.0
        %1973 = vmatprep.subr.mxu0 0.0
        %1974 = vmatpush1.msra.mxu0 0.0
        %1975 = vmatprep.subr.mxu0 0.0
        %1976 = vmatpush1.msra.mxu0 0.0
        %1977 = vmatprep.subr.mxu0 0.0
        %1978 = vmatpush1.msra.mxu0 0.0
        %1979 = vmatprep.subr.mxu0 0.0
        %1980 = vmatpush1.msra.mxu0 0.0
        %1981 = vmatprep.subr.mxu0 0.0
        %1982 = vmatpush1.msra.mxu0 0.0
        %1983 = vmatprep.subr.mxu0 0.0
        %1984 = vmatpush1.msra.mxu0 0.0
        %1985 = vmatprep.subr.mxu0 0.0
        %1986 = vmatpush1.msra.mxu0 0.0
        %1987 = vmatprep.subr.mxu0 0.0
        %1988 = vmatpush1.msra.mxu0 0.0
        %1989 = vmatprep.subr.mxu0 0.0
        %1990 = vmatpush1.msra.mxu0 0.0
        %1991 = vmatprep.subr.mxu0 0.0
        %1992 = vmatpush1.msra.mxu0 0.0
        %1993 = vmatprep.subr.mxu0 0.0
        %1994 = vmatpush1.msra.mxu0 0.0
        %1995 = vmatprep.mubr.f32.mxu0 0.0
        %1996 = vmatmul.mubr.f32.gmra.mrb[0].mxu0 %v1911
        %v1997 = vpop.f32.mrb[0].mxu0
        %v1998 = vadd.f32 0.0, %v1997
        %v1999 = vpop.f32.mrb[0].mxu0
        %v2000 = vadd.f32 0.0, %v1999
        %2001 = vdwg.mxu0
        %2002 = vmatprep.subr.mxu0 %v1919
        %2003 = vmatpush1.msra.mxu0 %v1917
        %2004 = vmatprep.subr.mxu0 0.0
        %2005 = vmatpush1.msra.mxu0 0.0
        %2006 = vmatprep.subr.mxu0 0.0
        %2007 = vmatpush1.msra.mxu0 0.0
        %2008 = vmatprep.subr.mxu0 0.0
        %2009 = vmatpush1.msra.mxu0 0.0
        %2010 = vmatprep.subr.mxu0 0.0
        %2011 = vmatpush1.msra.mxu0 0.0
        %2012 = vmatprep.subr.mxu0 0.0
        %2013 = vmatpush1.msra.mxu0 0.0
        %2014 = vmatprep.subr.mxu0 0.0
        %2015 = vmatpush1.msra.mxu0 0.0
        %2016 = vmatprep.subr.mxu0 0.0
        %2017 = vmatpush1.msra.mxu0 0.0
        %2018 = vmatprep.subr.mxu0 0.0
        %2019 = vmatpush1.msra.mxu0 0.0
        %2020 = vmatprep.subr.mxu0 0.0
        %2021 = vmatpush1.msra.mxu0 0.0
        %2022 = vmatprep.subr.mxu0 0.0
        %2023 = vmatpush1.msra.mxu0 0.0
        %2024 = vmatprep.subr.mxu0 0.0
        %2025 = vmatpush1.msra.mxu0 0.0
        %2026 = vmatprep.subr.mxu0 0.0
        %2027 = vmatpush1.msra.mxu0 0.0
        %2028 = vmatprep.subr.mxu0 0.0
        %2029 = vmatpush1.msra.mxu0 0.0
        %2030 = vmatprep.subr.mxu0 0.0
        %2031 = vmatpush1.msra.mxu0 0.0
        %2032 = vmatprep.subr.mxu0 0.0
        %2033 = vmatpush1.msra.mxu0 0.0
        %2034 = vmatprep.subr.mxu0 0.0
        %2035 = vmatpush1.msra.mxu0 0.0
        %2036 = vmatprep.subr.mxu0 0.0
        %2037 = vmatpush1.msra.mxu0 0.0
        %2038 = vmatprep.subr.mxu0 0.0
        %2039 = vmatpush1.msra.mxu0 0.0
        %2040 = vmatprep.subr.mxu0 0.0
        %2041 = vmatpush1.msra.mxu0 0.0
        %2042 = vmatprep.subr.mxu0 0.0
        %2043 = vmatpush1.msra.mxu0 0.0
        %2044 = vmatprep.subr.mxu0 0.0
        %2045 = vmatpush1.msra.mxu0 0.0
        %2046 = vmatprep.subr.mxu0 0.0
        %2047 = vmatpush1.msra.mxu0 0.0
        %2048 = vmatprep.subr.mxu0 0.0
        %2049 = vmatpush1.msra.mxu0 0.0
        %2050 = vmatprep.subr.mxu0 0.0
        %2051 = vmatpush1.msra.mxu0 0.0
        %2052 = vmatprep.subr.mxu0 0.0
        %2053 = vmatpush1.msra.mxu0 0.0
        %2054 = vmatprep.subr.mxu0 0.0
        %2055 = vmatpush1.msra.mxu0 0.0
        %2056 = vmatprep.subr.mxu0 0.0
        %2057 = vmatpush1.msra.mxu0 0.0
        %2058 = vmatprep.subr.mxu0 0.0
        %2059 = vmatpush1.msra.mxu0 0.0
        %2060 = vmatprep.subr.mxu0 0.0
        %2061 = vmatpush1.msra.mxu0 0.0
        %2062 = vmatprep.subr.mxu0 0.0
        %2063 = vmatpush1.msra.mxu0 0.0
        %2064 = vmatprep.subr.mxu0 0.0
        %2065 = vmatpush1.msra.mxu0 0.0
        %2066 = vmatprep.mubr.f32.mxu0 0.0
        %2067 = vmatmul.mubr.f32.gmra.mrb[0].mxu0 %v1911
        %v2068 = vpop.f32.mrb[0].mxu0
        %v2069 = vadd.f32 0.0, %v2068
        %v2070 = vpop.f32.mrb[0].mxu0
        %v2071 = vadd.f32 0.0, %v2070
        %2072 = vdwg.mxu0
        %2073 = vmatprep.subr.mxu0 %v1923
        %2074 = vmatpush1.msra.mxu0 %v1921
        %2075 = vmatprep.subr.mxu0 0.0
        %2076 = vmatpush1.msra.mxu0 0.0
        %2077 = vmatprep.subr.mxu0 0.0
        %2078 = vmatpush1.msra.mxu0 0.0
        %2079 = vmatprep.subr.mxu0 0.0
        %2080 = vmatpush1.msra.mxu0 0.0
        %2081 = vmatprep.subr.mxu0 0.0
        %2082 = vmatpush1.msra.mxu0 0.0
        %2083 = vmatprep.subr.mxu0 0.0
        %2084 = vmatpush1.msra.mxu0 0.0
        %2085 = vmatprep.subr.mxu0 0.0
        %2086 = vmatpush1.msra.mxu0 0.0
        %2087 = vmatprep.subr.mxu0 0.0
        %2088 = vmatpush1.msra.mxu0 0.0
        %2089 = vmatprep.subr.mxu0 0.0
        %2090 = vmatpush1.msra.mxu0 0.0
        %2091 = vmatprep.subr.mxu0 0.0
        %2092 = vmatpush1.msra.mxu0 0.0
        %2093 = vmatprep.subr.mxu0 0.0
        %2094 = vmatpush1.msra.mxu0 0.0
        %2095 = vmatprep.subr.mxu0 0.0
        %2096 = vmatpush1.msra.mxu0 0.0
        %2097 = vmatprep.subr.mxu0 0.0
        %2098 = vmatpush1.msra.mxu0 0.0
        %2099 = vmatprep.subr.mxu0 0.0
        %2100 = vmatpush1.msra.mxu0 0.0
        %2101 = vmatprep.subr.mxu0 0.0
        %2102 = vmatpush1.msra.mxu0 0.0
        %2103 = vmatprep.subr.mxu0 0.0
        %2104 = vmatpush1.msra.mxu0 0.0
        %2105 = vmatprep.subr.mxu0 0.0
        %2106 = vmatpush1.msra.mxu0 0.0
        %2107 = vmatprep.subr.mxu0 0.0
        %2108 = vmatpush1.msra.mxu0 0.0
        %2109 = vmatprep.subr.mxu0 0.0
        %2110 = vmatpush1.msra.mxu0 0.0
        %2111 = vmatprep.subr.mxu0 0.0
        %2112 = vmatpush1.msra.mxu0 0.0
        %2113 = vmatprep.subr.mxu0 0.0
        %2114 = vmatpush1.msra.mxu0 0.0
        %2115 = vmatprep.subr.mxu0 0.0
        %2116 = vmatpush1.msra.mxu0 0.0
        %2117 = vmatprep.subr.mxu0 0.0
        %2118 = vmatpush1.msra.mxu0 0.0
        %2119 = vmatprep.subr.mxu0 0.0
        %2120 = vmatpush1.msra.mxu0 0.0
        %2121 = vmatprep.subr.mxu0 0.0
        %2122 = vmatpush1.msra.mxu0 0.0
        %2123 = vmatprep.subr.mxu0 0.0
        %2124 = vmatpush1.msra.mxu0 0.0
        %2125 = vmatprep.subr.mxu0 0.0
        %2126 = vmatpush1.msra.mxu0 0.0
        %2127 = vmatprep.subr.mxu0 0.0
        %2128 = vmatpush1.msra.mxu0 0.0
        %2129 = vmatprep.subr.mxu0 0.0
        %2130 = vmatpush1.msra.mxu0 0.0
        %2131 = vmatprep.subr.mxu0 0.0
        %2132 = vmatpush1.msra.mxu0 0.0
        %2133 = vmatprep.subr.mxu0 0.0
        %2134 = vmatpush1.msra.mxu0 0.0
        %2135 = vmatprep.subr.mxu0 0.0
        %2136 = vmatpush1.msra.mxu0 0.0
        %2137 = vmatprep.mubr.f32.mxu0 0.0
        %2138 = vmatmul.mubr.f32.gmra.mrb[0].mxu0 %v1911
        %v2139 = vpop.f32.mrb[0].mxu0
        %v2140 = vadd.f32 0.0, %v2139
        %v2141 = vpop.f32.mrb[0].mxu0
        %v2142 = vadd.f32 0.0, %v2141
        %2143 = vdwg.mxu0
        %2144 = vmatprep.subr.mxu0 %v1927
        %2145 = vmatpush1.msra.mxu0 %v1925
        %2146 = vmatprep.subr.mxu0 0.0
        %2147 = vmatpush1.msra.mxu0 0.0
        %2148 = vmatprep.subr.mxu0 0.0
        %2149 = vmatpush1.msra.mxu0 0.0
        %2150 = vmatprep.subr.mxu0 0.0
        %2151 = vmatpush1.msra.mxu0 0.0
        %2152 = vmatprep.subr.mxu0 0.0
        %2153 = vmatpush1.msra.mxu0 0.0
        %2154 = vmatprep.subr.mxu0 0.0
        %2155 = vmatpush1.msra.mxu0 0.0
        %2156 = vmatprep.subr.mxu0 0.0
        %2157 = vmatpush1.msra.mxu0 0.0
        %2158 = vmatprep.subr.mxu0 0.0
        %2159 = vmatpush1.msra.mxu0 0.0
        %2160 = vmatprep.subr.mxu0 0.0
        %2161 = vmatpush1.msra.mxu0 0.0
        %2162 = vmatprep.subr.mxu0 0.0
        %2163 = vmatpush1.msra.mxu0 0.0
        %2164 = vmatprep.subr.mxu0 0.0
        %2165 = vmatpush1.msra.mxu0 0.0
        %2166 = vmatprep.subr.mxu0 0.0
        %2167 = vmatpush1.msra.mxu0 0.0
        %2168 = vmatprep.subr.mxu0 0.0
        %2169 = vmatpush1.msra.mxu0 0.0
        %2170 = vmatprep.subr.mxu0 0.0
        %2171 = vmatpush1.msra.mxu0 0.0
        %2172 = vmatprep.subr.mxu0 0.0
        %2173 = vmatpush1.msra.mxu0 0.0
        %2174 = vmatprep.subr.mxu0 0.0
        %2175 = vmatpush1.msra.mxu0 0.0
        %2176 = vmatprep.subr.mxu0 0.0
        %2177 = vmatpush1.msra.mxu0 0.0
        %2178 = vmatprep.subr.mxu0 0.0
        %2179 = vmatpush1.msra.mxu0 0.0
        %2180 = vmatprep.subr.mxu0 0.0
        %2181 = vmatpush1.msra.mxu0 0.0
        %2182 = vmatprep.subr.mxu0 0.0
        %2183 = vmatpush1.msra.mxu0 0.0
        %2184 = vmatprep.subr.mxu0 0.0
        %2185 = vmatpush1.msra.mxu0 0.0
        %2186 = vmatprep.subr.mxu0 0.0
        %2187 = vmatpush1.msra.mxu0 0.0
        %2188 = vmatprep.subr.mxu0 0.0
        %2189 = vmatpush1.msra.mxu0 0.0
        %2190 = vmatprep.subr.mxu0 0.0
        %2191 = vmatpush1.msra.mxu0 0.0
        %2192 = vmatprep.subr.mxu0 0.0
        %2193 = vmatpush1.msra.mxu0 0.0
        %2194 = vmatprep.subr.mxu0 0.0
        %2195 = vmatpush1.msra.mxu0 0.0
        %2196 = vmatprep.subr.mxu0 0.0
        %2197 = vmatpush1.msra.mxu0 0.0
        %2198 = vmatprep.subr.mxu0 0.0
        %2199 = vmatpush1.msra.mxu0 0.0
        %2200 = vmatprep.subr.mxu0 0.0
        %2201 = vmatpush1.msra.mxu0 0.0
        %2202 = vmatprep.subr.mxu0 0.0
        %2203 = vmatpush1.msra.mxu0 0.0
        %2204 = vmatprep.subr.mxu0 0.0
        %2205 = vmatpush1.msra.mxu0 0.0
        %2206 = vmatprep.subr.mxu0 0.0
        %2207 = vmatpush1.msra.mxu0 0.0
        %2208 = vmatprep.mubr.f32.mxu0 0.0
        %2209 = vmatmul.mubr.f32.gmra.mrb[0].mxu0 %v1911
        %v2210 = vpop.f32.mrb[0].mxu0
        %v2211 = vadd.f32 0.0, %v2210
        %v2212 = vpop.f32.mrb[0].mxu0
        %v2213 = vadd.f32 0.0, %v2212
        %2214 = vdwg.mxu0
        %2215 = vmatprep.subr.mxu0 0.0
        %2216 = vmatpush1.msra.mxu0 %v1929
        %2217 = vmatprep.subr.mxu0 0.0
        %2218 = vmatpush1.msra.mxu0 0.0
        %2219 = vmatprep.subr.mxu0 0.0
        %2220 = vmatpush1.msra.mxu0 0.0
        %2221 = vmatprep.subr.mxu0 0.0
        %2222 = vmatpush1.msra.mxu0 0.0
        %2223 = vmatprep.subr.mxu0 0.0
        %2224 = vmatpush1.msra.mxu0 0.0
        %2225 = vmatprep.subr.mxu0 0.0
        %2226 = vmatpush1.msra.mxu0 0.0
        %2227 = vmatprep.subr.mxu0 0.0
        %2228 = vmatpush1.msra.mxu0 0.0
        %2229 = vmatprep.subr.mxu0 0.0
        %2230 = vmatpush1.msra.mxu0 0.0
        %2231 = vmatprep.subr.mxu0 0.0
        %2232 = vmatpush1.msra.mxu0 0.0
        %2233 = vmatprep.subr.mxu0 0.0
        %2234 = vmatpush1.msra.mxu0 0.0
        %2235 = vmatprep.subr.mxu0 0.0
        %2236 = vmatpush1.msra.mxu0 0.0
        %2237 = vmatprep.subr.mxu0 0.0
        %2238 = vmatpush1.msra.mxu0 0.0
        %2239 = vmatprep.subr.mxu0 0.0
        %2240 = vmatpush1.msra.mxu0 0.0
        %2241 = vmatprep.subr.mxu0 0.0
        %2242 = vmatpush1.msra.mxu0 0.0
        %2243 = vmatprep.subr.mxu0 0.0
        %2244 = vmatpush1.msra.mxu0 0.0
        %2245 = vmatprep.subr.mxu0 0.0
        %2246 = vmatpush1.msra.mxu0 0.0
        %2247 = vmatprep.subr.mxu0 0.0
        %2248 = vmatpush1.msra.mxu0 0.0
        %2249 = vmatprep.subr.mxu0 0.0
        %2250 = vmatpush1.msra.mxu0 0.0
        %2251 = vmatprep.subr.mxu0 0.0
        %2252 = vmatpush1.msra.mxu0 0.0
        %2253 = vmatprep.subr.mxu0 0.0
        %2254 = vmatpush1.msra.mxu0 0.0
        %2255 = vmatprep.subr.mxu0 0.0
        %2256 = vmatpush1.msra.mxu0 0.0
        %2257 = vmatprep.subr.mxu0 0.0
        %2258 = vmatpush1.msra.mxu0 0.0
        %2259 = vmatprep.subr.mxu0 0.0
        %2260 = vmatpush1.msra.mxu0 0.0
        %2261 = vmatprep.subr.mxu0 0.0
        %2262 = vmatpush1.msra.mxu0 0.0
        %2263 = vmatprep.subr.mxu0 0.0
        %2264 = vmatpush1.msra.mxu0 0.0
        %2265 = vmatprep.subr.mxu0 0.0
        %2266 = vmatpush1.msra.mxu0 0.0
        %2267 = vmatprep.subr.mxu0 0.0
        %2268 = vmatpush1.msra.mxu0 0.0
        %2269 = vmatprep.subr.mxu0 0.0
        %2270 = vmatpush1.msra.mxu0 0.0
        %2271 = vmatprep.subr.mxu0 0.0
        %2272 = vmatpush1.msra.mxu0 0.0
        %2273 = vmatprep.subr.mxu0 0.0
        %2274 = vmatpush1.msra.mxu0 0.0
        %2275 = vmatprep.subr.mxu0 0.0
        %2276 = vmatpush1.msra.mxu0 0.0
        %2277 = vmatprep.subr.mxu0 0.0
        %2278 = vmatpush1.msra.mxu0 0.0
        %2279 = vmatprep.mubr.f32.mxu0 0.0
        %2280 = vmatmul.mubr.f32.gmra.mrb[0].mxu0 %v1911
        %v2281 = vpop.f32.mrb[0].mxu0
        %v2282 = vadd.f32 0.0, %v2281
        %v2283 = vpop.f32.mrb[0].mxu0
        %2284 = vdwg.mxu0
        %v2285 = vadd.f32 %v1854, %v1998
        %v2286 = vadd.f32 %v1855, %v2000
        %v2287 = vadd.f32 %v1856, %v2069
        %v2288 = vadd.f32 %v1857, %v2071
        %v2289 = vadd.f32 %v1858, %v2140
        %v2290 = vadd.f32 %v1859, %v2142
        %v2291 = vadd.f32 %v1860, %v2211
        %v2292 = vadd.f32 %v1861, %v2213
        %v2293 = vadd.f32 %v1862, %v2282
        %v2294 = vld [vmem:[%s164] sm:$0xff]
        %v2295 = vld [vmem:[%s164 + $0x8] sm:$0xff]
        %v2296 = vld [vmem:[%s164 + $0x10] sm:$0xff]
        %v2297 = vld [vmem:[%s164 + $0x18] sm:$0xff]
        %v2298 = vld [vmem:[%s164 + $0x20] sm:$0xff]
        %s2299 = scalar_lea.vmem %s1, 20
        %v2300 = vld [vmem:[%s2299] sm:$0xf]
        %v2306 = vcombine.high %v2294, %v2294
        %v2307 = vcombine.high %v2295, %v2295
        %v2308 = vcombine.high %v2296, %v2296
        %v2309 = vcombine.high %v2297, %v2297
        %v2310 = vcombine.high %v2298, %v2298
        %2311 = vrot.lane.b32.xlu0 %v2294, 92
        %v2312 = vpop.permute.xlu0 %2311
        %2313 = vrot.lane.b32.xlu0 %v2306, 92
        %v2314 = vpop.permute.xlu0 %2313
        %2315 = vrot.lane.b32.xlu0 %v2295, 92
        %v2316 = vpop.permute.xlu0 %2315
        %2317 = vrot.lane.b32.xlu0 %v2307, 92
        %v2318 = vpop.permute.xlu0 %2317
        %2319 = vrot.lane.b32.xlu0 %v2296, 92
        %v2320 = vpop.permute.xlu0 %2319
        %2321 = vrot.lane.b32.xlu0 %v2308, 92
        %v2322 = vpop.permute.xlu0 %2321
        %2323 = vrot.lane.b32.xlu0 %v2297, 92
        %v2324 = vpop.permute.xlu0 %2323
        %2325 = vrot.lane.b32.xlu0 %v2309, 92
        %v2326 = vpop.permute.xlu0 %2325
        %2327 = vrot.lane.b32.xlu0 %v2298, 92
        %v2328 = vpop.permute.xlu0 %2327
        %2329 = vrot.lane.b32.xlu0 %v2310, 92
        %v2330 = vpop.permute.xlu0 %2329
        %vm2331 = vcmask 752640
        %v2332 = vsel %vm2331, %v2312, %v2314
        %v2333 = vsel %vm2331, %v2314, %v2316
        %v2334 = vsel %vm2331, %v2316, %v2318
        %v2335 = vsel %vm2331, %v2318, %v2320
        %v2336 = vsel %vm2331, %v2320, %v2322
        %v2337 = vsel %vm2331, %v2322, %v2324
        %v2338 = vsel %vm2331, %v2324, %v2326
        %v2339 = vsel %vm2331, %v2326, %v2328
        %v2340 = vsel %vm2331, %v2328, %v2330
        %v2342 = vsel %vm240, %v2300, 0
        %v2344 = vsel %vm244, %v2332, 0
        %v2346 = vsel %vm244, %v2333, 0
        %v2348 = vsel %vm244, %v2334, 0
        %v2350 = vsel %vm244, %v2335, 0
        %v2352 = vsel %vm244, %v2336, 0
        %v2354 = vsel %vm244, %v2337, 0
        %v2356 = vsel %vm244, %v2338, 0
        %v2358 = vsel %vm244, %v2339, 0
        %v2360 = vsel %vm244, %v2340, 0
        %2362 = vmatprep.subr.mxu0 %v2346
        %2363 = vmatpush1.msra.mxu0 %v2344
        %2364 = vmatprep.subr.mxu0 0.0
        %2365 = vmatpush1.msra.mxu0 0.0
        %2366 = vmatprep.subr.mxu0 0.0
        %2367 = vmatpush1.msra.mxu0 0.0
        %2368 = vmatprep.subr.mxu0 0.0
        %2369 = vmatpush1.msra.mxu0 0.0
        %2370 = vmatprep.subr.mxu0 0.0
        %2371 = vmatpush1.msra.mxu0 0.0
        %2372 = vmatprep.subr.mxu0 0.0
        %2373 = vmatpush1.msra.mxu0 0.0
        %2374 = vmatprep.subr.mxu0 0.0
        %2375 = vmatpush1.msra.mxu0 0.0
        %2376 = vmatprep.subr.mxu0 0.0
        %2377 = vmatpush1.msra.mxu0 0.0
        %2378 = vmatprep.subr.mxu0 0.0
        %2379 = vmatpush1.msra.mxu0 0.0
        %2380 = vmatprep.subr.mxu0 0.0
        %2381 = vmatpush1.msra.mxu0 0.0
        %2382 = vmatprep.subr.mxu0 0.0
        %2383 = vmatpush1.msra.mxu0 0.0
        %2384 = vmatprep.subr.mxu0 0.0
        %2385 = vmatpush1.msra.mxu0 0.0
        %2386 = vmatprep.subr.mxu0 0.0
        %2387 = vmatpush1.msra.mxu0 0.0
        %2388 = vmatprep.subr.mxu0 0.0
        %2389 = vmatpush1.msra.mxu0 0.0
        %2390 = vmatprep.subr.mxu0 0.0
        %2391 = vmatpush1.msra.mxu0 0.0
        %2392 = vmatprep.subr.mxu0 0.0
        %2393 = vmatpush1.msra.mxu0 0.0
        %2394 = vmatprep.subr.mxu0 0.0
        %2395 = vmatpush1.msra.mxu0 0.0
        %2396 = vmatprep.subr.mxu0 0.0
        %2397 = vmatpush1.msra.mxu0 0.0
        %2398 = vmatprep.subr.mxu0 0.0
        %2399 = vmatpush1.msra.mxu0 0.0
        %2400 = vmatprep.subr.mxu0 0.0
        %2401 = vmatpush1.msra.mxu0 0.0
        %2402 = vmatprep.subr.mxu0 0.0
        %2403 = vmatpush1.msra.mxu0 0.0
        %2404 = vmatprep.subr.mxu0 0.0
        %2405 = vmatpush1.msra.mxu0 0.0
        %2406 = vmatprep.subr.mxu0 0.0
        %2407 = vmatpush1.msra.mxu0 0.0
        %2408 = vmatprep.subr.mxu0 0.0
        %2409 = vmatpush1.msra.mxu0 0.0
        %2410 = vmatprep.subr.mxu0 0.0
        %2411 = vmatpush1.msra.mxu0 0.0
        %2412 = vmatprep.subr.mxu0 0.0
        %2413 = vmatpush1.msra.mxu0 0.0
        %2414 = vmatprep.subr.mxu0 0.0
        %2415 = vmatpush1.msra.mxu0 0.0
        %2416 = vmatprep.subr.mxu0 0.0
        %2417 = vmatpush1.msra.mxu0 0.0
        %2418 = vmatprep.subr.mxu0 0.0
        %2419 = vmatpush1.msra.mxu0 0.0
        %2420 = vmatprep.subr.mxu0 0.0
        %2421 = vmatpush1.msra.mxu0 0.0
        %2422 = vmatprep.subr.mxu0 0.0
        %2423 = vmatpush1.msra.mxu0 0.0
        %2424 = vmatprep.subr.mxu0 0.0
        %2425 = vmatpush1.msra.mxu0 0.0
        %2426 = vmatprep.mubr.f32.mxu0 0.0
        %2427 = vmatmul.mubr.f32.gmra.mrb[0].mxu0 %v2342
        %v2428 = vpop.f32.mrb[0].mxu0
        %v2429 = vadd.f32 0.0, %v2428
        %v2430 = vpop.f32.mrb[0].mxu0
        %v2431 = vadd.f32 0.0, %v2430
        %2432 = vdwg.mxu0
        %2433 = vmatprep.subr.mxu0 %v2350
        %2434 = vmatpush1.msra.mxu0 %v2348
        %2435 = vmatprep.subr.mxu0 0.0
        %2436 = vmatpush1.msra.mxu0 0.0
        %2437 = vmatprep.subr.mxu0 0.0
        %2438 = vmatpush1.msra.mxu0 0.0
        %2439 = vmatprep.subr.mxu0 0.0
        %2440 = vmatpush1.msra.mxu0 0.0
        %2441 = vmatprep.subr.mxu0 0.0
        %2442 = vmatpush1.msra.mxu0 0.0
        %2443 = vmatprep.subr.mxu0 0.0
        %2444 = vmatpush1.msra.mxu0 0.0
        %2445 = vmatprep.subr.mxu0 0.0
        %2446 = vmatpush1.msra.mxu0 0.0
        %2447 = vmatprep.subr.mxu0 0.0
        %2448 = vmatpush1.msra.mxu0 0.0
        %2449 = vmatprep.subr.mxu0 0.0
        %2450 = vmatpush1.msra.mxu0 0.0
        %2451 = vmatprep.subr.mxu0 0.0
        %2452 = vmatpush1.msra.mxu0 0.0
        %2453 = vmatprep.subr.mxu0 0.0
        %2454 = vmatpush1.msra.mxu0 0.0
        %2455 = vmatprep.subr.mxu0 0.0
        %2456 = vmatpush1.msra.mxu0 0.0
        %2457 = vmatprep.subr.mxu0 0.0
        %2458 = vmatpush1.msra.mxu0 0.0
        %2459 = vmatprep.subr.mxu0 0.0
        %2460 = vmatpush1.msra.mxu0 0.0
        %2461 = vmatprep.subr.mxu0 0.0
        %2462 = vmatpush1.msra.mxu0 0.0
        %2463 = vmatprep.subr.mxu0 0.0
        %2464 = vmatpush1.msra.mxu0 0.0
        %2465 = vmatprep.subr.mxu0 0.0
        %2466 = vmatpush1.msra.mxu0 0.0
        %2467 = vmatprep.subr.mxu0 0.0
        %2468 = vmatpush1.msra.mxu0 0.0
        %2469 = vmatprep.subr.mxu0 0.0
        %2470 = vmatpush1.msra.mxu0 0.0
        %2471 = vmatprep.subr.mxu0 0.0
        %2472 = vmatpush1.msra.mxu0 0.0
        %2473 = vmatprep.subr.mxu0 0.0
        %2474 = vmatpush1.msra.mxu0 0.0
        %2475 = vmatprep.subr.mxu0 0.0
        %2476 = vmatpush1.msra.mxu0 0.0
        %2477 = vmatprep.subr.mxu0 0.0
        %2478 = vmatpush1.msra.mxu0 0.0
        %2479 = vmatprep.subr.mxu0 0.0
        %2480 = vmatpush1.msra.mxu0 0.0
        %2481 = vmatprep.subr.mxu0 0.0
        %2482 = vmatpush1.msra.mxu0 0.0
        %2483 = vmatprep.subr.mxu0 0.0
        %2484 = vmatpush1.msra.mxu0 0.0
        %2485 = vmatprep.subr.mxu0 0.0
        %2486 = vmatpush1.msra.mxu0 0.0
        %2487 = vmatprep.subr.mxu0 0.0
        %2488 = vmatpush1.msra.mxu0 0.0
        %2489 = vmatprep.subr.mxu0 0.0
        %2490 = vmatpush1.msra.mxu0 0.0
        %2491 = vmatprep.subr.mxu0 0.0
        %2492 = vmatpush1.msra.mxu0 0.0
        %2493 = vmatprep.subr.mxu0 0.0
        %2494 = vmatpush1.msra.mxu0 0.0
        %2495 = vmatprep.subr.mxu0 0.0
        %2496 = vmatpush1.msra.mxu0 0.0
        %2497 = vmatprep.mubr.f32.mxu0 0.0
        %2498 = vmatmul.mubr.f32.gmra.mrb[0].mxu0 %v2342
        %v2499 = vpop.f32.mrb[0].mxu0
        %v2500 = vadd.f32 0.0, %v2499
        %v2501 = vpop.f32.mrb[0].mxu0
        %v2502 = vadd.f32 0.0, %v2501
        %2503 = vdwg.mxu0
        %2504 = vmatprep.subr.mxu0 %v2354
        %2505 = vmatpush1.msra.mxu0 %v2352
        %2506 = vmatprep.subr.mxu0 0.0
        %2507 = vmatpush1.msra.mxu0 0.0
        %2508 = vmatprep.subr.mxu0 0.0
        %2509 = vmatpush1.msra.mxu0 0.0
        %2510 = vmatprep.subr.mxu0 0.0
        %2511 = vmatpush1.msra.mxu0 0.0
        %2512 = vmatprep.subr.mxu0 0.0
        %2513 = vmatpush1.msra.mxu0 0.0
        %2514 = vmatprep.subr.mxu0 0.0
        %2515 = vmatpush1.msra.mxu0 0.0
        %2516 = vmatprep.subr.mxu0 0.0
        %2517 = vmatpush1.msra.mxu0 0.0
        %2518 = vmatprep.subr.mxu0 0.0
        %2519 = vmatpush1.msra.mxu0 0.0
        %2520 = vmatprep.subr.mxu0 0.0
        %2521 = vmatpush1.msra.mxu0 0.0
        %2522 = vmatprep.subr.mxu0 0.0
        %2523 = vmatpush1.msra.mxu0 0.0
        %2524 = vmatprep.subr.mxu0 0.0
        %2525 = vmatpush1.msra.mxu0 0.0
        %2526 = vmatprep.subr.mxu0 0.0
        %2527 = vmatpush1.msra.mxu0 0.0
        %2528 = vmatprep.subr.mxu0 0.0
        %2529 = vmatpush1.msra.mxu0 0.0
        %2530 = vmatprep.subr.mxu0 0.0
        %2531 = vmatpush1.msra.mxu0 0.0
        %2532 = vmatprep.subr.mxu0 0.0
        %2533 = vmatpush1.msra.mxu0 0.0
        %2534 = vmatprep.subr.mxu0 0.0
        %2535 = vmatpush1.msra.mxu0 0.0
        %2536 = vmatprep.subr.mxu0 0.0
        %2537 = vmatpush1.msra.mxu0 0.0
        %2538 = vmatprep.subr.mxu0 0.0
        %2539 = vmatpush1.msra.mxu0 0.0
        %2540 = vmatprep.subr.mxu0 0.0
        %2541 = vmatpush1.msra.mxu0 0.0
        %2542 = vmatprep.subr.mxu0 0.0
        %2543 = vmatpush1.msra.mxu0 0.0
        %2544 = vmatprep.subr.mxu0 0.0
        %2545 = vmatpush1.msra.mxu0 0.0
        %2546 = vmatprep.subr.mxu0 0.0
        %2547 = vmatpush1.msra.mxu0 0.0
        %2548 = vmatprep.subr.mxu0 0.0
        %2549 = vmatpush1.msra.mxu0 0.0
        %2550 = vmatprep.subr.mxu0 0.0
        %2551 = vmatpush1.msra.mxu0 0.0
        %2552 = vmatprep.subr.mxu0 0.0
        %2553 = vmatpush1.msra.mxu0 0.0
        %2554 = vmatprep.subr.mxu0 0.0
        %2555 = vmatpush1.msra.mxu0 0.0
        %2556 = vmatprep.subr.mxu0 0.0
        %2557 = vmatpush1.msra.mxu0 0.0
        %2558 = vmatprep.subr.mxu0 0.0
        %2559 = vmatpush1.msra.mxu0 0.0
        %2560 = vmatprep.subr.mxu0 0.0
        %2561 = vmatpush1.msra.mxu0 0.0
        %2562 = vmatprep.subr.mxu0 0.0
        %2563 = vmatpush1.msra.mxu0 0.0
        %2564 = vmatprep.subr.mxu0 0.0
        %2565 = vmatpush1.msra.mxu0 0.0
        %2566 = vmatprep.subr.mxu0 0.0
        %2567 = vmatpush1.msra.mxu0 0.0
        %2568 = vmatprep.mubr.f32.mxu0 0.0
        %2569 = vmatmul.mubr.f32.gmra.mrb[0].mxu0 %v2342
        %v2570 = vpop.f32.mrb[0].mxu0
        %v2571 = vadd.f32 0.0, %v2570
        %v2572 = vpop.f32.mrb[0].mxu0
        %v2573 = vadd.f32 0.0, %v2572
        %2574 = vdwg.mxu0
        %2575 = vmatprep.subr.mxu0 %v2358
        %2576 = vmatpush1.msra.mxu0 %v2356
        %2577 = vmatprep.subr.mxu0 0.0
        %2578 = vmatpush1.msra.mxu0 0.0
        %2579 = vmatprep.subr.mxu0 0.0
        %2580 = vmatpush1.msra.mxu0 0.0
        %2581 = vmatprep.subr.mxu0 0.0
        %2582 = vmatpush1.msra.mxu0 0.0
        %2583 = vmatprep.subr.mxu0 0.0
        %2584 = vmatpush1.msra.mxu0 0.0
        %2585 = vmatprep.subr.mxu0 0.0
        %2586 = vmatpush1.msra.mxu0 0.0
        %2587 = vmatprep.subr.mxu0 0.0
        %2588 = vmatpush1.msra.mxu0 0.0
        %2589 = vmatprep.subr.mxu0 0.0
        %2590 = vmatpush1.msra.mxu0 0.0
        %2591 = vmatprep.subr.mxu0 0.0
        %2592 = vmatpush1.msra.mxu0 0.0
        %2593 = vmatprep.subr.mxu0 0.0
        %2594 = vmatpush1.msra.mxu0 0.0
        %2595 = vmatprep.subr.mxu0 0.0
        %2596 = vmatpush1.msra.mxu0 0.0
        %2597 = vmatprep.subr.mxu0 0.0
        %2598 = vmatpush1.msra.mxu0 0.0
        %2599 = vmatprep.subr.mxu0 0.0
        %2600 = vmatpush1.msra.mxu0 0.0
        %2601 = vmatprep.subr.mxu0 0.0
        %2602 = vmatpush1.msra.mxu0 0.0
        %2603 = vmatprep.subr.mxu0 0.0
        %2604 = vmatpush1.msra.mxu0 0.0
        %2605 = vmatprep.subr.mxu0 0.0
        %2606 = vmatpush1.msra.mxu0 0.0
        %2607 = vmatprep.subr.mxu0 0.0
        %2608 = vmatpush1.msra.mxu0 0.0
        %2609 = vmatprep.subr.mxu0 0.0
        %2610 = vmatpush1.msra.mxu0 0.0
        %2611 = vmatprep.subr.mxu0 0.0
        %2612 = vmatpush1.msra.mxu0 0.0
        %2613 = vmatprep.subr.mxu0 0.0
        %2614 = vmatpush1.msra.mxu0 0.0
        %2615 = vmatprep.subr.mxu0 0.0
        %2616 = vmatpush1.msra.mxu0 0.0
        %2617 = vmatprep.subr.mxu0 0.0
        %2618 = vmatpush1.msra.mxu0 0.0
        %2619 = vmatprep.subr.mxu0 0.0
        %2620 = vmatpush1.msra.mxu0 0.0
        %2621 = vmatprep.subr.mxu0 0.0
        %2622 = vmatpush1.msra.mxu0 0.0
        %2623 = vmatprep.subr.mxu0 0.0
        %2624 = vmatpush1.msra.mxu0 0.0
        %2625 = vmatprep.subr.mxu0 0.0
        %2626 = vmatpush1.msra.mxu0 0.0
        %2627 = vmatprep.subr.mxu0 0.0
        %2628 = vmatpush1.msra.mxu0 0.0
        %2629 = vmatprep.subr.mxu0 0.0
        %2630 = vmatpush1.msra.mxu0 0.0
        %2631 = vmatprep.subr.mxu0 0.0
        %2632 = vmatpush1.msra.mxu0 0.0
        %2633 = vmatprep.subr.mxu0 0.0
        %2634 = vmatpush1.msra.mxu0 0.0
        %2635 = vmatprep.subr.mxu0 0.0
        %2636 = vmatpush1.msra.mxu0 0.0
        %2637 = vmatprep.subr.mxu0 0.0
        %2638 = vmatpush1.msra.mxu0 0.0
        %2639 = vmatprep.mubr.f32.mxu0 0.0
        %2640 = vmatmul.mubr.f32.gmra.mrb[0].mxu0 %v2342
        %v2641 = vpop.f32.mrb[0].mxu0
        %v2642 = vadd.f32 0.0, %v2641
        %v2643 = vpop.f32.mrb[0].mxu0
        %v2644 = vadd.f32 0.0, %v2643
        %2645 = vdwg.mxu0
        %2646 = vmatprep.subr.mxu0 0.0
        %2647 = vmatpush1.msra.mxu0 %v2360
        %2648 = vmatprep.subr.mxu0 0.0
        %2649 = vmatpush1.msra.mxu0 0.0
        %2650 = vmatprep.subr.mxu0 0.0
        %2651 = vmatpush1.msra.mxu0 0.0
        %2652 = vmatprep.subr.mxu0 0.0
        %2653 = vmatpush1.msra.mxu0 0.0
        %2654 = vmatprep.subr.mxu0 0.0
        %2655 = vmatpush1.msra.mxu0 0.0
        %2656 = vmatprep.subr.mxu0 0.0
        %2657 = vmatpush1.msra.mxu0 0.0
        %2658 = vmatprep.subr.mxu0 0.0
        %2659 = vmatpush1.msra.mxu0 0.0
        %2660 = vmatprep.subr.mxu0 0.0
        %2661 = vmatpush1.msra.mxu0 0.0
        %2662 = vmatprep.subr.mxu0 0.0
        %2663 = vmatpush1.msra.mxu0 0.0
        %2664 = vmatprep.subr.mxu0 0.0
        %2665 = vmatpush1.msra.mxu0 0.0
        %2666 = vmatprep.subr.mxu0 0.0
        %2667 = vmatpush1.msra.mxu0 0.0
        %2668 = vmatprep.subr.mxu0 0.0
        %2669 = vmatpush1.msra.mxu0 0.0
        %2670 = vmatprep.subr.mxu0 0.0
        %2671 = vmatpush1.msra.mxu0 0.0
        %2672 = vmatprep.subr.mxu0 0.0
        %2673 = vmatpush1.msra.mxu0 0.0
        %2674 = vmatprep.subr.mxu0 0.0
        %2675 = vmatpush1.msra.mxu0 0.0
        %2676 = vmatprep.subr.mxu0 0.0
        %2677 = vmatpush1.msra.mxu0 0.0
        %2678 = vmatprep.subr.mxu0 0.0
        %2679 = vmatpush1.msra.mxu0 0.0
        %2680 = vmatprep.subr.mxu0 0.0
        %2681 = vmatpush1.msra.mxu0 0.0
        %2682 = vmatprep.subr.mxu0 0.0
        %2683 = vmatpush1.msra.mxu0 0.0
        %2684 = vmatprep.subr.mxu0 0.0
        %2685 = vmatpush1.msra.mxu0 0.0
        %2686 = vmatprep.subr.mxu0 0.0
        %2687 = vmatpush1.msra.mxu0 0.0
        %2688 = vmatprep.subr.mxu0 0.0
        %2689 = vmatpush1.msra.mxu0 0.0
        %2690 = vmatprep.subr.mxu0 0.0
        %2691 = vmatpush1.msra.mxu0 0.0
        %2692 = vmatprep.subr.mxu0 0.0
        %2693 = vmatpush1.msra.mxu0 0.0
        %2694 = vmatprep.subr.mxu0 0.0
        %2695 = vmatpush1.msra.mxu0 0.0
        %2696 = vmatprep.subr.mxu0 0.0
        %2697 = vmatpush1.msra.mxu0 0.0
        %2698 = vmatprep.subr.mxu0 0.0
        %2699 = vmatpush1.msra.mxu0 0.0
        %2700 = vmatprep.subr.mxu0 0.0
        %2701 = vmatpush1.msra.mxu0 0.0
        %2702 = vmatprep.subr.mxu0 0.0
        %2703 = vmatpush1.msra.mxu0 0.0
        %2704 = vmatprep.subr.mxu0 0.0
        %2705 = vmatpush1.msra.mxu0 0.0
        %2706 = vmatprep.subr.mxu0 0.0
        %2707 = vmatpush1.msra.mxu0 0.0
        %2708 = vmatprep.subr.mxu0 0.0
        %2709 = vmatpush1.msra.mxu0 0.0
        %2710 = vmatprep.mubr.f32.mxu0 0.0
        %2711 = vmatmul.mubr.f32.gmra.mrb[0].mxu0 %v2342
        %v2712 = vpop.f32.mrb[0].mxu0
        %v2713 = vadd.f32 0.0, %v2712
        %v2714 = vpop.f32.mrb[0].mxu0
        %2715 = vdwg.mxu0
        %v2716 = vadd.f32 %v2285, %v2429
        %v2717 = vadd.f32 %v2286, %v2431
        %v2718 = vadd.f32 %v2287, %v2500
        %v2719 = vadd.f32 %v2288, %v2502
        %v2720 = vadd.f32 %v2289, %v2571
        %v2721 = vadd.f32 %v2290, %v2573
        %v2722 = vadd.f32 %v2291, %v2642
        %v2723 = vadd.f32 %v2292, %v2644
        %v2724 = vadd.f32 %v2293, %v2713
        %v2725 = vld [vmem:[%s164] sm:$0xff]
        %v2726 = vld [vmem:[%s164 + $0x8] sm:$0xff]
        %v2727 = vld [vmem:[%s164 + $0x10] sm:$0xff]
        %v2728 = vld [vmem:[%s164 + $0x18] sm:$0xff]
        %v2729 = vld [vmem:[%s164 + $0x20] sm:$0xff]
        %s2730 = scalar_lea.vmem %s1, 24
        %v2731 = vld [vmem:[%s2730] sm:$0xf]
        %v2737 = vcombine.high %v2725, %v2725
        %v2738 = vcombine.high %v2726, %v2726
        %v2739 = vcombine.high %v2727, %v2727
        %v2740 = vcombine.high %v2728, %v2728
        %v2741 = vcombine.high %v2729, %v2729
        %2742 = vrot.lane.b32.xlu0 %v2725, 60
        %v2743 = vpop.permute.xlu0 %2742
        %2744 = vrot.lane.b32.xlu0 %v2737, 60
        %v2745 = vpop.permute.xlu0 %2744
        %2746 = vrot.lane.b32.xlu0 %v2726, 60
        %v2747 = vpop.permute.xlu0 %2746
        %2748 = vrot.lane.b32.xlu0 %v2738, 60
        %v2749 = vpop.permute.xlu0 %2748
        %2750 = vrot.lane.b32.xlu0 %v2727, 60
        %v2751 = vpop.permute.xlu0 %2750
        %2752 = vrot.lane.b32.xlu0 %v2739, 60
        %v2753 = vpop.permute.xlu0 %2752
        %2754 = vrot.lane.b32.xlu0 %v2728, 60
        %v2755 = vpop.permute.xlu0 %2754
        %2756 = vrot.lane.b32.xlu0 %v2740, 60
        %v2757 = vpop.permute.xlu0 %2756
        %2758 = vrot.lane.b32.xlu0 %v2729, 60
        %v2759 = vpop.permute.xlu0 %2758
        %2760 = vrot.lane.b32.xlu0 %v2741, 60
        %v2761 = vpop.permute.xlu0 %2760
        %vm2762 = vcmask 490496
        %v2763 = vsel %vm2762, %v2743, %v2745
        %v2764 = vsel %vm2762, %v2745, %v2747
        %v2765 = vsel %vm2762, %v2747, %v2749
        %v2766 = vsel %vm2762, %v2749, %v2751
        %v2767 = vsel %vm2762, %v2751, %v2753
        %v2768 = vsel %vm2762, %v2753, %v2755
        %v2769 = vsel %vm2762, %v2755, %v2757
        %v2770 = vsel %vm2762, %v2757, %v2759
        %v2771 = vsel %vm2762, %v2759, %v2761
        %v2773 = vsel %vm240, %v2731, 0
        %v2775 = vsel %vm244, %v2763, 0
        %v2777 = vsel %vm244, %v2764, 0
        %v2779 = vsel %vm244, %v2765, 0
        %v2781 = vsel %vm244, %v2766, 0
        %v2783 = vsel %vm244, %v2767, 0
        %v2785 = vsel %vm244, %v2768, 0
        %v2787 = vsel %vm244, %v2769, 0
        %v2789 = vsel %vm244, %v2770, 0
        %v2791 = vsel %vm244, %v2771, 0
        %2793 = vmatprep.subr.mxu0 %v2777
        %2794 = vmatpush1.msra.mxu0 %v2775
        %2795 = vmatprep.subr.mxu0 0.0
        %2796 = vmatpush1.msra.mxu0 0.0
        %2797 = vmatprep.subr.mxu0 0.0
        %2798 = vmatpush1.msra.mxu0 0.0
        %2799 = vmatprep.subr.mxu0 0.0
        %2800 = vmatpush1.msra.mxu0 0.0
        %2801 = vmatprep.subr.mxu0 0.0
        %2802 = vmatpush1.msra.mxu0 0.0
        %2803 = vmatprep.subr.mxu0 0.0
        %2804 = vmatpush1.msra.mxu0 0.0
        %2805 = vmatprep.subr.mxu0 0.0
        %2806 = vmatpush1.msra.mxu0 0.0
        %2807 = vmatprep.subr.mxu0 0.0
        %2808 = vmatpush1.msra.mxu0 0.0
        %2809 = vmatprep.subr.mxu0 0.0
        %2810 = vmatpush1.msra.mxu0 0.0
        %2811 = vmatprep.subr.mxu0 0.0
        %2812 = vmatpush1.msra.mxu0 0.0
        %2813 = vmatprep.subr.mxu0 0.0
        %2814 = vmatpush1.msra.mxu0 0.0
        %2815 = vmatprep.subr.mxu0 0.0
        %2816 = vmatpush1.msra.mxu0 0.0
        %2817 = vmatprep.subr.mxu0 0.0
        %2818 = vmatpush1.msra.mxu0 0.0
        %2819 = vmatprep.subr.mxu0 0.0
        %2820 = vmatpush1.msra.mxu0 0.0
        %2821 = vmatprep.subr.mxu0 0.0
        %2822 = vmatpush1.msra.mxu0 0.0
        %2823 = vmatprep.subr.mxu0 0.0
        %2824 = vmatpush1.msra.mxu0 0.0
        %2825 = vmatprep.subr.mxu0 0.0
        %2826 = vmatpush1.msra.mxu0 0.0
        %2827 = vmatprep.subr.mxu0 0.0
        %2828 = vmatpush1.msra.mxu0 0.0
        %2829 = vmatprep.subr.mxu0 0.0
        %2830 = vmatpush1.msra.mxu0 0.0
        %2831 = vmatprep.subr.mxu0 0.0
        %2832 = vmatpush1.msra.mxu0 0.0
        %2833 = vmatprep.subr.mxu0 0.0
        %2834 = vmatpush1.msra.mxu0 0.0
        %2835 = vmatprep.subr.mxu0 0.0
        %2836 = vmatpush1.msra.mxu0 0.0
        %2837 = vmatprep.subr.mxu0 0.0
        %2838 = vmatpush1.msra.mxu0 0.0
        %2839 = vmatprep.subr.mxu0 0.0
        %2840 = vmatpush1.msra.mxu0 0.0
        %2841 = vmatprep.subr.mxu0 0.0
        %2842 = vmatpush1.msra.mxu0 0.0
        %2843 = vmatprep.subr.mxu0 0.0
        %2844 = vmatpush1.msra.mxu0 0.0
        %2845 = vmatprep.subr.mxu0 0.0
        %2846 = vmatpush1.msra.mxu0 0.0
        %2847 = vmatprep.subr.mxu0 0.0
        %2848 = vmatpush1.msra.mxu0 0.0
        %2849 = vmatprep.subr.mxu0 0.0
        %2850 = vmatpush1.msra.mxu0 0.0
        %2851 = vmatprep.subr.mxu0 0.0
        %2852 = vmatpush1.msra.mxu0 0.0
        %2853 = vmatprep.subr.mxu0 0.0
        %2854 = vmatpush1.msra.mxu0 0.0
        %2855 = vmatprep.subr.mxu0 0.0
        %2856 = vmatpush1.msra.mxu0 0.0
        %2857 = vmatprep.mubr.f32.mxu0 0.0
        %2858 = vmatmul.mubr.f32.gmra.mrb[0].mxu0 %v2773
        %v2859 = vpop.f32.mrb[0].mxu0
        %v2860 = vadd.f32 0.0, %v2859
        %v2861 = vpop.f32.mrb[0].mxu0
        %v2862 = vadd.f32 0.0, %v2861
        %2863 = vdwg.mxu0
        %2864 = vmatprep.subr.mxu0 %v2781
        %2865 = vmatpush1.msra.mxu0 %v2779
        %2866 = vmatprep.subr.mxu0 0.0
        %2867 = vmatpush1.msra.mxu0 0.0
        %2868 = vmatprep.subr.mxu0 0.0
        %2869 = vmatpush1.msra.mxu0 0.0
        %2870 = vmatprep.subr.mxu0 0.0
        %2871 = vmatpush1.msra.mxu0 0.0
        %2872 = vmatprep.subr.mxu0 0.0
        %2873 = vmatpush1.msra.mxu0 0.0
        %2874 = vmatprep.subr.mxu0 0.0
        %2875 = vmatpush1.msra.mxu0 0.0
        %2876 = vmatprep.subr.mxu0 0.0
        %2877 = vmatpush1.msra.mxu0 0.0
        %2878 = vmatprep.subr.mxu0 0.0
        %2879 = vmatpush1.msra.mxu0 0.0
        %2880 = vmatprep.subr.mxu0 0.0
        %2881 = vmatpush1.msra.mxu0 0.0
        %2882 = vmatprep.subr.mxu0 0.0
        %2883 = vmatpush1.msra.mxu0 0.0
        %2884 = vmatprep.subr.mxu0 0.0
        %2885 = vmatpush1.msra.mxu0 0.0
        %2886 = vmatprep.subr.mxu0 0.0
        %2887 = vmatpush1.msra.mxu0 0.0
        %2888 = vmatprep.subr.mxu0 0.0
        %2889 = vmatpush1.msra.mxu0 0.0
        %2890 = vmatprep.subr.mxu0 0.0
        %2891 = vmatpush1.msra.mxu0 0.0
        %2892 = vmatprep.subr.mxu0 0.0
        %2893 = vmatpush1.msra.mxu0 0.0
        %2894 = vmatprep.subr.mxu0 0.0
        %2895 = vmatpush1.msra.mxu0 0.0
        %2896 = vmatprep.subr.mxu0 0.0
        %2897 = vmatpush1.msra.mxu0 0.0
        %2898 = vmatprep.subr.mxu0 0.0
        %2899 = vmatpush1.msra.mxu0 0.0
        %2900 = vmatprep.subr.mxu0 0.0
        %2901 = vmatpush1.msra.mxu0 0.0
        %2902 = vmatprep.subr.mxu0 0.0
        %2903 = vmatpush1.msra.mxu0 0.0
        %2904 = vmatprep.subr.mxu0 0.0
        %2905 = vmatpush1.msra.mxu0 0.0
        %2906 = vmatprep.subr.mxu0 0.0
        %2907 = vmatpush1.msra.mxu0 0.0
        %2908 = vmatprep.subr.mxu0 0.0
        %2909 = vmatpush1.msra.mxu0 0.0
        %2910 = vmatprep.subr.mxu0 0.0
        %2911 = vmatpush1.msra.mxu0 0.0
        %2912 = vmatprep.subr.mxu0 0.0
        %2913 = vmatpush1.msra.mxu0 0.0
        %2914 = vmatprep.subr.mxu0 0.0
        %2915 = vmatpush1.msra.mxu0 0.0
        %2916 = vmatprep.subr.mxu0 0.0
        %2917 = vmatpush1.msra.mxu0 0.0
        %2918 = vmatprep.subr.mxu0 0.0
        %2919 = vmatpush1.msra.mxu0 0.0
        %2920 = vmatprep.subr.mxu0 0.0
        %2921 = vmatpush1.msra.mxu0 0.0
        %2922 = vmatprep.subr.mxu0 0.0
        %2923 = vmatpush1.msra.mxu0 0.0
        %2924 = vmatprep.subr.mxu0 0.0
        %2925 = vmatpush1.msra.mxu0 0.0
        %2926 = vmatprep.subr.mxu0 0.0
        %2927 = vmatpush1.msra.mxu0 0.0
        %2928 = vmatprep.mubr.f32.mxu0 0.0
        %2929 = vmatmul.mubr.f32.gmra.mrb[0].mxu0 %v2773
        %v2930 = vpop.f32.mrb[0].mxu0
        %v2931 = vadd.f32 0.0, %v2930
        %v2932 = vpop.f32.mrb[0].mxu0
        %v2933 = vadd.f32 0.0, %v2932
        %2934 = vdwg.mxu0
        %2935 = vmatprep.subr.mxu0 %v2785
        %2936 = vmatpush1.msra.mxu0 %v2783
        %2937 = vmatprep.subr.mxu0 0.0
        %2938 = vmatpush1.msra.mxu0 0.0
        %2939 = vmatprep.subr.mxu0 0.0
        %2940 = vmatpush1.msra.mxu0 0.0
        %2941 = vmatprep.subr.mxu0 0.0
        %2942 = vmatpush1.msra.mxu0 0.0
        %2943 = vmatprep.subr.mxu0 0.0
        %2944 = vmatpush1.msra.mxu0 0.0
        %2945 = vmatprep.subr.mxu0 0.0
        %2946 = vmatpush1.msra.mxu0 0.0
        %2947 = vmatprep.subr.mxu0 0.0
        %2948 = vmatpush1.msra.mxu0 0.0
        %2949 = vmatprep.subr.mxu0 0.0
        %2950 = vmatpush1.msra.mxu0 0.0
        %2951 = vmatprep.subr.mxu0 0.0
        %2952 = vmatpush1.msra.mxu0 0.0
        %2953 = vmatprep.subr.mxu0 0.0
        %2954 = vmatpush1.msra.mxu0 0.0
        %2955 = vmatprep.subr.mxu0 0.0
        %2956 = vmatpush1.msra.mxu0 0.0
        %2957 = vmatprep.subr.mxu0 0.0
        %2958 = vmatpush1.msra.mxu0 0.0
        %2959 = vmatprep.subr.mxu0 0.0
        %2960 = vmatpush1.msra.mxu0 0.0
        %2961 = vmatprep.subr.mxu0 0.0
        %2962 = vmatpush1.msra.mxu0 0.0
        %2963 = vmatprep.subr.mxu0 0.0
        %2964 = vmatpush1.msra.mxu0 0.0
        %2965 = vmatprep.subr.mxu0 0.0
        %2966 = vmatpush1.msra.mxu0 0.0
        %2967 = vmatprep.subr.mxu0 0.0
        %2968 = vmatpush1.msra.mxu0 0.0
        %2969 = vmatprep.subr.mxu0 0.0
        %2970 = vmatpush1.msra.mxu0 0.0
        %2971 = vmatprep.subr.mxu0 0.0
        %2972 = vmatpush1.msra.mxu0 0.0
        %2973 = vmatprep.subr.mxu0 0.0
        %2974 = vmatpush1.msra.mxu0 0.0
        %2975 = vmatprep.subr.mxu0 0.0
        %2976 = vmatpush1.msra.mxu0 0.0
        %2977 = vmatprep.subr.mxu0 0.0
        %2978 = vmatpush1.msra.mxu0 0.0
        %2979 = vmatprep.subr.mxu0 0.0
        %2980 = vmatpush1.msra.mxu0 0.0
        %2981 = vmatprep.subr.mxu0 0.0
        %2982 = vmatpush1.msra.mxu0 0.0
        %2983 = vmatprep.subr.mxu0 0.0
        %2984 = vmatpush1.msra.mxu0 0.0
        %2985 = vmatprep.subr.mxu0 0.0
        %2986 = vmatpush1.msra.mxu0 0.0
        %2987 = vmatprep.subr.mxu0 0.0
        %2988 = vmatpush1.msra.mxu0 0.0
        %2989 = vmatprep.subr.mxu0 0.0
        %2990 = vmatpush1.msra.mxu0 0.0
        %2991 = vmatprep.subr.mxu0 0.0
        %2992 = vmatpush1.msra.mxu0 0.0
        %2993 = vmatprep.subr.mxu0 0.0
        %2994 = vmatpush1.msra.mxu0 0.0
        %2995 = vmatprep.subr.mxu0 0.0
        %2996 = vmatpush1.msra.mxu0 0.0
        %2997 = vmatprep.subr.mxu0 0.0
        %2998 = vmatpush1.msra.mxu0 0.0
        %2999 = vmatprep.mubr.f32.mxu0 0.0
        %3000 = vmatmul.mubr.f32.gmra.mrb[0].mxu0 %v2773
        %v3001 = vpop.f32.mrb[0].mxu0
        %v3002 = vadd.f32 0.0, %v3001
        %v3003 = vpop.f32.mrb[0].mxu0
        %v3004 = vadd.f32 0.0, %v3003
        %3005 = vdwg.mxu0
        %3006 = vmatprep.subr.mxu0 %v2789
        %3007 = vmatpush1.msra.mxu0 %v2787
        %3008 = vmatprep.subr.mxu0 0.0
        %3009 = vmatpush1.msra.mxu0 0.0
        %3010 = vmatprep.subr.mxu0 0.0
        %3011 = vmatpush1.msra.mxu0 0.0
        %3012 = vmatprep.subr.mxu0 0.0
        %3013 = vmatpush1.msra.mxu0 0.0
        %3014 = vmatprep.subr.mxu0 0.0
        %3015 = vmatpush1.msra.mxu0 0.0
        %3016 = vmatprep.subr.mxu0 0.0
        %3017 = vmatpush1.msra.mxu0 0.0
        %3018 = vmatprep.subr.mxu0 0.0
        %3019 = vmatpush1.msra.mxu0 0.0
        %3020 = vmatprep.subr.mxu0 0.0
        %3021 = vmatpush1.msra.mxu0 0.0
        %3022 = vmatprep.subr.mxu0 0.0
        %3023 = vmatpush1.msra.mxu0 0.0
        %3024 = vmatprep.subr.mxu0 0.0
        %3025 = vmatpush1.msra.mxu0 0.0
        %3026 = vmatprep.subr.mxu0 0.0
        %3027 = vmatpush1.msra.mxu0 0.0
        %3028 = vmatprep.subr.mxu0 0.0
        %3029 = vmatpush1.msra.mxu0 0.0
        %3030 = vmatprep.subr.mxu0 0.0
        %3031 = vmatpush1.msra.mxu0 0.0
        %3032 = vmatprep.subr.mxu0 0.0
        %3033 = vmatpush1.msra.mxu0 0.0
        %3034 = vmatprep.subr.mxu0 0.0
        %3035 = vmatpush1.msra.mxu0 0.0
        %3036 = vmatprep.subr.mxu0 0.0
        %3037 = vmatpush1.msra.mxu0 0.0
        %3038 = vmatprep.subr.mxu0 0.0
        %3039 = vmatpush1.msra.mxu0 0.0
        %3040 = vmatprep.subr.mxu0 0.0
        %3041 = vmatpush1.msra.mxu0 0.0
        %3042 = vmatprep.subr.mxu0 0.0
        %3043 = vmatpush1.msra.mxu0 0.0
        %3044 = vmatprep.subr.mxu0 0.0
        %3045 = vmatpush1.msra.mxu0 0.0
        %3046 = vmatprep.subr.mxu0 0.0
        %3047 = vmatpush1.msra.mxu0 0.0
        %3048 = vmatprep.subr.mxu0 0.0
        %3049 = vmatpush1.msra.mxu0 0.0
        %3050 = vmatprep.subr.mxu0 0.0
        %3051 = vmatpush1.msra.mxu0 0.0
        %3052 = vmatprep.subr.mxu0 0.0
        %3053 = vmatpush1.msra.mxu0 0.0
        %3054 = vmatprep.subr.mxu0 0.0
        %3055 = vmatpush1.msra.mxu0 0.0
        %3056 = vmatprep.subr.mxu0 0.0
        %3057 = vmatpush1.msra.mxu0 0.0
        %3058 = vmatprep.subr.mxu0 0.0
        %3059 = vmatpush1.msra.mxu0 0.0
        %3060 = vmatprep.subr.mxu0 0.0
        %3061 = vmatpush1.msra.mxu0 0.0
        %3062 = vmatprep.subr.mxu0 0.0
        %3063 = vmatpush1.msra.mxu0 0.0
        %3064 = vmatprep.subr.mxu0 0.0
        %3065 = vmatpush1.msra.mxu0 0.0
        %3066 = vmatprep.subr.mxu0 0.0
        %3067 = vmatpush1.msra.mxu0 0.0
        %3068 = vmatprep.subr.mxu0 0.0
        %3069 = vmatpush1.msra.mxu0 0.0
        %3070 = vmatprep.mubr.f32.mxu0 0.0
        %3071 = vmatmul.mubr.f32.gmra.mrb[0].mxu0 %v2773
        %v3072 = vpop.f32.mrb[0].mxu0
        %v3073 = vadd.f32 0.0, %v3072
        %v3074 = vpop.f32.mrb[0].mxu0
        %v3075 = vadd.f32 0.0, %v3074
        %3076 = vdwg.mxu0
        %3077 = vmatprep.subr.mxu0 0.0
        %3078 = vmatpush1.msra.mxu0 %v2791
        %3079 = vmatprep.subr.mxu0 0.0
        %3080 = vmatpush1.msra.mxu0 0.0
        %3081 = vmatprep.subr.mxu0 0.0
        %3082 = vmatpush1.msra.mxu0 0.0
        %3083 = vmatprep.subr.mxu0 0.0
        %3084 = vmatpush1.msra.mxu0 0.0
        %3085 = vmatprep.subr.mxu0 0.0
        %3086 = vmatpush1.msra.mxu0 0.0
        %3087 = vmatprep.subr.mxu0 0.0
        %3088 = vmatpush1.msra.mxu0 0.0
        %3089 = vmatprep.subr.mxu0 0.0
        %3090 = vmatpush1.msra.mxu0 0.0
        %3091 = vmatprep.subr.mxu0 0.0
        %3092 = vmatpush1.msra.mxu0 0.0
        %3093 = vmatprep.subr.mxu0 0.0
        %3094 = vmatpush1.msra.mxu0 0.0
        %3095 = vmatprep.subr.mxu0 0.0
        %3096 = vmatpush1.msra.mxu0 0.0
        %3097 = vmatprep.subr.mxu0 0.0
        %3098 = vmatpush1.msra.mxu0 0.0
        %3099 = vmatprep.subr.mxu0 0.0
        %3100 = vmatpush1.msra.mxu0 0.0
        %3101 = vmatprep.subr.mxu0 0.0
        %3102 = vmatpush1.msra.mxu0 0.0
        %3103 = vmatprep.subr.mxu0 0.0
        %3104 = vmatpush1.msra.mxu0 0.0
        %3105 = vmatprep.subr.mxu0 0.0
        %3106 = vmatpush1.msra.mxu0 0.0
        %3107 = vmatprep.subr.mxu0 0.0
        %3108 = vmatpush1.msra.mxu0 0.0
        %3109 = vmatprep.subr.mxu0 0.0
        %3110 = vmatpush1.msra.mxu0 0.0
        %3111 = vmatprep.subr.mxu0 0.0
        %3112 = vmatpush1.msra.mxu0 0.0
        %3113 = vmatprep.subr.mxu0 0.0
        %3114 = vmatpush1.msra.mxu0 0.0
        %3115 = vmatprep.subr.mxu0 0.0
        %3116 = vmatpush1.msra.mxu0 0.0
        %3117 = vmatprep.subr.mxu0 0.0
        %3118 = vmatpush1.msra.mxu0 0.0
        %3119 = vmatprep.subr.mxu0 0.0
        %3120 = vmatpush1.msra.mxu0 0.0
        %3121 = vmatprep.subr.mxu0 0.0
        %3122 = vmatpush1.msra.mxu0 0.0
        %3123 = vmatprep.subr.mxu0 0.0
        %3124 = vmatpush1.msra.mxu0 0.0
        %3125 = vmatprep.subr.mxu0 0.0
        %3126 = vmatpush1.msra.mxu0 0.0
        %3127 = vmatprep.subr.mxu0 0.0
        %3128 = vmatpush1.msra.mxu0 0.0
        %3129 = vmatprep.subr.mxu0 0.0
        %3130 = vmatpush1.msra.mxu0 0.0
        %3131 = vmatprep.subr.mxu0 0.0
        %3132 = vmatpush1.msra.mxu0 0.0
        %3133 = vmatprep.subr.mxu0 0.0
        %3134 = vmatpush1.msra.mxu0 0.0
        %3135 = vmatprep.subr.mxu0 0.0
        %3136 = vmatpush1.msra.mxu0 0.0
        %3137 = vmatprep.subr.mxu0 0.0
        %3138 = vmatpush1.msra.mxu0 0.0
        %3139 = vmatprep.subr.mxu0 0.0
        %3140 = vmatpush1.msra.mxu0 0.0
        %3141 = vmatprep.mubr.f32.mxu0 0.0
        %3142 = vmatmul.mubr.f32.gmra.mrb[0].mxu0 %v2773
        %v3143 = vpop.f32.mrb[0].mxu0
        %v3144 = vadd.f32 0.0, %v3143
        %v3145 = vpop.f32.mrb[0].mxu0
        %3146 = vdwg.mxu0
        %v3147 = vadd.f32 %v2716, %v2860
        %v3148 = vadd.f32 %v2717, %v2862
        %v3149 = vadd.f32 %v2718, %v2931
        %v3150 = vadd.f32 %v2719, %v2933
        %v3151 = vadd.f32 %v2720, %v3002
        %v3152 = vadd.f32 %v2721, %v3004
        %v3153 = vadd.f32 %v2722, %v3073
        %v3154 = vadd.f32 %v2723, %v3075
        %v3155 = vadd.f32 %v2724, %v3144
        %v3156 = vld [vmem:[%s164] sm:$0xff]
        %v3157 = vld [vmem:[%s164 + $0x8] sm:$0xff]
        %v3158 = vld [vmem:[%s164 + $0x10] sm:$0xff]
        %v3159 = vld [vmem:[%s164 + $0x18] sm:$0xff]
        %v3160 = vld [vmem:[%s164 + $0x20] sm:$0xff]
        %s3161 = scalar_lea.vmem %s1, 28
        %v3162 = vld [vmem:[%s3161] sm:$0xf]
        %v3168 = vcombine.high %v3156, %v3156
        %v3169 = vcombine.high %v3157, %v3157
        %v3170 = vcombine.high %v3158, %v3158
        %v3171 = vcombine.high %v3159, %v3159
        %v3172 = vcombine.high %v3160, %v3160
        %3173 = vrot.lane.b32.xlu0 %v3156, 59
        %v3174 = vpop.permute.xlu0 %3173
        %3175 = vrot.lane.b32.xlu0 %v3168, 59
        %v3176 = vpop.permute.xlu0 %3175
        %3177 = vrot.lane.b32.xlu0 %v3157, 59
        %v3178 = vpop.permute.xlu0 %3177
        %3179 = vrot.lane.b32.xlu0 %v3169, 59
        %v3180 = vpop.permute.xlu0 %3179
        %3181 = vrot.lane.b32.xlu0 %v3158, 59
        %v3182 = vpop.permute.xlu0 %3181
        %3183 = vrot.lane.b32.xlu0 %v3170, 59
        %v3184 = vpop.permute.xlu0 %3183
        %3185 = vrot.lane.b32.xlu0 %v3159, 59
        %v3186 = vpop.permute.xlu0 %3185
        %3187 = vrot.lane.b32.xlu0 %v3171, 59
        %v3188 = vpop.permute.xlu0 %3187
        %3189 = vrot.lane.b32.xlu0 %v3160, 59
        %v3190 = vpop.permute.xlu0 %3189
        %3191 = vrot.lane.b32.xlu0 %v3172, 59
        %v3192 = vpop.permute.xlu0 %3191
        %vm3193 = vcmask 482304
        %v3194 = vsel %vm3193, %v3174, %v3176
        %v3195 = vsel %vm3193, %v3176, %v3178
        %v3196 = vsel %vm3193, %v3178, %v3180
        %v3197 = vsel %vm3193, %v3180, %v3182
        %v3198 = vsel %vm3193, %v3182, %v3184
        %v3199 = vsel %vm3193, %v3184, %v3186
        %v3200 = vsel %vm3193, %v3186, %v3188
        %v3201 = vsel %vm3193, %v3188, %v3190
        %v3202 = vsel %vm3193, %v3190, %v3192
        %v3204 = vsel %vm240, %v3162, 0
        %v3206 = vsel %vm244, %v3194, 0
        %v3208 = vsel %vm244, %v3195, 0
        %v3210 = vsel %vm244, %v3196, 0
        %v3212 = vsel %vm244, %v3197, 0
        %v3214 = vsel %vm244, %v3198, 0
        %v3216 = vsel %vm244, %v3199, 0
        %v3218 = vsel %vm244, %v3200, 0
        %v3220 = vsel %vm244, %v3201, 0
        %v3222 = vsel %vm244, %v3202, 0
        %3224 = vmatprep.subr.mxu0 %v3208
        %3225 = vmatpush1.msra.mxu0 %v3206
        %3226 = vmatprep.subr.mxu0 0.0
        %3227 = vmatpush1.msra.mxu0 0.0
        %3228 = vmatprep.subr.mxu0 0.0
        %3229 = vmatpush1.msra.mxu0 0.0
        %3230 = vmatprep.subr.mxu0 0.0
        %3231 = vmatpush1.msra.mxu0 0.0
        %3232 = vmatprep.subr.mxu0 0.0
        %3233 = vmatpush1.msra.mxu0 0.0
        %3234 = vmatprep.subr.mxu0 0.0
        %3235 = vmatpush1.msra.mxu0 0.0
        %3236 = vmatprep.subr.mxu0 0.0
        %3237 = vmatpush1.msra.mxu0 0.0
        %3238 = vmatprep.subr.mxu0 0.0
        %3239 = vmatpush1.msra.mxu0 0.0
        %3240 = vmatprep.subr.mxu0 0.0
        %3241 = vmatpush1.msra.mxu0 0.0
        %3242 = vmatprep.subr.mxu0 0.0
        %3243 = vmatpush1.msra.mxu0 0.0
        %3244 = vmatprep.subr.mxu0 0.0
        %3245 = vmatpush1.msra.mxu0 0.0
        %3246 = vmatprep.subr.mxu0 0.0
        %3247 = vmatpush1.msra.mxu0 0.0
        %3248 = vmatprep.subr.mxu0 0.0
        %3249 = vmatpush1.msra.mxu0 0.0
        %3250 = vmatprep.subr.mxu0 0.0
        %3251 = vmatpush1.msra.mxu0 0.0
        %3252 = vmatprep.subr.mxu0 0.0
        %3253 = vmatpush1.msra.mxu0 0.0
        %3254 = vmatprep.subr.mxu0 0.0
        %3255 = vmatpush1.msra.mxu0 0.0
        %3256 = vmatprep.subr.mxu0 0.0
        %3257 = vmatpush1.msra.mxu0 0.0
        %3258 = vmatprep.subr.mxu0 0.0
        %3259 = vmatpush1.msra.mxu0 0.0
        %3260 = vmatprep.subr.mxu0 0.0
        %3261 = vmatpush1.msra.mxu0 0.0
        %3262 = vmatprep.subr.mxu0 0.0
        %3263 = vmatpush1.msra.mxu0 0.0
        %3264 = vmatprep.subr.mxu0 0.0
        %3265 = vmatpush1.msra.mxu0 0.0
        %3266 = vmatprep.subr.mxu0 0.0
        %3267 = vmatpush1.msra.mxu0 0.0
        %3268 = vmatprep.subr.mxu0 0.0
        %3269 = vmatpush1.msra.mxu0 0.0
        %3270 = vmatprep.subr.mxu0 0.0
        %3271 = vmatpush1.msra.mxu0 0.0
        %3272 = vmatprep.subr.mxu0 0.0
        %3273 = vmatpush1.msra.mxu0 0.0
        %3274 = vmatprep.subr.mxu0 0.0
        %3275 = vmatpush1.msra.mxu0 0.0
        %3276 = vmatprep.subr.mxu0 0.0
        %3277 = vmatpush1.msra.mxu0 0.0
        %3278 = vmatprep.subr.mxu0 0.0
        %3279 = vmatpush1.msra.mxu0 0.0
        %3280 = vmatprep.subr.mxu0 0.0
        %3281 = vmatpush1.msra.mxu0 0.0
        %3282 = vmatprep.subr.mxu0 0.0
        %3283 = vmatpush1.msra.mxu0 0.0
        %3284 = vmatprep.subr.mxu0 0.0
        %3285 = vmatpush1.msra.mxu0 0.0
        %3286 = vmatprep.subr.mxu0 0.0
        %3287 = vmatpush1.msra.mxu0 0.0
        %3288 = vmatprep.mubr.f32.mxu0 0.0
        %3289 = vmatmul.mubr.f32.gmra.mrb[0].mxu0 %v3204
        %v3290 = vpop.f32.mrb[0].mxu0
        %v3291 = vadd.f32 0.0, %v3290
        %v3292 = vpop.f32.mrb[0].mxu0
        %v3293 = vadd.f32 0.0, %v3292
        %3294 = vdwg.mxu0
        %3295 = vmatprep.subr.mxu0 %v3212
        %3296 = vmatpush1.msra.mxu0 %v3210
        %3297 = vmatprep.subr.mxu0 0.0
        %3298 = vmatpush1.msra.mxu0 0.0
        %3299 = vmatprep.subr.mxu0 0.0
        %3300 = vmatpush1.msra.mxu0 0.0
        %3301 = vmatprep.subr.mxu0 0.0
        %3302 = vmatpush1.msra.mxu0 0.0
        %3303 = vmatprep.subr.mxu0 0.0
        %3304 = vmatpush1.msra.mxu0 0.0
        %3305 = vmatprep.subr.mxu0 0.0
        %3306 = vmatpush1.msra.mxu0 0.0
        %3307 = vmatprep.subr.mxu0 0.0
        %3308 = vmatpush1.msra.mxu0 0.0
        %3309 = vmatprep.subr.mxu0 0.0
        %3310 = vmatpush1.msra.mxu0 0.0
        %3311 = vmatprep.subr.mxu0 0.0
        %3312 = vmatpush1.msra.mxu0 0.0
        %3313 = vmatprep.subr.mxu0 0.0
        %3314 = vmatpush1.msra.mxu0 0.0
        %3315 = vmatprep.subr.mxu0 0.0
        %3316 = vmatpush1.msra.mxu0 0.0
        %3317 = vmatprep.subr.mxu0 0.0
        %3318 = vmatpush1.msra.mxu0 0.0
        %3319 = vmatprep.subr.mxu0 0.0
        %3320 = vmatpush1.msra.mxu0 0.0
        %3321 = vmatprep.subr.mxu0 0.0
        %3322 = vmatpush1.msra.mxu0 0.0
        %3323 = vmatprep.subr.mxu0 0.0
        %3324 = vmatpush1.msra.mxu0 0.0
        %3325 = vmatprep.subr.mxu0 0.0
        %3326 = vmatpush1.msra.mxu0 0.0
        %3327 = vmatprep.subr.mxu0 0.0
        %3328 = vmatpush1.msra.mxu0 0.0
        %3329 = vmatprep.subr.mxu0 0.0
        %3330 = vmatpush1.msra.mxu0 0.0
        %3331 = vmatprep.subr.mxu0 0.0
        %3332 = vmatpush1.msra.mxu0 0.0
        %3333 = vmatprep.subr.mxu0 0.0
        %3334 = vmatpush1.msra.mxu0 0.0
        %3335 = vmatprep.subr.mxu0 0.0
        %3336 = vmatpush1.msra.mxu0 0.0
        %3337 = vmatprep.subr.mxu0 0.0
        %3338 = vmatpush1.msra.mxu0 0.0
        %3339 = vmatprep.subr.mxu0 0.0
        %3340 = vmatpush1.msra.mxu0 0.0
        %3341 = vmatprep.subr.mxu0 0.0
        %3342 = vmatpush1.msra.mxu0 0.0
        %3343 = vmatprep.subr.mxu0 0.0
        %3344 = vmatpush1.msra.mxu0 0.0
        %3345 = vmatprep.subr.mxu0 0.0
        %3346 = vmatpush1.msra.mxu0 0.0
        %3347 = vmatprep.subr.mxu0 0.0
        %3348 = vmatpush1.msra.mxu0 0.0
        %3349 = vmatprep.subr.mxu0 0.0
        %3350 = vmatpush1.msra.mxu0 0.0
        %3351 = vmatprep.subr.mxu0 0.0
        %3352 = vmatpush1.msra.mxu0 0.0
        %3353 = vmatprep.subr.mxu0 0.0
        %3354 = vmatpush1.msra.mxu0 0.0
        %3355 = vmatprep.subr.mxu0 0.0
        %3356 = vmatpush1.msra.mxu0 0.0
        %3357 = vmatprep.subr.mxu0 0.0
        %3358 = vmatpush1.msra.mxu0 0.0
        %3359 = vmatprep.mubr.f32.mxu0 0.0
        %3360 = vmatmul.mubr.f32.gmra.mrb[0].mxu0 %v3204
        %v3361 = vpop.f32.mrb[0].mxu0
        %v3362 = vadd.f32 0.0, %v3361
        %v3363 = vpop.f32.mrb[0].mxu0
        %v3364 = vadd.f32 0.0, %v3363
        %3365 = vdwg.mxu0
        %3366 = vmatprep.subr.mxu0 %v3216
        %3367 = vmatpush1.msra.mxu0 %v3214
        %3368 = vmatprep.subr.mxu0 0.0
        %3369 = vmatpush1.msra.mxu0 0.0
        %3370 = vmatprep.subr.mxu0 0.0
        %3371 = vmatpush1.msra.mxu0 0.0
        %3372 = vmatprep.subr.mxu0 0.0
        %3373 = vmatpush1.msra.mxu0 0.0
        %3374 = vmatprep.subr.mxu0 0.0
        %3375 = vmatpush1.msra.mxu0 0.0
        %3376 = vmatprep.subr.mxu0 0.0
        %3377 = vmatpush1.msra.mxu0 0.0
        %3378 = vmatprep.subr.mxu0 0.0
        %3379 = vmatpush1.msra.mxu0 0.0
        %3380 = vmatprep.subr.mxu0 0.0
        %3381 = vmatpush1.msra.mxu0 0.0
        %3382 = vmatprep.subr.mxu0 0.0
        %3383 = vmatpush1.msra.mxu0 0.0
        %3384 = vmatprep.subr.mxu0 0.0
        %3385 = vmatpush1.msra.mxu0 0.0
        %3386 = vmatprep.subr.mxu0 0.0
        %3387 = vmatpush1.msra.mxu0 0.0
        %3388 = vmatprep.subr.mxu0 0.0
        %3389 = vmatpush1.msra.mxu0 0.0
        %3390 = vmatprep.subr.mxu0 0.0
        %3391 = vmatpush1.msra.mxu0 0.0
        %3392 = vmatprep.subr.mxu0 0.0
        %3393 = vmatpush1.msra.mxu0 0.0
        %3394 = vmatprep.subr.mxu0 0.0
        %3395 = vmatpush1.msra.mxu0 0.0
        %3396 = vmatprep.subr.mxu0 0.0
        %3397 = vmatpush1.msra.mxu0 0.0
        %3398 = vmatprep.subr.mxu0 0.0
        %3399 = vmatpush1.msra.mxu0 0.0
        %3400 = vmatprep.subr.mxu0 0.0
        %3401 = vmatpush1.msra.mxu0 0.0
        %3402 = vmatprep.subr.mxu0 0.0
        %3403 = vmatpush1.msra.mxu0 0.0
        %3404 = vmatprep.subr.mxu0 0.0
        %3405 = vmatpush1.msra.mxu0 0.0
        %3406 = vmatprep.subr.mxu0 0.0
        %3407 = vmatpush1.msra.mxu0 0.0
        %3408 = vmatprep.subr.mxu0 0.0
        %3409 = vmatpush1.msra.mxu0 0.0
        %3410 = vmatprep.subr.mxu0 0.0
        %3411 = vmatpush1.msra.mxu0 0.0
        %3412 = vmatprep.subr.mxu0 0.0
        %3413 = vmatpush1.msra.mxu0 0.0
        %3414 = vmatprep.subr.mxu0 0.0
        %3415 = vmatpush1.msra.mxu0 0.0
        %3416 = vmatprep.subr.mxu0 0.0
        %3417 = vmatpush1.msra.mxu0 0.0
        %3418 = vmatprep.subr.mxu0 0.0
        %3419 = vmatpush1.msra.mxu0 0.0
        %3420 = vmatprep.subr.mxu0 0.0
        %3421 = vmatpush1.msra.mxu0 0.0
        %3422 = vmatprep.subr.mxu0 0.0
        %3423 = vmatpush1.msra.mxu0 0.0
        %3424 = vmatprep.subr.mxu0 0.0
        %3425 = vmatpush1.msra.mxu0 0.0
        %3426 = vmatprep.subr.mxu0 0.0
        %3427 = vmatpush1.msra.mxu0 0.0
        %3428 = vmatprep.subr.mxu0 0.0
        %3429 = vmatpush1.msra.mxu0 0.0
        %3430 = vmatprep.mubr.f32.mxu0 0.0
        %3431 = vmatmul.mubr.f32.gmra.mrb[0].mxu0 %v3204
        %v3432 = vpop.f32.mrb[0].mxu0
        %v3433 = vadd.f32 0.0, %v3432
        %v3434 = vpop.f32.mrb[0].mxu0
        %v3435 = vadd.f32 0.0, %v3434
        %3436 = vdwg.mxu0
        %3437 = vmatprep.subr.mxu0 %v3220
        %3438 = vmatpush1.msra.mxu0 %v3218
        %3439 = vmatprep.subr.mxu0 0.0
        %3440 = vmatpush1.msra.mxu0 0.0
        %3441 = vmatprep.subr.mxu0 0.0
        %3442 = vmatpush1.msra.mxu0 0.0
        %3443 = vmatprep.subr.mxu0 0.0
        %3444 = vmatpush1.msra.mxu0 0.0
        %3445 = vmatprep.subr.mxu0 0.0
        %3446 = vmatpush1.msra.mxu0 0.0
        %3447 = vmatprep.subr.mxu0 0.0
        %3448 = vmatpush1.msra.mxu0 0.0
        %3449 = vmatprep.subr.mxu0 0.0
        %3450 = vmatpush1.msra.mxu0 0.0
        %3451 = vmatprep.subr.mxu0 0.0
        %3452 = vmatpush1.msra.mxu0 0.0
        %3453 = vmatprep.subr.mxu0 0.0
        %3454 = vmatpush1.msra.mxu0 0.0
        %3455 = vmatprep.subr.mxu0 0.0
        %3456 = vmatpush1.msra.mxu0 0.0
        %3457 = vmatprep.subr.mxu0 0.0
        %3458 = vmatpush1.msra.mxu0 0.0
        %3459 = vmatprep.subr.mxu0 0.0
        %3460 = vmatpush1.msra.mxu0 0.0
        %3461 = vmatprep.subr.mxu0 0.0
        %3462 = vmatpush1.msra.mxu0 0.0
        %3463 = vmatprep.subr.mxu0 0.0
        %3464 = vmatpush1.msra.mxu0 0.0
        %3465 = vmatprep.subr.mxu0 0.0
        %3466 = vmatpush1.msra.mxu0 0.0
        %3467 = vmatprep.subr.mxu0 0.0
        %3468 = vmatpush1.msra.mxu0 0.0
        %3469 = vmatprep.subr.mxu0 0.0
        %3470 = vmatpush1.msra.mxu0 0.0
        %3471 = vmatprep.subr.mxu0 0.0
        %3472 = vmatpush1.msra.mxu0 0.0
        %3473 = vmatprep.subr.mxu0 0.0
        %3474 = vmatpush1.msra.mxu0 0.0
        %3475 = vmatprep.subr.mxu0 0.0
        %3476 = vmatpush1.msra.mxu0 0.0
        %3477 = vmatprep.subr.mxu0 0.0
        %3478 = vmatpush1.msra.mxu0 0.0
        %3479 = vmatprep.subr.mxu0 0.0
        %3480 = vmatpush1.msra.mxu0 0.0
        %3481 = vmatprep.subr.mxu0 0.0
        %3482 = vmatpush1.msra.mxu0 0.0
        %3483 = vmatprep.subr.mxu0 0.0
        %3484 = vmatpush1.msra.mxu0 0.0
        %3485 = vmatprep.subr.mxu0 0.0
        %3486 = vmatpush1.msra.mxu0 0.0
        %3487 = vmatprep.subr.mxu0 0.0
        %3488 = vmatpush1.msra.mxu0 0.0
        %3489 = vmatprep.subr.mxu0 0.0
        %3490 = vmatpush1.msra.mxu0 0.0
        %3491 = vmatprep.subr.mxu0 0.0
        %3492 = vmatpush1.msra.mxu0 0.0
        %3493 = vmatprep.subr.mxu0 0.0
        %3494 = vmatpush1.msra.mxu0 0.0
        %3495 = vmatprep.subr.mxu0 0.0
        %3496 = vmatpush1.msra.mxu0 0.0
        %3497 = vmatprep.subr.mxu0 0.0
        %3498 = vmatpush1.msra.mxu0 0.0
        %3499 = vmatprep.subr.mxu0 0.0
        %3500 = vmatpush1.msra.mxu0 0.0
        %3501 = vmatprep.mubr.f32.mxu0 0.0
        %3502 = vmatmul.mubr.f32.gmra.mrb[0].mxu0 %v3204
        %v3503 = vpop.f32.mrb[0].mxu0
        %v3504 = vadd.f32 0.0, %v3503
        %v3505 = vpop.f32.mrb[0].mxu0
        %v3506 = vadd.f32 0.0, %v3505
        %3507 = vdwg.mxu0
        %3508 = vmatprep.subr.mxu0 0.0
        %3509 = vmatpush1.msra.mxu0 %v3222
        %3510 = vmatprep.subr.mxu0 0.0
        %3511 = vmatpush1.msra.mxu0 0.0
        %3512 = vmatprep.subr.mxu0 0.0
        %3513 = vmatpush1.msra.mxu0 0.0
        %3514 = vmatprep.subr.mxu0 0.0
        %3515 = vmatpush1.msra.mxu0 0.0
        %3516 = vmatprep.subr.mxu0 0.0
        %3517 = vmatpush1.msra.mxu0 0.0
        %3518 = vmatprep.subr.mxu0 0.0
        %3519 = vmatpush1.msra.mxu0 0.0
        %3520 = vmatprep.subr.mxu0 0.0
        %3521 = vmatpush1.msra.mxu0 0.0
        %3522 = vmatprep.subr.mxu0 0.0
        %3523 = vmatpush1.msra.mxu0 0.0
        %3524 = vmatprep.subr.mxu0 0.0
        %3525 = vmatpush1.msra.mxu0 0.0
        %3526 = vmatprep.subr.mxu0 0.0
        %3527 = vmatpush1.msra.mxu0 0.0
        %3528 = vmatprep.subr.mxu0 0.0
        %3529 = vmatpush1.msra.mxu0 0.0
        %3530 = vmatprep.subr.mxu0 0.0
        %3531 = vmatpush1.msra.mxu0 0.0
        %3532 = vmatprep.subr.mxu0 0.0
        %3533 = vmatpush1.msra.mxu0 0.0
        %3534 = vmatprep.subr.mxu0 0.0
        %3535 = vmatpush1.msra.mxu0 0.0
        %3536 = vmatprep.subr.mxu0 0.0
        %3537 = vmatpush1.msra.mxu0 0.0
        %3538 = vmatprep.subr.mxu0 0.0
        %3539 = vmatpush1.msra.mxu0 0.0
        %3540 = vmatprep.subr.mxu0 0.0
        %3541 = vmatpush1.msra.mxu0 0.0
        %3542 = vmatprep.subr.mxu0 0.0
        %3543 = vmatpush1.msra.mxu0 0.0
        %3544 = vmatprep.subr.mxu0 0.0
        %3545 = vmatpush1.msra.mxu0 0.0
        %3546 = vmatprep.subr.mxu0 0.0
        %3547 = vmatpush1.msra.mxu0 0.0
        %3548 = vmatprep.subr.mxu0 0.0
        %3549 = vmatpush1.msra.mxu0 0.0
        %3550 = vmatprep.subr.mxu0 0.0
        %3551 = vmatpush1.msra.mxu0 0.0
        %3552 = vmatprep.subr.mxu0 0.0
        %3553 = vmatpush1.msra.mxu0 0.0
        %3554 = vmatprep.subr.mxu0 0.0
        %3555 = vmatpush1.msra.mxu0 0.0
        %3556 = vmatprep.subr.mxu0 0.0
        %3557 = vmatpush1.msra.mxu0 0.0
        %3558 = vmatprep.subr.mxu0 0.0
        %3559 = vmatpush1.msra.mxu0 0.0
        %3560 = vmatprep.subr.mxu0 0.0
        %3561 = vmatpush1.msra.mxu0 0.0
        %3562 = vmatprep.subr.mxu0 0.0
        %3563 = vmatpush1.msra.mxu0 0.0
        %3564 = vmatprep.subr.mxu0 0.0
        %3565 = vmatpush1.msra.mxu0 0.0
        %3566 = vmatprep.subr.mxu0 0.0
        %3567 = vmatpush1.msra.mxu0 0.0
        %3568 = vmatprep.subr.mxu0 0.0
        %3569 = vmatpush1.msra.mxu0 0.0
        %3570 = vmatprep.subr.mxu0 0.0
        %3571 = vmatpush1.msra.mxu0 0.0
        %3572 = vmatprep.mubr.f32.mxu0 0.0
        %3573 = vmatmul.mubr.f32.gmra.mrb[0].mxu0 %v3204
        %v3574 = vpop.f32.mrb[0].mxu0
        %v3575 = vadd.f32 0.0, %v3574
        %v3576 = vpop.f32.mrb[0].mxu0
        %3577 = vdwg.mxu0
        %v3578 = vadd.f32 %v3147, %v3291
        %v3579 = vadd.f32 %v3148, %v3293
        %v3580 = vadd.f32 %v3149, %v3362
        %v3581 = vadd.f32 %v3150, %v3364
        %v3582 = vadd.f32 %v3151, %v3433
        %v3583 = vadd.f32 %v3152, %v3435
        %v3584 = vadd.f32 %v3153, %v3504
        %v3585 = vadd.f32 %v3154, %v3506
        %v3586 = vadd.f32 %v3155, %v3575
        %v3587 = vld [vmem:[%s164] sm:$0xff]
        %v3588 = vld [vmem:[%s164 + $0x8] sm:$0xff]
        %v3589 = vld [vmem:[%s164 + $0x10] sm:$0xff]
        %v3590 = vld [vmem:[%s164 + $0x18] sm:$0xff]
        %v3591 = vld [vmem:[%s164 + $0x20] sm:$0xff]
        %s3592 = scalar_lea.vmem %s1, 32
        %v3593 = vld [vmem:[%s3592] sm:$0xf]
        %v3599 = vcombine.high %v3587, %v3587
        %v3600 = vcombine.high %v3588, %v3588
        %v3601 = vcombine.high %v3589, %v3589
        %v3602 = vcombine.high %v3590, %v3590
        %v3603 = vcombine.high %v3591, %v3591
        %3604 = vrot.lane.b32.xlu0 %v3587, 58
        %v3605 = vpop.permute.xlu0 %3604
        %3606 = vrot.lane.b32.xlu0 %v3599, 58
        %v3607 = vpop.permute.xlu0 %3606
        %3608 = vrot.lane.b32.xlu0 %v3588, 58
        %v3609 = vpop.permute.xlu0 %3608
        %3610 = vrot.lane.b32.xlu0 %v3600, 58
        %v3611 = vpop.permute.xlu0 %3610
        %3612 = vrot.lane.b32.xlu0 %v3589, 58
        %v3613 = vpop.permute.xlu0 %3612
        %3614 = vrot.lane.b32.xlu0 %v3601, 58
        %v3615 = vpop.permute.xlu0 %3614
        %3616 = vrot.lane.b32.xlu0 %v3590, 58
        %v3617 = vpop.permute.xlu0 %3616
        %3618 = vrot.lane.b32.xlu0 %v3602, 58
        %v3619 = vpop.permute.xlu0 %3618
        %3620 = vrot.lane.b32.xlu0 %v3591, 58
        %v3621 = vpop.permute.xlu0 %3620
        %3622 = vrot.lane.b32.xlu0 %v3603, 58
        %v3623 = vpop.permute.xlu0 %3622
        %vm3624 = vcmask 474112
        %v3625 = vsel %vm3624, %v3605, %v3607
        %v3626 = vsel %vm3624, %v3607, %v3609
        %v3627 = vsel %vm3624, %v3609, %v3611
        %v3628 = vsel %vm3624, %v3611, %v3613
        %v3629 = vsel %vm3624, %v3613, %v3615
        %v3630 = vsel %vm3624, %v3615, %v3617
        %v3631 = vsel %vm3624, %v3617, %v3619
        %v3632 = vsel %vm3624, %v3619, %v3621
        %v3633 = vsel %vm3624, %v3621, %v3623
        %v3635 = vsel %vm240, %v3593, 0
        %v3637 = vsel %vm244, %v3625, 0
        %v3639 = vsel %vm244, %v3626, 0
        %v3641 = vsel %vm244, %v3627, 0
        %v3643 = vsel %vm244, %v3628, 0
        %v3645 = vsel %vm244, %v3629, 0
        %v3647 = vsel %vm244, %v3630, 0
        %v3649 = vsel %vm244, %v3631, 0
        %v3651 = vsel %vm244, %v3632, 0
        %v3653 = vsel %vm244, %v3633, 0
        %3655 = vmatprep.subr.mxu0 %v3639
        %3656 = vmatpush1.msra.mxu0 %v3637
        %3657 = vmatprep.subr.mxu0 0.0
        %3658 = vmatpush1.msra.mxu0 0.0
        %3659 = vmatprep.subr.mxu0 0.0
        %3660 = vmatpush1.msra.mxu0 0.0
        %3661 = vmatprep.subr.mxu0 0.0
        %3662 = vmatpush1.msra.mxu0 0.0
        %3663 = vmatprep.subr.mxu0 0.0
        %3664 = vmatpush1.msra.mxu0 0.0
        %3665 = vmatprep.subr.mxu0 0.0
        %3666 = vmatpush1.msra.mxu0 0.0
        %3667 = vmatprep.subr.mxu0 0.0
        %3668 = vmatpush1.msra.mxu0 0.0
        %3669 = vmatprep.subr.mxu0 0.0
        %3670 = vmatpush1.msra.mxu0 0.0
        %3671 = vmatprep.subr.mxu0 0.0
        %3672 = vmatpush1.msra.mxu0 0.0
        %3673 = vmatprep.subr.mxu0 0.0
        %3674 = vmatpush1.msra.mxu0 0.0
        %3675 = vmatprep.subr.mxu0 0.0
        %3676 = vmatpush1.msra.mxu0 0.0
        %3677 = vmatprep.subr.mxu0 0.0
        %3678 = vmatpush1.msra.mxu0 0.0
        %3679 = vmatprep.subr.mxu0 0.0
        %3680 = vmatpush1.msra.mxu0 0.0
        %3681 = vmatprep.subr.mxu0 0.0
        %3682 = vmatpush1.msra.mxu0 0.0
        %3683 = vmatprep.subr.mxu0 0.0
        %3684 = vmatpush1.msra.mxu0 0.0
        %3685 = vmatprep.subr.mxu0 0.0
        %3686 = vmatpush1.msra.mxu0 0.0
        %3687 = vmatprep.subr.mxu0 0.0
        %3688 = vmatpush1.msra.mxu0 0.0
        %3689 = vmatprep.subr.mxu0 0.0
        %3690 = vmatpush1.msra.mxu0 0.0
        %3691 = vmatprep.subr.mxu0 0.0
        %3692 = vmatpush1.msra.mxu0 0.0
        %3693 = vmatprep.subr.mxu0 0.0
        %3694 = vmatpush1.msra.mxu0 0.0
        %3695 = vmatprep.subr.mxu0 0.0
        %3696 = vmatpush1.msra.mxu0 0.0
        %3697 = vmatprep.subr.mxu0 0.0
        %3698 = vmatpush1.msra.mxu0 0.0
        %3699 = vmatprep.subr.mxu0 0.0
        %3700 = vmatpush1.msra.mxu0 0.0
        %3701 = vmatprep.subr.mxu0 0.0
        %3702 = vmatpush1.msra.mxu0 0.0
        %3703 = vmatprep.subr.mxu0 0.0
        %3704 = vmatpush1.msra.mxu0 0.0
        %3705 = vmatprep.subr.mxu0 0.0
        %3706 = vmatpush1.msra.mxu0 0.0
        %3707 = vmatprep.subr.mxu0 0.0
        %3708 = vmatpush1.msra.mxu0 0.0
        %3709 = vmatprep.subr.mxu0 0.0
        %3710 = vmatpush1.msra.mxu0 0.0
        %3711 = vmatprep.subr.mxu0 0.0
        %3712 = vmatpush1.msra.mxu0 0.0
        %3713 = vmatprep.subr.mxu0 0.0
        %3714 = vmatpush1.msra.mxu0 0.0
        %3715 = vmatprep.subr.mxu0 0.0
        %3716 = vmatpush1.msra.mxu0 0.0
        %3717 = vmatprep.subr.mxu0 0.0
        %3718 = vmatpush1.msra.mxu0 0.0
        %3719 = vmatprep.mubr.f32.mxu0 0.0
        %3720 = vmatmul.mubr.f32.gmra.mrb[0].mxu0 %v3635
        %v3721 = vpop.f32.mrb[0].mxu0
        %v3722 = vadd.f32 0.0, %v3721
        %v3723 = vpop.f32.mrb[0].mxu0
        %v3724 = vadd.f32 0.0, %v3723
        %3725 = vdwg.mxu0
        %3726 = vmatprep.subr.mxu0 %v3643
        %3727 = vmatpush1.msra.mxu0 %v3641
        %3728 = vmatprep.subr.mxu0 0.0
        %3729 = vmatpush1.msra.mxu0 0.0
        %3730 = vmatprep.subr.mxu0 0.0
        %3731 = vmatpush1.msra.mxu0 0.0
        %3732 = vmatprep.subr.mxu0 0.0
        %3733 = vmatpush1.msra.mxu0 0.0
        %3734 = vmatprep.subr.mxu0 0.0
        %3735 = vmatpush1.msra.mxu0 0.0
        %3736 = vmatprep.subr.mxu0 0.0
        %3737 = vmatpush1.msra.mxu0 0.0
        %3738 = vmatprep.subr.mxu0 0.0
        %3739 = vmatpush1.msra.mxu0 0.0
        %3740 = vmatprep.subr.mxu0 0.0
        %3741 = vmatpush1.msra.mxu0 0.0
        %3742 = vmatprep.subr.mxu0 0.0
        %3743 = vmatpush1.msra.mxu0 0.0
        %3744 = vmatprep.subr.mxu0 0.0
        %3745 = vmatpush1.msra.mxu0 0.0
        %3746 = vmatprep.subr.mxu0 0.0
        %3747 = vmatpush1.msra.mxu0 0.0
        %3748 = vmatprep.subr.mxu0 0.0
        %3749 = vmatpush1.msra.mxu0 0.0
        %3750 = vmatprep.subr.mxu0 0.0
        %3751 = vmatpush1.msra.mxu0 0.0
        %3752 = vmatprep.subr.mxu0 0.0
        %3753 = vmatpush1.msra.mxu0 0.0
        %3754 = vmatprep.subr.mxu0 0.0
        %3755 = vmatpush1.msra.mxu0 0.0
        %3756 = vmatprep.subr.mxu0 0.0
        %3757 = vmatpush1.msra.mxu0 0.0
        %3758 = vmatprep.subr.mxu0 0.0
        %3759 = vmatpush1.msra.mxu0 0.0
        %3760 = vmatprep.subr.mxu0 0.0
        %3761 = vmatpush1.msra.mxu0 0.0
        %3762 = vmatprep.subr.mxu0 0.0
        %3763 = vmatpush1.msra.mxu0 0.0
        %3764 = vmatprep.subr.mxu0 0.0
        %3765 = vmatpush1.msra.mxu0 0.0
        %3766 = vmatprep.subr.mxu0 0.0
        %3767 = vmatpush1.msra.mxu0 0.0
        %3768 = vmatprep.subr.mxu0 0.0
        %3769 = vmatpush1.msra.mxu0 0.0
        %3770 = vmatprep.subr.mxu0 0.0
        %3771 = vmatpush1.msra.mxu0 0.0
        %3772 = vmatprep.subr.mxu0 0.0
        %3773 = vmatpush1.msra.mxu0 0.0
        %3774 = vmatprep.subr.mxu0 0.0
        %3775 = vmatpush1.msra.mxu0 0.0
        %3776 = vmatprep.subr.mxu0 0.0
        %3777 = vmatpush1.msra.mxu0 0.0
        %3778 = vmatprep.subr.mxu0 0.0
        %3779 = vmatpush1.msra.mxu0 0.0
        %3780 = vmatprep.subr.mxu0 0.0
        %3781 = vmatpush1.msra.mxu0 0.0
        %3782 = vmatprep.subr.mxu0 0.0
        %3783 = vmatpush1.msra.mxu0 0.0
        %3784 = vmatprep.subr.mxu0 0.0
        %3785 = vmatpush1.msra.mxu0 0.0
        %3786 = vmatprep.subr.mxu0 0.0
        %3787 = vmatpush1.msra.mxu0 0.0
        %3788 = vmatprep.subr.mxu0 0.0
        %3789 = vmatpush1.msra.mxu0 0.0
        %3790 = vmatprep.mubr.f32.mxu0 0.0
        %3791 = vmatmul.mubr.f32.gmra.mrb[0].mxu0 %v3635
        %v3792 = vpop.f32.mrb[0].mxu0
        %v3793 = vadd.f32 0.0, %v3792
        %v3794 = vpop.f32.mrb[0].mxu0
        %v3795 = vadd.f32 0.0, %v3794
        %3796 = vdwg.mxu0
        %3797 = vmatprep.subr.mxu0 %v3647
        %3798 = vmatpush1.msra.mxu0 %v3645
        %3799 = vmatprep.subr.mxu0 0.0
        %3800 = vmatpush1.msra.mxu0 0.0
        %3801 = vmatprep.subr.mxu0 0.0
        %3802 = vmatpush1.msra.mxu0 0.0
        %3803 = vmatprep.subr.mxu0 0.0
        %3804 = vmatpush1.msra.mxu0 0.0
        %3805 = vmatprep.subr.mxu0 0.0
        %3806 = vmatpush1.msra.mxu0 0.0
        %3807 = vmatprep.subr.mxu0 0.0
        %3808 = vmatpush1.msra.mxu0 0.0
        %3809 = vmatprep.subr.mxu0 0.0
        %3810 = vmatpush1.msra.mxu0 0.0
        %3811 = vmatprep.subr.mxu0 0.0
        %3812 = vmatpush1.msra.mxu0 0.0
        %3813 = vmatprep.subr.mxu0 0.0
        %3814 = vmatpush1.msra.mxu0 0.0
        %3815 = vmatprep.subr.mxu0 0.0
        %3816 = vmatpush1.msra.mxu0 0.0
        %3817 = vmatprep.subr.mxu0 0.0
        %3818 = vmatpush1.msra.mxu0 0.0
        %3819 = vmatprep.subr.mxu0 0.0
        %3820 = vmatpush1.msra.mxu0 0.0
        %3821 = vmatprep.subr.mxu0 0.0
        %3822 = vmatpush1.msra.mxu0 0.0
        %3823 = vmatprep.subr.mxu0 0.0
        %3824 = vmatpush1.msra.mxu0 0.0
        %3825 = vmatprep.subr.mxu0 0.0
        %3826 = vmatpush1.msra.mxu0 0.0
        %3827 = vmatprep.subr.mxu0 0.0
        %3828 = vmatpush1.msra.mxu0 0.0
        %3829 = vmatprep.subr.mxu0 0.0
        %3830 = vmatpush1.msra.mxu0 0.0
        %3831 = vmatprep.subr.mxu0 0.0
        %3832 = vmatpush1.msra.mxu0 0.0
        %3833 = vmatprep.subr.mxu0 0.0
        %3834 = vmatpush1.msra.mxu0 0.0
        %3835 = vmatprep.subr.mxu0 0.0
        %3836 = vmatpush1.msra.mxu0 0.0
        %3837 = vmatprep.subr.mxu0 0.0
        %3838 = vmatpush1.msra.mxu0 0.0
        %3839 = vmatprep.subr.mxu0 0.0
        %3840 = vmatpush1.msra.mxu0 0.0
        %3841 = vmatprep.subr.mxu0 0.0
        %3842 = vmatpush1.msra.mxu0 0.0
        %3843 = vmatprep.subr.mxu0 0.0
        %3844 = vmatpush1.msra.mxu0 0.0
        %3845 = vmatprep.subr.mxu0 0.0
        %3846 = vmatpush1.msra.mxu0 0.0
        %3847 = vmatprep.subr.mxu0 0.0
        %3848 = vmatpush1.msra.mxu0 0.0
        %3849 = vmatprep.subr.mxu0 0.0
        %3850 = vmatpush1.msra.mxu0 0.0
        %3851 = vmatprep.subr.mxu0 0.0
        %3852 = vmatpush1.msra.mxu0 0.0
        %3853 = vmatprep.subr.mxu0 0.0
        %3854 = vmatpush1.msra.mxu0 0.0
        %3855 = vmatprep.subr.mxu0 0.0
        %3856 = vmatpush1.msra.mxu0 0.0
        %3857 = vmatprep.subr.mxu0 0.0
        %3858 = vmatpush1.msra.mxu0 0.0
        %3859 = vmatprep.subr.mxu0 0.0
        %3860 = vmatpush1.msra.mxu0 0.0
        %3861 = vmatprep.mubr.f32.mxu0 0.0
        %3862 = vmatmul.mubr.f32.gmra.mrb[0].mxu0 %v3635
        %v3863 = vpop.f32.mrb[0].mxu0
        %v3864 = vadd.f32 0.0, %v3863
        %v3865 = vpop.f32.mrb[0].mxu0
        %v3866 = vadd.f32 0.0, %v3865
        %3867 = vdwg.mxu0
        %3868 = vmatprep.subr.mxu0 %v3651
        %3869 = vmatpush1.msra.mxu0 %v3649
        %3870 = vmatprep.subr.mxu0 0.0
        %3871 = vmatpush1.msra.mxu0 0.0
        %3872 = vmatprep.subr.mxu0 0.0
        %3873 = vmatpush1.msra.mxu0 0.0
        %3874 = vmatprep.subr.mxu0 0.0
        %3875 = vmatpush1.msra.mxu0 0.0
        %3876 = vmatprep.subr.mxu0 0.0
        %3877 = vmatpush1.msra.mxu0 0.0
        %3878 = vmatprep.subr.mxu0 0.0
        %3879 = vmatpush1.msra.mxu0 0.0
        %3880 = vmatprep.subr.mxu0 0.0
        %3881 = vmatpush1.msra.mxu0 0.0
        %3882 = vmatprep.subr.mxu0 0.0
        %3883 = vmatpush1.msra.mxu0 0.0
        %3884 = vmatprep.subr.mxu0 0.0
        %3885 = vmatpush1.msra.mxu0 0.0
        %3886 = vmatprep.subr.mxu0 0.0
        %3887 = vmatpush1.msra.mxu0 0.0
        %3888 = vmatprep.subr.mxu0 0.0
        %3889 = vmatpush1.msra.mxu0 0.0
        %3890 = vmatprep.subr.mxu0 0.0
        %3891 = vmatpush1.msra.mxu0 0.0
        %3892 = vmatprep.subr.mxu0 0.0
        %3893 = vmatpush1.msra.mxu0 0.0
        %3894 = vmatprep.subr.mxu0 0.0
        %3895 = vmatpush1.msra.mxu0 0.0
        %3896 = vmatprep.subr.mxu0 0.0
        %3897 = vmatpush1.msra.mxu0 0.0
        %3898 = vmatprep.subr.mxu0 0.0
        %3899 = vmatpush1.msra.mxu0 0.0
        %3900 = vmatprep.subr.mxu0 0.0
        %3901 = vmatpush1.msra.mxu0 0.0
        %3902 = vmatprep.subr.mxu0 0.0
        %3903 = vmatpush1.msra.mxu0 0.0
        %3904 = vmatprep.subr.mxu0 0.0
        %3905 = vmatpush1.msra.mxu0 0.0
        %3906 = vmatprep.subr.mxu0 0.0
        %3907 = vmatpush1.msra.mxu0 0.0
        %3908 = vmatprep.subr.mxu0 0.0
        %3909 = vmatpush1.msra.mxu0 0.0
        %3910 = vmatprep.subr.mxu0 0.0
        %3911 = vmatpush1.msra.mxu0 0.0
        %3912 = vmatprep.subr.mxu0 0.0
        %3913 = vmatpush1.msra.mxu0 0.0
        %3914 = vmatprep.subr.mxu0 0.0
        %3915 = vmatpush1.msra.mxu0 0.0
        %3916 = vmatprep.subr.mxu0 0.0
        %3917 = vmatpush1.msra.mxu0 0.0
        %3918 = vmatprep.subr.mxu0 0.0
        %3919 = vmatpush1.msra.mxu0 0.0
        %3920 = vmatprep.subr.mxu0 0.0
        %3921 = vmatpush1.msra.mxu0 0.0
        %3922 = vmatprep.subr.mxu0 0.0
        %3923 = vmatpush1.msra.mxu0 0.0
        %3924 = vmatprep.subr.mxu0 0.0
        %3925 = vmatpush1.msra.mxu0 0.0
        %3926 = vmatprep.subr.mxu0 0.0
        %3927 = vmatpush1.msra.mxu0 0.0
        %3928 = vmatprep.subr.mxu0 0.0
        %3929 = vmatpush1.msra.mxu0 0.0
        %3930 = vmatprep.subr.mxu0 0.0
        %3931 = vmatpush1.msra.mxu0 0.0
        %3932 = vmatprep.mubr.f32.mxu0 0.0
        %3933 = vmatmul.mubr.f32.gmra.mrb[0].mxu0 %v3635
        %v3934 = vpop.f32.mrb[0].mxu0
        %v3935 = vadd.f32 0.0, %v3934
        %v3936 = vpop.f32.mrb[0].mxu0
        %v3937 = vadd.f32 0.0, %v3936
        %3938 = vdwg.mxu0
        %3939 = vmatprep.subr.mxu0 0.0
        %3940 = vmatpush1.msra.mxu0 %v3653
        %3941 = vmatprep.subr.mxu0 0.0
        %3942 = vmatpush1.msra.mxu0 0.0
        %3943 = vmatprep.subr.mxu0 0.0
        %3944 = vmatpush1.msra.mxu0 0.0
        %3945 = vmatprep.subr.mxu0 0.0
        %3946 = vmatpush1.msra.mxu0 0.0
        %3947 = vmatprep.subr.mxu0 0.0
        %3948 = vmatpush1.msra.mxu0 0.0
        %3949 = vmatprep.subr.mxu0 0.0
        %3950 = vmatpush1.msra.mxu0 0.0
        %3951 = vmatprep.subr.mxu0 0.0
        %3952 = vmatpush1.msra.mxu0 0.0
        %3953 = vmatprep.subr.mxu0 0.0
        %3954 = vmatpush1.msra.mxu0 0.0
        %3955 = vmatprep.subr.mxu0 0.0
        %3956 = vmatpush1.msra.mxu0 0.0
        %3957 = vmatprep.subr.mxu0 0.0
        %3958 = vmatpush1.msra.mxu0 0.0
        %3959 = vmatprep.subr.mxu0 0.0
        %3960 = vmatpush1.msra.mxu0 0.0
        %3961 = vmatprep.subr.mxu0 0.0
        %3962 = vmatpush1.msra.mxu0 0.0
        %3963 = vmatprep.subr.mxu0 0.0
        %3964 = vmatpush1.msra.mxu0 0.0
        %3965 = vmatprep.subr.mxu0 0.0
        %3966 = vmatpush1.msra.mxu0 0.0
        %3967 = vmatprep.subr.mxu0 0.0
        %3968 = vmatpush1.msra.mxu0 0.0
        %3969 = vmatprep.subr.mxu0 0.0
        %3970 = vmatpush1.msra.mxu0 0.0
        %3971 = vmatprep.subr.mxu0 0.0
        %3972 = vmatpush1.msra.mxu0 0.0
        %3973 = vmatprep.subr.mxu0 0.0
        %3974 = vmatpush1.msra.mxu0 0.0
        %3975 = vmatprep.subr.mxu0 0.0
        %3976 = vmatpush1.msra.mxu0 0.0
        %3977 = vmatprep.subr.mxu0 0.0
        %3978 = vmatpush1.msra.mxu0 0.0
        %3979 = vmatprep.subr.mxu0 0.0
        %3980 = vmatpush1.msra.mxu0 0.0
        %3981 = vmatprep.subr.mxu0 0.0
        %3982 = vmatpush1.msra.mxu0 0.0
        %3983 = vmatprep.subr.mxu0 0.0
        %3984 = vmatpush1.msra.mxu0 0.0
        %3985 = vmatprep.subr.mxu0 0.0
        %3986 = vmatpush1.msra.mxu0 0.0
        %3987 = vmatprep.subr.mxu0 0.0
        %3988 = vmatpush1.msra.mxu0 0.0
        %3989 = vmatprep.subr.mxu0 0.0
        %3990 = vmatpush1.msra.mxu0 0.0
        %3991 = vmatprep.subr.mxu0 0.0
        %3992 = vmatpush1.msra.mxu0 0.0
        %3993 = vmatprep.subr.mxu0 0.0
        %3994 = vmatpush1.msra.mxu0 0.0
        %3995 = vmatprep.subr.mxu0 0.0
        %3996 = vmatpush1.msra.mxu0 0.0
        %3997 = vmatprep.subr.mxu0 0.0
        %3998 = vmatpush1.msra.mxu0 0.0
        %3999 = vmatprep.subr.mxu0 0.0
        %4000 = vmatpush1.msra.mxu0 0.0
        %4001 = vmatprep.subr.mxu0 0.0
        %4002 = vmatpush1.msra.mxu0 0.0
        %4003 = vmatprep.mubr.f32.mxu0 0.0
        %4004 = vmatmul.mubr.f32.gmra.mrb[0].mxu0 %v3635
        %v4005 = vpop.f32.mrb[0].mxu0
        %v4006 = vadd.f32 0.0, %v4005
        %v4007 = vpop.f32.mrb[0].mxu0
        %4008 = vdwg.mxu0
        %v4009 = vadd.f32 %v3578, %v3722
        %v4010 = vadd.f32 %v3579, %v3724
        %v4011 = vadd.f32 %v3580, %v3793
        %v4012 = vadd.f32 %v3581, %v3795
        %v4013 = vadd.f32 %v3582, %v3864
        %v4014 = vadd.f32 %v3583, %v3866
        %v4015 = vadd.f32 %v3584, %v3935
        %v4016 = vadd.f32 %v3585, %v3937
        %v4017 = vadd.f32 %v3586, %v4006
        %v4018 = vld [vmem:[%s2] sm:$0xf]
        %4020 = vset.pattern.permute.xlu0 0
        %4021 = vperm.xlu0 %4020, %v4018
        %v4022 = vpop.permute.xlu0 %4021
        %v4024 = vadd.f32 %v4009, %v4022
        %v4025 = vadd.f32 %v4010, %v4022
        %v4026 = vadd.f32 %v4011, %v4022
        %v4027 = vadd.f32 %v4012, %v4022
        %v4028 = vadd.f32 %v4013, %v4022
        %v4029 = vadd.f32 %v4014, %v4022
        %v4030 = vadd.f32 %v4015, %v4022
        %v4031 = vadd.f32 %v4016, %v4022
        %v4032 = vadd.f32 %v4017, %v4022
        %v4041 = vcombine.low %v4024, %v4025
        %v4042 = vcombine.low %v4026, %v4027
        %v4043 = vcombine.low %v4028, %v4029
        %v4044 = vcombine.low %v4030, %v4031
        %4049 = vst [vmem:[%s186] sm:$0xff] %v4041
        %4050 = vst [vmem:[%s186 + $0x8] sm:$0xff] %v4042
        %4051 = vst [vmem:[%s186 + $0x10] sm:$0xff] %v4043
        %4052 = vst [vmem:[%s186 + $0x18] sm:$0xff] %v4044
        %4053 = vst [vmem:[%s186 + $0x20] sm:$0xf] %v4032
        %s4054 = sand.u32 %s96, 1
        %s4055 = scalar_lea.sflag [#allocation4], %s4054
        %s4056 = sand.u32 %s96, 1
        %s4057 = smul.addr %s4056, 36
        %s4058 = scalar_lea.vmem [#allocation5], %s4057
        // Predicated region
        $region37: #{tpu_custom_call.1} parent=31 // pred_check
          %p4059 = pneg %p106
        $region38: #{tpu_custom_call.1} parent=31 // pred_check_branch
          %4061 = sbr.rel (%p4059) target = $region40
        $region39: #{tpu_custom_call.1} parent=31 // pred_region
          %s4063 = ssub.s32 576, 576
          %4064 = vsyncadd %s4055, %s4063
          %s4065 = smul.addr %s20, 9
          %s4066 = smul.addr %s4065, 64
          %s4067 = scalar_lea.hbm %s3, %s4066
          %s4069 = sshll.u32 %s4058, 4
          %s4070 = int_to_ptr.vmem [resolvable:$true] %s4069
          %4072 = dma.vmem_to_hbm [thread:$0]  %s4070, 576, %s4067, %s4055
        $region40: #{tpu_custom_call.1} parent=31 // pred_fallthru
          _
      $region32: #{tpu_custom_call.1} parent=5 // pred_fallthru
        _
      %p4073 = scmp.le.s32.totalorder 2, %s15
      // Predicated region
      $region41: #{tpu_custom_call.1} parent=5 // pred_check
        %p4074 = pneg %p4073
      $region42: #{tpu_custom_call.1} parent=5 // pred_check_branch
        %4076 = sbr.rel (%p4074) target = $region44
      $region43: #{tpu_custom_call.1} parent=5 // pred_region
        %s4077 = ssub.s32 %s15, 2
        // Predicated region
        $region45: #{tpu_custom_call.1} parent=43 // pred_check
          %p4078 = pneg %p112
        $region46: #{tpu_custom_call.1} parent=43 // pred_check_branch
          %4080 = sbr.rel (%p4078) target = $region48
        $region47: #{tpu_custom_call.1} parent=43 // pred_region
          %s4081 = sand.u32 %s97, 1
          %s4082 = scalar_lea.sflag [#allocation4], %s4081
          %s4083 = sand.u32 %s97, 1
          %s4084 = smul.addr %s4083, 36
          %s4085 = scalar_lea.vmem [#allocation5], %s4084
          %4086 = dma.done %s4082, 576
        $region48: #{tpu_custom_call.1} parent=43 // pred_fallthru
          _
      $region44: #{tpu_custom_call.1} parent=5 // pred_fallthru
        _
    $region6: #{tpu_custom_call.1} parent=1 // loop_footer
      %s19 = sadd.s32 1, %s15
    $region7: #{tpu_custom_call.1} parent=1 // loop_footer_branch
      %14 = sbr.rel target = $region3
    $region8: #{tpu_custom_call.1} parent=1 // loop_exit
      _
    %4087 = vsyncpa [#allocation3], 1
    %s4088 = scalar_lea.sflag [#allocation3], 1
    %4089 = vsyncpa %s4088, 1
    %4090 = vsyncpa [#allocation4], 1
    %s4091 = scalar_lea.sflag [#allocation4], 1
    %4092 = vsyncpa %s4091, 1

</llo_original>
